<compile_context>
chip_gen: v5e
topology: v5e:2x2
jax: 0.10.0
libtpu: 0.0.40
codegen_flags: <defaults>
</compile_context>

<pallas_src>
import jax
import jax.numpy as jnp
import numpy as np
from jax.experimental import pallas as pl
from jax.experimental.pallas import tpu as pltpu

_LANE = 128

# Polyphase tap tables for ConvTranspose2d(kernel=4, stride=2, padding=1):
# output row oy = 2*m + py receives exactly two taps:  high[m + dy] * W_t[..., ky, .]
_KSEL = ((1, 3), (0, 2))    # [parity][tap] -> kernel index ky (kx analogous)
_DSEL = ((0, -1), (1, 0))   # [parity][tap] -> input row offset dy (dx analogous)


def _round_up(x, m):
    return (x + m - 1) // m * m


def gau_kernel(gp_ref, hi_ref, lo_ref, w1_ref, w3_ref, wt_ref, bn_ref, out_ref):
    """One (batch, row-tile) grid step; computes all 4 output parities.

    gp_ref  : (1, CHp, 1)            f32  global-average-pooled high features (column vector)
    hi_ref  : (1, 1, TH+2, W+2, CHp) bf16 spatially padded high features (row window, halo = 1)
    lo_ref  : (1, 1, 4, TH+1, W+1, CLp) bf16 polyphase planes of the padded low features
    w1_ref  : (CHp, CLp)             bf16 1x1 conv weight
    w3_ref  : (9*CLp, CLp)           bf16 3x3 conv weight, BN_low scale folded, rows=(ky*3+kx)*CLp+ci
    wt_ref  : (16, CHp, CLp)         bf16 polyphase ConvTranspose taps, BN_up scale folded,
                                          index = ((py*2+px)*2 + ty)*2 + tx
    bn_ref  : (4, CLp)               f32  rows: hi_scale, hi_shift, lo_shift, up_shift
    out_ref : (1, 1, 4, TH, W, CLp)  bf16 phase-decomposed output, phase = py*2+px
    """
    TH = out_ref.shape[3]
    W = out_ref.shape[4]
    CHp = hi_ref.shape[4]
    CLp = out_ref.shape[5]
    f32 = jnp.float32

    bn = bn_ref[...]                                              # (4, CLp)

    # ---- gate: GAP (wrapper) -> 1x1 conv -> BN_high -> ReLU.  VPU multiply+reduce (no M=1 matmul).
    gpc = gp_ref[0]                                               # (CHp, 1) f32
    g_lin = jnp.sum(w1_ref[...].astype(f32) * gpc, axis=0, keepdims=True)   # (1, CLp)
    g = jnp.maximum(g_lin * bn[0:1] + bn[1:2], 0.0)               # (1, CLp)

    # fused epilogue shift:  up_shift + lo_shift * g
    shift = bn[3:4] + bn[2:3] * g                                 # (1, CLp)

    # fold the gate into the (already BN-scaled) 3x3 weights once per grid step (9*CLp*CLp elems).
    w3g = (w3_ref[...].astype(f32) * g).astype(jnp.bfloat16)      # (9*CLp, CLp)

    hi = hi_ref[0, 0]                                             # (TH+2, W+2, CHp)
    planes = [lo_ref[0, 0, q] for q in range(4)]                  # each (TH+1, W+1, CLp)

    for py in range(2):
        for px in range(2):
            ph = py * 2 + px
            acc = jnp.zeros((TH * W, CLp), f32)                   # single shared f32 accumulator

            # 3x3 conv over fms_low, restricted to this output parity: 9 dense taps.
            for ky in range(3):
                qy, ay = (py + ky) % 2, (py + ky) // 2
                for kx in range(3):
                    qx, ax = (px + kx) % 2, (px + kx) // 2
                    tap = planes[qy * 2 + qx][ay:ay + TH, ax:ax + W, :].reshape(TH * W, CLp)
                    t = ky * 3 + kx
                    acc += jnp.dot(tap, w3g[t * CLp:(t + 1) * CLp, :],
                                   preferred_element_type=f32)

            # ConvTranspose2d(4,2,1) polyphase: only the 4 non-zero taps of this parity.
            for ty in range(2):
                ry = 1 + _DSEL[py][ty]
                for tx in range(2):
                    rx = 1 + _DSEL[px][tx]
                    tap = hi[ry:ry + TH, rx:rx + W, :].reshape(TH * W, CHp)
                    acc += jnp.dot(tap, wt_ref[ph * 4 + ty * 2 + tx],
                                   preferred_element_type=f32)

            out = jnp.maximum(acc + shift, 0.0)                   # fused BN-shift + gate + ReLU
            out_ref[0, 0, ph] = out.reshape(TH, W, CLp).astype(out_ref.dtype)


def _pick_row_tile(H, W, CHp, CLp, budget_bytes=8 * 1024 * 1024):
    """Largest divisor of H whose single-buffered per-step footprint fits the budget."""
    def step_bytes(th):
        hi = (th + 2) * (W + 2) * CHp * 2
        lo = 4 * (th + 1) * (W + 1) * CLp * 2
        out = 4 * th * W * CLp * 2
        acc = th * W * CLp * 4
        return hi + lo + out + acc
    for th in range(H, 0, -1):
        if H % th == 0 and step_bytes(th) <= budget_bytes:
            return th
    return 1


def gau_forward(fms_high_nchw, fms_low_nchw, params):
    """GAU forward (upsample=True). NCHW in -> NCHW out (bf16). Wrapper glue = transposes/pads only."""
    CHp, CLp = params["w1"].shape
    B, CH, H, W = fms_high_nchw.shape
    _, CL, H2, W2 = fms_low_nchw.shape
    assert H2 == 2 * H and W2 == 2 * W, "fms_low spatial dims must be 2x fms_high (upsample=True)"

    high = jnp.transpose(fms_high_nchw, (0, 2, 3, 1)).astype(jnp.bfloat16)   # (B, H, W, CH)
    low = jnp.transpose(fms_low_nchw, (0, 2, 3, 1)).astype(jnp.bfloat16)     # (B, 2H, 2W, CL)

    # gate input: global average pool (spans every spatial tile -> computed here, in f32)
    gp = jnp.mean(high.astype(jnp.float32), axis=(1, 2))                     # (B, CH)
    gp = jnp.pad(gp, ((0, 0), (0, CHp - CH)))[:, :, None]                    # (B, CHp, 1)

    # lane-dense channel padding + spatial halo padding (pure data movement)
    highp = jnp.pad(high, ((0, 0), (1, 1), (1, 1), (0, CHp - CH)))           # (B, H+2, W+2, CHp)
    lowp = jnp.pad(low, ((0, 0), (1, 1), (1, 1), (0, CLp - CL)))             # (B, 2H+2, 2W+2, CLp)

    # polyphase planes of the padded low features: planes[:, qy*2+qx, i, j] = lowp[:, 2i+qy, 2j+qx]
    planes = jnp.stack([lowp[:, qy::2, qx::2, :] for qy in (0, 1) for qx in (0, 1)],
                       axis=1)                                               # (B, 4, H+1, W+1, CLp)

    # row tiling: overlapping halo windows (a pure reshape when a single tile suffices)
    TH = _pick_row_tile(H, W, CHp, CLp)
    NT = H // TH
    if NT == 1:
        hi_win = highp[:, None]                                              # (B, 1, H+2, W+2, CHp)
        lo_win = planes[:, None]                                             # (B, 1, 4, H+1, W+1, CLp)
    else:
        hi_win = jnp.stack([highp[:, r * TH:r * TH + TH + 2] for r in range(NT)], axis=1)
        lo_win = jnp.stack([planes[:, :, r * TH:r * TH + TH + 1] for r in range(NT)], axis=1)

    flops = 2 * B * (4 * H * W) * CLp * (9 * CLp + 4 * CHp)
    bytes_accessed = ((hi_win.size + lo_win.size) * 2 + B * NT * 4 * TH * W * CLp * 2
                      + (params["w1"].size + params["w3"].size + params["wt"].size) * 2
                      + params["bn"].size * 4 + gp.size * 4)

    out_win = pl.pallas_call(
        gau_kernel,
        out_shape=jax.ShapeDtypeStruct((B, NT, 4, TH, W, CLp), jnp.bfloat16),
        grid_spec=pltpu.PrefetchScalarGridSpec(
            num_scalar_prefetch=0,
            grid=(B, NT),
            in_specs=[
                pl.BlockSpec((1, CHp, 1), lambda b, r: (b, 0, 0)),
                pl.BlockSpec((1, 1, TH + 2, W + 2, CHp), lambda b, r: (b, r, 0, 0, 0)),
                pl.BlockSpec((1, 1, 4, TH + 1, W + 1, CLp), lambda b, r: (b, r, 0, 0, 0, 0)),
                pl.BlockSpec((CHp, CLp), lambda b, r: (0, 0)),
                pl.BlockSpec((9 * CLp, CLp), lambda b, r: (0, 0)),
                pl.BlockSpec((16, CHp, CLp), lambda b, r: (0, 0, 0)),
                pl.BlockSpec((4, CLp), lambda b, r: (0, 0)),
            ],
            out_specs=pl.BlockSpec((1, 1, 4, TH, W, CLp), lambda b, r: (b, r, 0, 0, 0, 0)),
        ),
        compiler_params=pltpu.CompilerParams(
            dimension_semantics=("parallel", "parallel"),
            vmem_limit_bytes=64 * 1024 * 1024,
        ),
        cost_estimate=pl.CostEstimate(flops=flops, transcendentals=0,
                                      bytes_accessed=bytes_accessed),
    )(gp, hi_win, lo_win, params["w1"], params["w3"], params["wt"], params["bn"])

    # reassemble phases/row-tiles: (B, NT, 2, 2, TH, W, CLp) -> (B, 2H, 2W, CL) -> NCHW
    out = out_win.reshape(B, NT, 2, 2, TH, W, CLp)
    out = jnp.transpose(out, (0, 1, 4, 2, 5, 3, 6)).reshape(B, 2 * H, 2 * W, CLp)
    return jnp.transpose(out[..., :CL], (0, 3, 1, 2))


def init_raw_params(key, c_high, c_low, eps=1e-5):
    """Synthetic torch-layout parameters; BatchNorms folded to eval-mode scale/shift."""
    ks = jax.random.split(key, 6)
    raw = {
        "w_conv3": jax.random.normal(ks[0], (c_low, c_low, 3, 3), jnp.float32) * 0.1,
        "w_conv1": jax.random.normal(ks[1], (c_low, c_high, 1, 1), jnp.float32) * 0.1,
        "w_convt": jax.random.normal(ks[2], (c_high, c_low, 4, 4), jnp.float32) * 0.1,
    }

    def bn_scale_shift(k):
        k1, k2, k3, k4 = jax.random.split(k, 4)
        gamma = jax.random.uniform(k1, (c_low,), minval=0.5, maxval=1.5)
        beta = jax.random.normal(k2, (c_low,)) * 0.1
        mean = jax.random.normal(k3, (c_low,)) * 0.1
        var = jax.random.uniform(k4, (c_low,), minval=0.5, maxval=1.5)
        scale = gamma / jnp.sqrt(var + eps)
        return scale, beta - mean * scale

    raw["hi_scale"], raw["hi_shift"] = bn_scale_shift(ks[3])
    raw["lo_scale"], raw["lo_shift"] = bn_scale_shift(ks[4])
    raw["up_scale"], raw["up_shift"] = bn_scale_shift(ks[5])
    return raw


def prepare_params(raw, c_high, c_low):
    """Kernel-layout parameters: channels padded to 128 lanes, BN scales folded into the conv
    weights, the ConvTranspose weight pre-split into its 16 polyphase taps, cast to bf16."""
    CHp = _round_up(c_high, _LANE)
    CLp = _round_up(c_low, _LANE)

    # 1x1 conv: (CL, CH, 1, 1) -> (CHp, CLp)
    w1 = jnp.transpose(raw["w_conv1"][:, :, 0, 0], (1, 0))
    w1 = jnp.pad(w1, ((0, CHp - c_high), (0, CLp - c_low))).astype(jnp.bfloat16)

    # 3x3 conv, BN_low scale folded: (CL, CL, 3, 3) -> HWIO -> (9*CLp, CLp)
    w3 = jnp.transpose(raw["w_conv3"], (2, 3, 1, 0)) * raw["lo_scale"]
    w3 = jnp.pad(w3, ((0, 0), (0, 0), (0, CLp - c_low), (0, CLp - c_low)))
    w3 = w3.reshape(9 * CLp, CLp).astype(jnp.bfloat16)

    # ConvTranspose2d(4,2,1), BN_up scale folded, polyphase taps (ci, co) per (py, px, ty, tx).
    wt_full = raw["w_convt"] * raw["up_scale"][None, :, None, None]           # (CH, CL, 4, 4)
    taps = []
    for py in range(2):
        for px in range(2):
            for ty in range(2):
                for tx in range(2):
                    taps.append(wt_full[:, :, _KSEL[py][ty], _KSEL[px][tx]])  # (CH, CL)
    wt = jnp.stack(taps, axis=0)                                              # (16, CH, CL)
    wt = jnp.pad(wt, ((0, 0), (0, CHp - c_high), (0, CLp - c_low))).astype(jnp.bfloat16)

    bn = jnp.stack([raw["hi_scale"], raw["hi_shift"], raw["lo_shift"], raw["up_shift"]], axis=0)
    bn = jnp.pad(bn, ((0, 0), (0, CLp - c_low))).astype(jnp.float32)

    return {"w1": w1, "w3": w3, "wt": wt, "bn": bn}


def gau_reference(fms_high_nchw, fms_low_nchw, raw):
    """Pure-JAX/XLA reference using the same bf16 quantization of activations / folded weights."""
    f32 = jnp.float32
    hp = jax.lax.Precision.HIGHEST
    dn = ("NHWC", "HWIO", "NHWC")
    high = jnp.transpose(fms_high_nchw, (0, 2, 3, 1)).astype(jnp.bfloat16).astype(f32)
    low = jnp.transpose(fms_low_nchw, (0, 2, 3, 1)).astype(jnp.bfloat16).astype(f32)

    gp = jnp.mean(high, axis=(1, 2))
    w1 = jnp.transpose(raw["w_conv1"][:, :, 0, 0], (1, 0)).astype(jnp.bfloat16).astype(f32)
    g = jnp.maximum(jnp.dot(gp, w1, precision=hp) * raw["hi_scale"] + raw["hi_shift"], 0.0)

    w3 = (jnp.transpose(raw["w_conv3"], (2, 3, 1, 0)) * raw["lo_scale"]).astype(jnp.bfloat16).astype(f32)
    low_mask = jax.lax.conv_general_dilated(low, w3, (1, 1), [(1, 1), (1, 1)],
                                            dimension_numbers=dn, precision=hp)
    att = (low_mask + raw["lo_shift"]) * g[:, None, None, :]

    wt_full = raw["w_convt"] * raw["up_scale"][None, :, None, None]
    wt_hwio = jnp.transpose(jnp.flip(wt_full, axis=(2, 3)), (2, 3, 0, 1)).astype(jnp.bfloat16).astype(f32)
    up = jax.lax.conv_general_dilated(high, wt_hwio, (1, 1), [(2, 2), (2, 2)],
                                      lhs_dilation=(2, 2), dimension_numbers=dn, precision=hp)
    out = jnp.maximum(up + raw["up_shift"] + att, 0.0)
    return jnp.transpose(out, (0, 3, 1, 2))


if __name__ == "__main__":
    key = jax.random.PRNGKey(0)
    k_hi, k_lo, k_par = jax.random.split(key, 3)

    B, C_HIGH, C_LOW, H, W = 2, 8, 4, 8, 8
    fms_high = jax.random.normal(k_hi, (B, C_HIGH, H, W), jnp.float32)         # NCHW
    fms_low = jax.random.normal(k_lo, (B, C_LOW, 2 * H, 2 * W), jnp.float32)   # NCHW

    raw = init_raw_params(k_par, C_HIGH, C_LOW)
    params = prepare_params(raw, C_HIGH, C_LOW)

    out = gau_forward(fms_high, fms_low, params)
    out = jax.block_until_ready(out)
    assert out.shape == (B, C_LOW, 2 * H, 2 * W)

    ref = gau_reference(fms_high, fms_low, raw)
    np.testing.assert_allclose(np.asarray(out.astype(jnp.float32)), np.asarray(ref),
                               rtol=3e-2, atol=3e-2)
    print("KERNEL_OK")
</pallas_src>

<mosaic_0001>
module attributes {stable_mosaic.version = 11 : i64} {
  func.func @gau_kernel(%arg0: i32, %arg1: i32, %arg2: memref<1x128x1xf32, #tpu.memory_space<vmem>>, %arg3: memref<1x1x10x10x128xbf16, #tpu.memory_space<vmem>>, %arg4: memref<1x1x4x9x9x128xbf16, #tpu.memory_space<vmem>>, %arg5: memref<128x128xbf16, #tpu.memory_space<vmem>>, %arg6: memref<1152x128xbf16, #tpu.memory_space<vmem>>, %arg7: memref<16x128x128xbf16, #tpu.memory_space<vmem>>, %arg8: memref<4x128xf32, #tpu.memory_space<vmem>>, %arg9: memref<1x1x4x8x8x128xbf16, #tpu.memory_space<vmem>>) attributes {dimension_semantics = [#tpu.dimension_semantics<parallel>, #tpu.dimension_semantics<parallel>], iteration_bounds = array<i64: 2, 1>, scalar_prefetch = 0 : i64, scratch_operands = 0 : i64, tpu.core_type = #tpu.core_type<tc>, window_params = [{transform_indices = @transform_0, window_bounds = array<i64: 1, 128, 1>}, {transform_indices = @transform_1, window_bounds = array<i64: 1, 1, 10, 10, 128>}, {transform_indices = @transform_2, window_bounds = array<i64: 1, 1, 4, 9, 9, 128>}, {pipeline_mode = #tpu.pipeline_mode<synchronous>, transform_indices = @transform_3, window_bounds = array<i64: 128, 128>}, {pipeline_mode = #tpu.pipeline_mode<synchronous>, transform_indices = @transform_4, window_bounds = array<i64: 1152, 128>}, {pipeline_mode = #tpu.pipeline_mode<synchronous>, transform_indices = @transform_5, window_bounds = array<i64: 16, 128, 128>}, {pipeline_mode = #tpu.pipeline_mode<synchronous>, transform_indices = @transform_6, window_bounds = array<i64: 4, 128>}, {transform_indices = @transform_7, window_bounds = array<i64: 1, 1, 4, 8, 8, 128>}]} {
    %c0 = arith.constant 0 : index
    %c0_0 = arith.constant 0 : index
    %0 = vector.load %arg8[%c0, %c0_0] : memref<4x128xf32, #tpu.memory_space<vmem>>, vector<4x128xf32>
    %c0_1 = arith.constant 0 : index
    %c0_2 = arith.constant 0 : index
    %c0_3 = arith.constant 0 : index
    %1 = vector.load %arg2[%c0_1, %c0_2, %c0_3] : memref<1x128x1xf32, #tpu.memory_space<vmem>>, vector<1x128x1xf32>
    %2 = vector.shape_cast %1 : vector<1x128x1xf32> to vector<128x1xf32>
    %c0_4 = arith.constant 0 : index
    %c0_5 = arith.constant 0 : index
    %3 = vector.load %arg5[%c0_4, %c0_5] : memref<128x128xbf16, #tpu.memory_space<vmem>>, vector<128x128xbf16>
    %4 = arith.extf %3 : vector<128x128xbf16> to vector<128x128xf32>
    %5 = vector.broadcast %2 : vector<128x1xf32> to vector<128x128xf32>
    %6 = arith.mulf %4, %5 : vector<128x128xf32>
    %cst = arith.constant dense<0.000000e+00> : vector<128xf32>
    %7 = vector.multi_reduction <add>, %6, %cst [0] : vector<128x128xf32> to vector<128xf32>
    %8 = vector.shape_cast %7 : vector<128xf32> to vector<1x128xf32>
    %9 = vector.extract_strided_slice %0 {offsets = [0, 0], sizes = [1, 128], strides = [1, 1]} : vector<4x128xf32> to vector<1x128xf32>
    %10 = arith.mulf %8, %9 : vector<1x128xf32>
    %11 = vector.extract_strided_slice %0 {offsets = [1, 0], sizes = [1, 128], strides = [1, 1]} : vector<4x128xf32> to vector<1x128xf32>
    %12 = arith.addf %10, %11 : vector<1x128xf32>
    %cst_6 = arith.constant 0.000000e+00 : f32
    %13 = vector.broadcast %cst_6 : f32 to vector<1x128xf32>
    %14 = arith.maximumf %12, %13 : vector<1x128xf32>
    %15 = vector.extract_strided_slice %0 {offsets = [3, 0], sizes = [1, 128], strides = [1, 1]} : vector<4x128xf32> to vector<1x128xf32>
    %16 = vector.extract_strided_slice %0 {offsets = [2, 0], sizes = [1, 128], strides = [1, 1]} : vector<4x128xf32> to vector<1x128xf32>
    %17 = arith.mulf %16, %14 : vector<1x128xf32>
    %18 = arith.addf %15, %17 : vector<1x128xf32>
    %c0_7 = arith.constant 0 : index
    %c0_8 = arith.constant 0 : index
    %19 = vector.load %arg6[%c0_7, %c0_8] : memref<1152x128xbf16, #tpu.memory_space<vmem>>, vector<1152x128xbf16>
    %20 = arith.extf %19 : vector<1152x128xbf16> to vector<1152x128xf32>
    %21 = vector.broadcast %14 : vector<1x128xf32> to vector<1152x128xf32>
    %22 = arith.mulf %20, %21 : vector<1152x128xf32>
    %23 = arith.truncf %22 : vector<1152x128xf32> to vector<1152x128xbf16>
    %c0_9 = arith.constant 0 : index
    %c0_10 = arith.constant 0 : index
    %c0_11 = arith.constant 0 : index
    %c0_12 = arith.constant 0 : index
    %c0_13 = arith.constant 0 : index
    %24 = vector.load %arg3[%c0_9, %c0_10, %c0_11, %c0_12, %c0_13] : memref<1x1x10x10x128xbf16, #tpu.memory_space<vmem>>, vector<1x1x10x10x128xbf16>
    %25 = vector.shape_cast %24 : vector<1x1x10x10x128xbf16> to vector<10x10x128xbf16>
    %c0_14 = arith.constant 0 : index
    %c0_15 = arith.constant 0 : index
    %c0_16 = arith.constant 0 : index
    %c0_17 = arith.constant 0 : index
    %c0_18 = arith.constant 0 : index
    %c0_19 = arith.constant 0 : index
    %26 = vector.load %arg4[%c0_14, %c0_15, %c0_16, %c0_17, %c0_18, %c0_19] : memref<1x1x4x9x9x128xbf16, #tpu.memory_space<vmem>>, vector<1x1x1x9x9x128xbf16>
    %27 = vector.shape_cast %26 : vector<1x1x1x9x9x128xbf16> to vector<9x9x128xbf16>
    %c0_20 = arith.constant 0 : index
    %c0_21 = arith.constant 0 : index
    %c1 = arith.constant 1 : index
    %c0_22 = arith.constant 0 : index
    %c0_23 = arith.constant 0 : index
    %c0_24 = arith.constant 0 : index
    %28 = vector.load %arg4[%c0_20, %c0_21, %c1, %c0_22, %c0_23, %c0_24] : memref<1x1x4x9x9x128xbf16, #tpu.memory_space<vmem>>, vector<1x1x1x9x9x128xbf16>
    %29 = vector.shape_cast %28 : vector<1x1x1x9x9x128xbf16> to vector<9x9x128xbf16>
    %c0_25 = arith.constant 0 : index
    %c0_26 = arith.constant 0 : index
    %c2 = arith.constant 2 : index
    %c0_27 = arith.constant 0 : index
    %c0_28 = arith.constant 0 : index
    %c0_29 = arith.constant 0 : index
    %30 = vector.load %arg4[%c0_25, %c0_26, %c2, %c0_27, %c0_28, %c0_29] : memref<1x1x4x9x9x128xbf16, #tpu.memory_space<vmem>>, vector<1x1x1x9x9x128xbf16>
    %31 = vector.shape_cast %30 : vector<1x1x1x9x9x128xbf16> to vector<9x9x128xbf16>
    %c0_30 = arith.constant 0 : index
    %c0_31 = arith.constant 0 : index
    %c3 = arith.constant 3 : index
    %c0_32 = arith.constant 0 : index
    %c0_33 = arith.constant 0 : index
    %c0_34 = arith.constant 0 : index
    %32 = vector.load %arg4[%c0_30, %c0_31, %c3, %c0_32, %c0_33, %c0_34] : memref<1x1x4x9x9x128xbf16, #tpu.memory_space<vmem>>, vector<1x1x1x9x9x128xbf16>
    %33 = vector.shape_cast %32 : vector<1x1x1x9x9x128xbf16> to vector<9x9x128xbf16>
    %cst_35 = arith.constant 0.000000e+00 : f32
    %34 = vector.broadcast %cst_35 : f32 to vector<64x128xf32>
    %35 = vector.extract_strided_slice %27 {offsets = [0, 0, 0], sizes = [8, 8, 128], strides = [1, 1, 1]} : vector<9x9x128xbf16> to vector<8x8x128xbf16>
    %36 = vector.shape_cast %35 : vector<8x8x128xbf16> to vector<64x128xbf16>
    %37 = vector.extract_strided_slice %23 {offsets = [0, 0], sizes = [128, 128], strides = [1, 1]} : vector<1152x128xbf16> to vector<128x128xbf16>
    %cst_36 = arith.constant dense<0.000000e+00> : vector<64x128xf32>
    %38 = tpu.matmul %36, %37, %cst_36 {dimension_numbers = #tpu.dot_dimension_numbers<[1], [0], [0], [1], [0, 0, 1, 1], [], []>} : vector<64x128xbf16>, vector<128x128xbf16>, vector<64x128xf32> -> vector<64x128xf32>
    %39 = arith.addf %34, %38 : vector<64x128xf32>
    %40 = vector.extract_strided_slice %29 {offsets = [0, 0, 0], sizes = [8, 8, 128], strides = [1, 1, 1]} : vector<9x9x128xbf16> to vector<8x8x128xbf16>
    %41 = vector.shape_cast %40 : vector<8x8x128xbf16> to vector<64x128xbf16>
    %42 = vector.extract_strided_slice %23 {offsets = [128, 0], sizes = [128, 128], strides = [1, 1]} : vector<1152x128xbf16> to vector<128x128xbf16>
    %cst_37 = arith.constant dense<0.000000e+00> : vector<64x128xf32>
    %43 = tpu.matmul %41, %42, %cst_37 {dimension_numbers = #tpu.dot_dimension_numbers<[1], [0], [0], [1], [0, 0, 1, 1], [], []>} : vector<64x128xbf16>, vector<128x128xbf16>, vector<64x128xf32> -> vector<64x128xf32>
    %44 = arith.addf %39, %43 : vector<64x128xf32>
    %45 = vector.extract_strided_slice %27 {offsets = [0, 1, 0], sizes = [8, 8, 128], strides = [1, 1, 1]} : vector<9x9x128xbf16> to vector<8x8x128xbf16>
    %46 = vector.shape_cast %45 : vector<8x8x128xbf16> to vector<64x128xbf16>
    %47 = vector.extract_strided_slice %23 {offsets = [256, 0], sizes = [128, 128], strides = [1, 1]} : vector<1152x128xbf16> to vector<128x128xbf16>
    %cst_38 = arith.constant dense<0.000000e+00> : vector<64x128xf32>
    %48 = tpu.matmul %46, %47, %cst_38 {dimension_numbers = #tpu.dot_dimension_numbers<[1], [0], [0], [1], [0, 0, 1, 1], [], []>} : vector<64x128xbf16>, vector<128x128xbf16>, vector<64x128xf32> -> vector<64x128xf32>
    %49 = arith.addf %44, %48 : vector<64x128xf32>
    %50 = vector.extract_strided_slice %31 {offsets = [0, 0, 0], sizes = [8, 8, 128], strides = [1, 1, 1]} : vector<9x9x128xbf16> to vector<8x8x128xbf16>
    %51 = vector.shape_cast %50 : vector<8x8x128xbf16> to vector<64x128xbf16>
    %52 = vector.extract_strided_slice %23 {offsets = [384, 0], sizes = [128, 128], strides = [1, 1]} : vector<1152x128xbf16> to vector<128x128xbf16>
    %cst_39 = arith.constant dense<0.000000e+00> : vector<64x128xf32>
    %53 = tpu.matmul %51, %52, %cst_39 {dimension_numbers = #tpu.dot_dimension_numbers<[1], [0], [0], [1], [0, 0, 1, 1], [], []>} : vector<64x128xbf16>, vector<128x128xbf16>, vector<64x128xf32> -> vector<64x128xf32>
    %54 = arith.addf %49, %53 : vector<64x128xf32>
    %55 = vector.extract_strided_slice %33 {offsets = [0, 0, 0], sizes = [8, 8, 128], strides = [1, 1, 1]} : vector<9x9x128xbf16> to vector<8x8x128xbf16>
    %56 = vector.shape_cast %55 : vector<8x8x128xbf16> to vector<64x128xbf16>
    %57 = vector.extract_strided_slice %23 {offsets = [512, 0], sizes = [128, 128], strides = [1, 1]} : vector<1152x128xbf16> to vector<128x128xbf16>
    %cst_40 = arith.constant dense<0.000000e+00> : vector<64x128xf32>
    %58 = tpu.matmul %56, %57, %cst_40 {dimension_numbers = #tpu.dot_dimension_numbers<[1], [0], [0], [1], [0, 0, 1, 1], [], []>} : vector<64x128xbf16>, vector<128x128xbf16>, vector<64x128xf32> -> vector<64x128xf32>
    %59 = arith.addf %54, %58 : vector<64x128xf32>
    %60 = vector.extract_strided_slice %31 {offsets = [0, 1, 0], sizes = [8, 8, 128], strides = [1, 1, 1]} : vector<9x9x128xbf16> to vector<8x8x128xbf16>
    %61 = vector.shape_cast %60 : vector<8x8x128xbf16> to vector<64x128xbf16>
    %62 = vector.extract_strided_slice %23 {offsets = [640, 0], sizes = [128, 128], strides = [1, 1]} : vector<1152x128xbf16> to vector<128x128xbf16>
    %cst_41 = arith.constant dense<0.000000e+00> : vector<64x128xf32>
    %63 = tpu.matmul %61, %62, %cst_41 {dimension_numbers = #tpu.dot_dimension_numbers<[1], [0], [0], [1], [0, 0, 1, 1], [], []>} : vector<64x128xbf16>, vector<128x128xbf16>, vector<64x128xf32> -> vector<64x128xf32>
    %64 = arith.addf %59, %63 : vector<64x128xf32>
    %65 = vector.extract_strided_slice %27 {offsets = [1, 0, 0], sizes = [8, 8, 128], strides = [1, 1, 1]} : vector<9x9x128xbf16> to vector<8x8x128xbf16>
    %66 = vector.shape_cast %65 : vector<8x8x128xbf16> to vector<64x128xbf16>
    %67 = vector.extract_strided_slice %23 {offsets = [768, 0], sizes = [128, 128], strides = [1, 1]} : vector<1152x128xbf16> to vector<128x128xbf16>
    %cst_42 = arith.constant dense<0.000000e+00> : vector<64x128xf32>
    %68 = tpu.matmul %66, %67, %cst_42 {dimension_numbers = #tpu.dot_dimension_numbers<[1], [0], [0], [1], [0, 0, 1, 1], [], []>} : vector<64x128xbf16>, vector<128x128xbf16>, vector<64x128xf32> -> vector<64x128xf32>
    %69 = arith.addf %64, %68 : vector<64x128xf32>
    %70 = vector.extract_strided_slice %29 {offsets = [1, 0, 0], sizes = [8, 8, 128], strides = [1, 1, 1]} : vector<9x9x128xbf16> to vector<8x8x128xbf16>
    %71 = vector.shape_cast %70 : vector<8x8x128xbf16> to vector<64x128xbf16>
    %72 = vector.extract_strided_slice %23 {offsets = [896, 0], sizes = [128, 128], strides = [1, 1]} : vector<1152x128xbf16> to vector<128x128xbf16>
    %cst_43 = arith.constant dense<0.000000e+00> : vector<64x128xf32>
    %73 = tpu.matmul %71, %72, %cst_43 {dimension_numbers = #tpu.dot_dimension_numbers<[1], [0], [0], [1], [0, 0, 1, 1], [], []>} : vector<64x128xbf16>, vector<128x128xbf16>, vector<64x128xf32> -> vector<64x128xf32>
    %74 = arith.addf %69, %73 : vector<64x128xf32>
    %75 = vector.extract_strided_slice %27 {offsets = [1, 1, 0], sizes = [8, 8, 128], strides = [1, 1, 1]} : vector<9x9x128xbf16> to vector<8x8x128xbf16>
    %76 = vector.shape_cast %75 : vector<8x8x128xbf16> to vector<64x128xbf16>
    %77 = vector.extract_strided_slice %23 {offsets = [1024, 0], sizes = [128, 128], strides = [1, 1]} : vector<1152x128xbf16> to vector<128x128xbf16>
    %cst_44 = arith.constant dense<0.000000e+00> : vector<64x128xf32>
    %78 = tpu.matmul %76, %77, %cst_44 {dimension_numbers = #tpu.dot_dimension_numbers<[1], [0], [0], [1], [0, 0, 1, 1], [], []>} : vector<64x128xbf16>, vector<128x128xbf16>, vector<64x128xf32> -> vector<64x128xf32>
    %79 = arith.addf %74, %78 : vector<64x128xf32>
    %80 = vector.extract_strided_slice %25 {offsets = [1, 1, 0], sizes = [8, 8, 128], strides = [1, 1, 1]} : vector<10x10x128xbf16> to vector<8x8x128xbf16>
    %81 = vector.shape_cast %80 : vector<8x8x128xbf16> to vector<64x128xbf16>
    %c0_45 = arith.constant 0 : index
    %c0_46 = arith.constant 0 : index
    %c0_47 = arith.constant 0 : index
    %82 = vector.load %arg7[%c0_45, %c0_46, %c0_47] : memref<16x128x128xbf16, #tpu.memory_space<vmem>>, vector<1x128x128xbf16>
    %83 = vector.shape_cast %82 : vector<1x128x128xbf16> to vector<128x128xbf16>
    %cst_48 = arith.constant dense<0.000000e+00> : vector<64x128xf32>
    %84 = tpu.matmul %81, %83, %cst_48 {dimension_numbers = #tpu.dot_dimension_numbers<[1], [0], [0], [1], [0, 0, 1, 1], [], []>} : vector<64x128xbf16>, vector<128x128xbf16>, vector<64x128xf32> -> vector<64x128xf32>
    %85 = arith.addf %79, %84 : vector<64x128xf32>
    %86 = vector.extract_strided_slice %25 {offsets = [1, 0, 0], sizes = [8, 8, 128], strides = [1, 1, 1]} : vector<10x10x128xbf16> to vector<8x8x128xbf16>
    %87 = vector.shape_cast %86 : vector<8x8x128xbf16> to vector<64x128xbf16>
    %c1_49 = arith.constant 1 : index
    %c0_50 = arith.constant 0 : index
    %c0_51 = arith.constant 0 : index
    %88 = vector.load %arg7[%c1_49, %c0_50, %c0_51] : memref<16x128x128xbf16, #tpu.memory_space<vmem>>, vector<1x128x128xbf16>
    %89 = vector.shape_cast %88 : vector<1x128x128xbf16> to vector<128x128xbf16>
    %cst_52 = arith.constant dense<0.000000e+00> : vector<64x128xf32>
    %90 = tpu.matmul %87, %89, %cst_52 {dimension_numbers = #tpu.dot_dimension_numbers<[1], [0], [0], [1], [0, 0, 1, 1], [], []>} : vector<64x128xbf16>, vector<128x128xbf16>, vector<64x128xf32> -> vector<64x128xf32>
    %91 = arith.addf %85, %90 : vector<64x128xf32>
    %92 = vector.extract_strided_slice %25 {offsets = [0, 1, 0], sizes = [8, 8, 128], strides = [1, 1, 1]} : vector<10x10x128xbf16> to vector<8x8x128xbf16>
    %93 = vector.shape_cast %92 : vector<8x8x128xbf16> to vector<64x128xbf16>
    %c2_53 = arith.constant 2 : index
    %c0_54 = arith.constant 0 : index
    %c0_55 = arith.constant 0 : index
    %94 = vector.load %arg7[%c2_53, %c0_54, %c0_55] : memref<16x128x128xbf16, #tpu.memory_space<vmem>>, vector<1x128x128xbf16>
    %95 = vector.shape_cast %94 : vector<1x128x128xbf16> to vector<128x128xbf16>
    %cst_56 = arith.constant dense<0.000000e+00> : vector<64x128xf32>
    %96 = tpu.matmul %93, %95, %cst_56 {dimension_numbers = #tpu.dot_dimension_numbers<[1], [0], [0], [1], [0, 0, 1, 1], [], []>} : vector<64x128xbf16>, vector<128x128xbf16>, vector<64x128xf32> -> vector<64x128xf32>
    %97 = arith.addf %91, %96 : vector<64x128xf32>
    %98 = vector.extract_strided_slice %25 {offsets = [0, 0, 0], sizes = [8, 8, 128], strides = [1, 1, 1]} : vector<10x10x128xbf16> to vector<8x8x128xbf16>
    %99 = vector.shape_cast %98 : vector<8x8x128xbf16> to vector<64x128xbf16>
    %c3_57 = arith.constant 3 : index
    %c0_58 = arith.constant 0 : index
    %c0_59 = arith.constant 0 : index
    %100 = vector.load %arg7[%c3_57, %c0_58, %c0_59] : memref<16x128x128xbf16, #tpu.memory_space<vmem>>, vector<1x128x128xbf16>
    %101 = vector.shape_cast %100 : vector<1x128x128xbf16> to vector<128x128xbf16>
    %cst_60 = arith.constant dense<0.000000e+00> : vector<64x128xf32>
    %102 = tpu.matmul %99, %101, %cst_60 {dimension_numbers = #tpu.dot_dimension_numbers<[1], [0], [0], [1], [0, 0, 1, 1], [], []>} : vector<64x128xbf16>, vector<128x128xbf16>, vector<64x128xf32> -> vector<64x128xf32>
    %103 = arith.addf %97, %102 : vector<64x128xf32>
    %104 = vector.broadcast %18 : vector<1x128xf32> to vector<64x128xf32>
    %105 = arith.addf %103, %104 : vector<64x128xf32>
    %cst_61 = arith.constant 0.000000e+00 : f32
    %106 = vector.broadcast %cst_61 : f32 to vector<64x128xf32>
    %107 = arith.maximumf %105, %106 : vector<64x128xf32>
    %108 = vector.shape_cast %107 : vector<64x128xf32> to vector<8x8x128xf32>
    %109 = arith.truncf %108 : vector<8x8x128xf32> to vector<8x8x128xbf16>
    %c0_62 = arith.constant 0 : index
    %c0_63 = arith.constant 0 : index
    %c0_64 = arith.constant 0 : index
    %c0_65 = arith.constant 0 : index
    %c0_66 = arith.constant 0 : index
    %c0_67 = arith.constant 0 : index
    %110 = vector.load %arg9[%c0_62, %c0_63, %c0_64, %c0_65, %c0_66, %c0_67] : memref<1x1x4x8x8x128xbf16, #tpu.memory_space<vmem>>, vector<1x1x1x8x8x128xbf16>
    %111 = vector.shape_cast %110 : vector<1x1x1x8x8x128xbf16> to vector<8x8x128xbf16>
    %112 = vector.shape_cast %109 : vector<8x8x128xbf16> to vector<1x1x1x8x8x128xbf16>
    tpu.vector_store %arg9[%c0_62, %c0_63, %c0_64, %c0_65, %c0_66, %c0_67], %112 {strides = array<i32>} : memref<1x1x4x8x8x128xbf16, #tpu.memory_space<vmem>>, vector<1x1x1x8x8x128xbf16>,
    %cst_68 = arith.constant 0.000000e+00 : f32
    %113 = vector.broadcast %cst_68 : f32 to vector<64x128xf32>
    %114 = vector.extract_strided_slice %29 {offsets = [0, 0, 0], sizes = [8, 8, 128], strides = [1, 1, 1]} : vector<9x9x128xbf16> to vector<8x8x128xbf16>
    %115 = vector.shape_cast %114 : vector<8x8x128xbf16> to vector<64x128xbf16>
    %116 = vector.extract_strided_slice %23 {offsets = [0, 0], sizes = [128, 128], strides = [1, 1]} : vector<1152x128xbf16> to vector<128x128xbf16>
    %cst_69 = arith.constant dense<0.000000e+00> : vector<64x128xf32>
    %117 = tpu.matmul %115, %116, %cst_69 {dimension_numbers = #tpu.dot_dimension_numbers<[1], [0], [0], [1], [0, 0, 1, 1], [], []>} : vector<64x128xbf16>, vector<128x128xbf16>, vector<64x128xf32> -> vector<64x128xf32>
    %118 = arith.addf %113, %117 : vector<64x128xf32>
    %119 = vector.extract_strided_slice %27 {offsets = [0, 1, 0], sizes = [8, 8, 128], strides = [1, 1, 1]} : vector<9x9x128xbf16> to vector<8x8x128xbf16>
    %120 = vector.shape_cast %119 : vector<8x8x128xbf16> to vector<64x128xbf16>
    %121 = vector.extract_strided_slice %23 {offsets = [128, 0], sizes = [128, 128], strides = [1, 1]} : vector<1152x128xbf16> to vector<128x128xbf16>
    %cst_70 = arith.constant dense<0.000000e+00> : vector<64x128xf32>
    %122 = tpu.matmul %120, %121, %cst_70 {dimension_numbers = #tpu.dot_dimension_numbers<[1], [0], [0], [1], [0, 0, 1, 1], [], []>} : vector<64x128xbf16>, vector<128x128xbf16>, vector<64x128xf32> -> vector<64x128xf32>
    %123 = arith.addf %118, %122 : vector<64x128xf32>
    %124 = vector.extract_strided_slice %29 {offsets = [0, 1, 0], sizes = [8, 8, 128], strides = [1, 1, 1]} : vector<9x9x128xbf16> to vector<8x8x128xbf16>
    %125 = vector.shape_cast %124 : vector<8x8x128xbf16> to vector<64x128xbf16>
    %126 = vector.extract_strided_slice %23 {offsets = [256, 0], sizes = [128, 128], strides = [1, 1]} : vector<1152x128xbf16> to vector<128x128xbf16>
    %cst_71 = arith.constant dense<0.000000e+00> : vector<64x128xf32>
    %127 = tpu.matmul %125, %126, %cst_71 {dimension_numbers = #tpu.dot_dimension_numbers<[1], [0], [0], [1], [0, 0, 1, 1], [], []>} : vector<64x128xbf16>, vector<128x128xbf16>, vector<64x128xf32> -> vector<64x128xf32>
    %128 = arith.addf %123, %127 : vector<64x128xf32>
    %129 = vector.extract_strided_slice %33 {offsets = [0, 0, 0], sizes = [8, 8, 128], strides = [1, 1, 1]} : vector<9x9x128xbf16> to vector<8x8x128xbf16>
    %130 = vector.shape_cast %129 : vector<8x8x128xbf16> to vector<64x128xbf16>
    %131 = vector.extract_strided_slice %23 {offsets = [384, 0], sizes = [128, 128], strides = [1, 1]} : vector<1152x128xbf16> to vector<128x128xbf16>
    %cst_72 = arith.constant dense<0.000000e+00> : vector<64x128xf32>
    %132 = tpu.matmul %130, %131, %cst_72 {dimension_numbers = #tpu.dot_dimension_numbers<[1], [0], [0], [1], [0, 0, 1, 1], [], []>} : vector<64x128xbf16>, vector<128x128xbf16>, vector<64x128xf32> -> vector<64x128xf32>
    %133 = arith.addf %128, %132 : vector<64x128xf32>
    %134 = vector.extract_strided_slice %31 {offsets = [0, 1, 0], sizes = [8, 8, 128], strides = [1, 1, 1]} : vector<9x9x128xbf16> to vector<8x8x128xbf16>
    %135 = vector.shape_cast %134 : vector<8x8x128xbf16> to vector<64x128xbf16>
    %136 = vector.extract_strided_slice %23 {offsets = [512, 0], sizes = [128, 128], strides = [1, 1]} : vector<1152x128xbf16> to vector<128x128xbf16>
    %cst_73 = arith.constant dense<0.000000e+00> : vector<64x128xf32>
    %137 = tpu.matmul %135, %136, %cst_73 {dimension_numbers = #tpu.dot_dimension_numbers<[1], [0], [0], [1], [0, 0, 1, 1], [], []>} : vector<64x128xbf16>, vector<128x128xbf16>, vector<64x128xf32> -> vector<64x128xf32>
    %138 = arith.addf %133, %137 : vector<64x128xf32>
    %139 = vector.extract_strided_slice %33 {offsets = [0, 1, 0], sizes = [8, 8, 128], strides = [1, 1, 1]} : vector<9x9x128xbf16> to vector<8x8x128xbf16>
    %140 = vector.shape_cast %139 : vector<8x8x128xbf16> to vector<64x128xbf16>
    %141 = vector.extract_strided_slice %23 {offsets = [640, 0], sizes = [128, 128], strides = [1, 1]} : vector<1152x128xbf16> to vector<128x128xbf16>
    %cst_74 = arith.constant dense<0.000000e+00> : vector<64x128xf32>
    %142 = tpu.matmul %140, %141, %cst_74 {dimension_numbers = #tpu.dot_dimension_numbers<[1], [0], [0], [1], [0, 0, 1, 1], [], []>} : vector<64x128xbf16>, vector<128x128xbf16>, vector<64x128xf32> -> vector<64x128xf32>
    %143 = arith.addf %138, %142 : vector<64x128xf32>
    %144 = vector.extract_strided_slice %29 {offsets = [1, 0, 0], sizes = [8, 8, 128], strides = [1, 1, 1]} : vector<9x9x128xbf16> to vector<8x8x128xbf16>
    %145 = vector.shape_cast %144 : vector<8x8x128xbf16> to vector<64x128xbf16>
    %146 = vector.extract_strided_slice %23 {offsets = [768, 0], sizes = [128, 128], strides = [1, 1]} : vector<1152x128xbf16> to vector<128x128xbf16>
    %cst_75 = arith.constant dense<0.000000e+00> : vector<64x128xf32>
    %147 = tpu.matmul %145, %146, %cst_75 {dimension_numbers = #tpu.dot_dimension_numbers<[1], [0], [0], [1], [0, 0, 1, 1], [], []>} : vector<64x128xbf16>, vector<128x128xbf16>, vector<64x128xf32> -> vector<64x128xf32>
    %148 = arith.addf %143, %147 : vector<64x128xf32>
    %149 = vector.extract_strided_slice %27 {offsets = [1, 1, 0], sizes = [8, 8, 128], strides = [1, 1, 1]} : vector<9x9x128xbf16> to vector<8x8x128xbf16>
    %150 = vector.shape_cast %149 : vector<8x8x128xbf16> to vector<64x128xbf16>
    %151 = vector.extract_strided_slice %23 {offsets = [896, 0], sizes = [128, 128], strides = [1, 1]} : vector<1152x128xbf16> to vector<128x128xbf16>
    %cst_76 = arith.constant dense<0.000000e+00> : vector<64x128xf32>
    %152 = tpu.matmul %150, %151, %cst_76 {dimension_numbers = #tpu.dot_dimension_numbers<[1], [0], [0], [1], [0, 0, 1, 1], [], []>} : vector<64x128xbf16>, vector<128x128xbf16>, vector<64x128xf32> -> vector<64x128xf32>
    %153 = arith.addf %148, %152 : vector<64x128xf32>
    %154 = vector.extract_strided_slice %29 {offsets = [1, 1, 0], sizes = [8, 8, 128], strides = [1, 1, 1]} : vector<9x9x128xbf16> to vector<8x8x128xbf16>
    %155 = vector.shape_cast %154 : vector<8x8x128xbf16> to vector<64x128xbf16>
    %156 = vector.extract_strided_slice %23 {offsets = [1024, 0], sizes = [128, 128], strides = [1, 1]} : vector<1152x128xbf16> to vector<128x128xbf16>
    %cst_77 = arith.constant dense<0.000000e+00> : vector<64x128xf32>
    %157 = tpu.matmul %155, %156, %cst_77 {dimension_numbers = #tpu.dot_dimension_numbers<[1], [0], [0], [1], [0, 0, 1, 1], [], []>} : vector<64x128xbf16>, vector<128x128xbf16>, vector<64x128xf32> -> vector<64x128xf32>
    %158 = arith.addf %153, %157 : vector<64x128xf32>
    %159 = vector.extract_strided_slice %25 {offsets = [1, 2, 0], sizes = [8, 8, 128], strides = [1, 1, 1]} : vector<10x10x128xbf16> to vector<8x8x128xbf16>
    %160 = vector.shape_cast %159 : vector<8x8x128xbf16> to vector<64x128xbf16>
    %c4 = arith.constant 4 : index
    %c0_78 = arith.constant 0 : index
    %c0_79 = arith.constant 0 : index
    %161 = vector.load %arg7[%c4, %c0_78, %c0_79] : memref<16x128x128xbf16, #tpu.memory_space<vmem>>, vector<1x128x128xbf16>
    %162 = vector.shape_cast %161 : vector<1x128x128xbf16> to vector<128x128xbf16>
    %cst_80 = arith.constant dense<0.000000e+00> : vector<64x128xf32>
    %163 = tpu.matmul %160, %162, %cst_80 {dimension_numbers = #tpu.dot_dimension_numbers<[1], [0], [0], [1], [0, 0, 1, 1], [], []>} : vector<64x128xbf16>, vector<128x128xbf16>, vector<64x128xf32> -> vector<64x128xf32>
    %164 = arith.addf %158, %163 : vector<64x128xf32>
    %165 = vector.extract_strided_slice %25 {offsets = [1, 1, 0], sizes = [8, 8, 128], strides = [1, 1, 1]} : vector<10x10x128xbf16> to vector<8x8x128xbf16>
    %166 = vector.shape_cast %165 : vector<8x8x128xbf16> to vector<64x128xbf16>
    %c5 = arith.constant 5 : index
    %c0_81 = arith.constant 0 : index
    %c0_82 = arith.constant 0 : index
    %167 = vector.load %arg7[%c5, %c0_81, %c0_82] : memref<16x128x128xbf16, #tpu.memory_space<vmem>>, vector<1x128x128xbf16>
    %168 = vector.shape_cast %167 : vector<1x128x128xbf16> to vector<128x128xbf16>
    %cst_83 = arith.constant dense<0.000000e+00> : vector<64x128xf32>
    %169 = tpu.matmul %166, %168, %cst_83 {dimension_numbers = #tpu.dot_dimension_numbers<[1], [0], [0], [1], [0, 0, 1, 1], [], []>} : vector<64x128xbf16>, vector<128x128xbf16>, vector<64x128xf32> -> vector<64x128xf32>
    %170 = arith.addf %164, %169 : vector<64x128xf32>
    %171 = vector.extract_strided_slice %25 {offsets = [0, 2, 0], sizes = [8, 8, 128], strides = [1, 1, 1]} : vector<10x10x128xbf16> to vector<8x8x128xbf16>
    %172 = vector.shape_cast %171 : vector<8x8x128xbf16> to vector<64x128xbf16>
    %c6 = arith.constant 6 : index
    %c0_84 = arith.constant 0 : index
    %c0_85 = arith.constant 0 : index
    %173 = vector.load %arg7[%c6, %c0_84, %c0_85] : memref<16x128x128xbf16, #tpu.memory_space<vmem>>, vector<1x128x128xbf16>
    %174 = vector.shape_cast %173 : vector<1x128x128xbf16> to vector<128x128xbf16>
    %cst_86 = arith.constant dense<0.000000e+00> : vector<64x128xf32>
    %175 = tpu.matmul %172, %174, %cst_86 {dimension_numbers = #tpu.dot_dimension_numbers<[1], [0], [0], [1], [0, 0, 1, 1], [], []>} : vector<64x128xbf16>, vector<128x128xbf16>, vector<64x128xf32> -> vector<64x128xf32>
    %176 = arith.addf %170, %175 : vector<64x128xf32>
    %177 = vector.extract_strided_slice %25 {offsets = [0, 1, 0], sizes = [8, 8, 128], strides = [1, 1, 1]} : vector<10x10x128xbf16> to vector<8x8x128xbf16>
    %178 = vector.shape_cast %177 : vector<8x8x128xbf16> to vector<64x128xbf16>
    %c7 = arith.constant 7 : index
    %c0_87 = arith.constant 0 : index
    %c0_88 = arith.constant 0 : index
    %179 = vector.load %arg7[%c7, %c0_87, %c0_88] : memref<16x128x128xbf16, #tpu.memory_space<vmem>>, vector<1x128x128xbf16>
    %180 = vector.shape_cast %179 : vector<1x128x128xbf16> to vector<128x128xbf16>
    %cst_89 = arith.constant dense<0.000000e+00> : vector<64x128xf32>
    %181 = tpu.matmul %178, %180, %cst_89 {dimension_numbers = #tpu.dot_dimension_numbers<[1], [0], [0], [1], [0, 0, 1, 1], [], []>} : vector<64x128xbf16>, vector<128x128xbf16>, vector<64x128xf32> -> vector<64x128xf32>
    %182 = arith.addf %176, %181 : vector<64x128xf32>
    %183 = vector.broadcast %18 : vector<1x128xf32> to vector<64x128xf32>
    %184 = arith.addf %182, %183 : vector<64x128xf32>
    %cst_90 = arith.constant 0.000000e+00 : f32
    %185 = vector.broadcast %cst_90 : f32 to vector<64x128xf32>
    %186 = arith.maximumf %184, %185 : vector<64x128xf32>
    %187 = vector.shape_cast %186 : vector<64x128xf32> to vector<8x8x128xf32>
    %188 = arith.truncf %187 : vector<8x8x128xf32> to vector<8x8x128xbf16>
    %c0_91 = arith.constant 0 : index
    %c0_92 = arith.constant 0 : index
    %c1_93 = arith.constant 1 : index
    %c0_94 = arith.constant 0 : index
    %c0_95 = arith.constant 0 : index
    %c0_96 = arith.constant 0 : index
    %189 = vector.load %arg9[%c0_91, %c0_92, %c1_93, %c0_94, %c0_95, %c0_96] : memref<1x1x4x8x8x128xbf16, #tpu.memory_space<vmem>>, vector<1x1x1x8x8x128xbf16>
    %190 = vector.shape_cast %189 : vector<1x1x1x8x8x128xbf16> to vector<8x8x128xbf16>
    %191 = vector.shape_cast %188 : vector<8x8x128xbf16> to vector<1x1x1x8x8x128xbf16>
    tpu.vector_store %arg9[%c0_91, %c0_92, %c1_93, %c0_94, %c0_95, %c0_96], %191 {strides = array<i32>} : memref<1x1x4x8x8x128xbf16, #tpu.memory_space<vmem>>, vector<1x1x1x8x8x128xbf16>,
    %cst_97 = arith.constant 0.000000e+00 : f32
    %192 = vector.broadcast %cst_97 : f32 to vector<64x128xf32>
    %193 = vector.extract_strided_slice %31 {offsets = [0, 0, 0], sizes = [8, 8, 128], strides = [1, 1, 1]} : vector<9x9x128xbf16> to vector<8x8x128xbf16>
    %194 = vector.shape_cast %193 : vector<8x8x128xbf16> to vector<64x128xbf16>
    %195 = vector.extract_strided_slice %23 {offsets = [0, 0], sizes = [128, 128], strides = [1, 1]} : vector<1152x128xbf16> to vector<128x128xbf16>
    %cst_98 = arith.constant dense<0.000000e+00> : vector<64x128xf32>
    %196 = tpu.matmul %194, %195, %cst_98 {dimension_numbers = #tpu.dot_dimension_numbers<[1], [0], [0], [1], [0, 0, 1, 1], [], []>} : vector<64x128xbf16>, vector<128x128xbf16>, vector<64x128xf32> -> vector<64x128xf32>
    %197 = arith.addf %192, %196 : vector<64x128xf32>
    %198 = vector.extract_strided_slice %33 {offsets = [0, 0, 0], sizes = [8, 8, 128], strides = [1, 1, 1]} : vector<9x9x128xbf16> to vector<8x8x128xbf16>
    %199 = vector.shape_cast %198 : vector<8x8x128xbf16> to vector<64x128xbf16>
    %200 = vector.extract_strided_slice %23 {offsets = [128, 0], sizes = [128, 128], strides = [1, 1]} : vector<1152x128xbf16> to vector<128x128xbf16>
    %cst_99 = arith.constant dense<0.000000e+00> : vector<64x128xf32>
    %201 = tpu.matmul %199, %200, %cst_99 {dimension_numbers = #tpu.dot_dimension_numbers<[1], [0], [0], [1], [0, 0, 1, 1], [], []>} : vector<64x128xbf16>, vector<128x128xbf16>, vector<64x128xf32> -> vector<64x128xf32>
    %202 = arith.addf %197, %201 : vector<64x128xf32>
    %203 = vector.extract_strided_slice %31 {offsets = [0, 1, 0], sizes = [8, 8, 128], strides = [1, 1, 1]} : vector<9x9x128xbf16> to vector<8x8x128xbf16>
    %204 = vector.shape_cast %203 : vector<8x8x128xbf16> to vector<64x128xbf16>
    %205 = vector.extract_strided_slice %23 {offsets = [256, 0], sizes = [128, 128], strides = [1, 1]} : vector<1152x128xbf16> to vector<128x128xbf16>
    %cst_100 = arith.constant dense<0.000000e+00> : vector<64x128xf32>
    %206 = tpu.matmul %204, %205, %cst_100 {dimension_numbers = #tpu.dot_dimension_numbers<[1], [0], [0], [1], [0, 0, 1, 1], [], []>} : vector<64x128xbf16>, vector<128x128xbf16>, vector<64x128xf32> -> vector<64x128xf32>
    %207 = arith.addf %202, %206 : vector<64x128xf32>
    %208 = vector.extract_strided_slice %27 {offsets = [1, 0, 0], sizes = [8, 8, 128], strides = [1, 1, 1]} : vector<9x9x128xbf16> to vector<8x8x128xbf16>
    %209 = vector.shape_cast %208 : vector<8x8x128xbf16> to vector<64x128xbf16>
    %210 = vector.extract_strided_slice %23 {offsets = [384, 0], sizes = [128, 128], strides = [1, 1]} : vector<1152x128xbf16> to vector<128x128xbf16>
    %cst_101 = arith.constant dense<0.000000e+00> : vector<64x128xf32>
    %211 = tpu.matmul %209, %210, %cst_101 {dimension_numbers = #tpu.dot_dimension_numbers<[1], [0], [0], [1], [0, 0, 1, 1], [], []>} : vector<64x128xbf16>, vector<128x128xbf16>, vector<64x128xf32> -> vector<64x128xf32>
    %212 = arith.addf %207, %211 : vector<64x128xf32>
    %213 = vector.extract_strided_slice %29 {offsets = [1, 0, 0], sizes = [8, 8, 128], strides = [1, 1, 1]} : vector<9x9x128xbf16> to vector<8x8x128xbf16>
    %214 = vector.shape_cast %213 : vector<8x8x128xbf16> to vector<64x128xbf16>
    %215 = vector.extract_strided_slice %23 {offsets = [512, 0], sizes = [128, 128], strides = [1, 1]} : vector<1152x128xbf16> to vector<128x128xbf16>
    %cst_102 = arith.constant dense<0.000000e+00> : vector<64x128xf32>
    %216 = tpu.matmul %214, %215, %cst_102 {dimension_numbers = #tpu.dot_dimension_numbers<[1], [0], [0], [1], [0, 0, 1, 1], [], []>} : vector<64x128xbf16>, vector<128x128xbf16>, vector<64x128xf32> -> vector<64x128xf32>
    %217 = arith.addf %212, %216 : vector<64x128xf32>
    %218 = vector.extract_strided_slice %27 {offsets = [1, 1, 0], sizes = [8, 8, 128], strides = [1, 1, 1]} : vector<9x9x128xbf16> to vector<8x8x128xbf16>
    %219 = vector.shape_cast %218 : vector<8x8x128xbf16> to vector<64x128xbf16>
    %220 = vector.extract_strided_slice %23 {offsets = [640, 0], sizes = [128, 128], strides = [1, 1]} : vector<1152x128xbf16> to vector<128x128xbf16>
    %cst_103 = arith.constant dense<0.000000e+00> : vector<64x128xf32>
    %221 = tpu.matmul %219, %220, %cst_103 {dimension_numbers = #tpu.dot_dimension_numbers<[1], [0], [0], [1], [0, 0, 1, 1], [], []>} : vector<64x128xbf16>, vector<128x128xbf16>, vector<64x128xf32> -> vector<64x128xf32>
    %222 = arith.addf %217, %221 : vector<64x128xf32>
    %223 = vector.extract_strided_slice %31 {offsets = [1, 0, 0], sizes = [8, 8, 128], strides = [1, 1, 1]} : vector<9x9x128xbf16> to vector<8x8x128xbf16>
    %224 = vector.shape_cast %223 : vector<8x8x128xbf16> to vector<64x128xbf16>
    %225 = vector.extract_strided_slice %23 {offsets = [768, 0], sizes = [128, 128], strides = [1, 1]} : vector<1152x128xbf16> to vector<128x128xbf16>
    %cst_104 = arith.constant dense<0.000000e+00> : vector<64x128xf32>
    %226 = tpu.matmul %224, %225, %cst_104 {dimension_numbers = #tpu.dot_dimension_numbers<[1], [0], [0], [1], [0, 0, 1, 1], [], []>} : vector<64x128xbf16>, vector<128x128xbf16>, vector<64x128xf32> -> vector<64x128xf32>
    %227 = arith.addf %222, %226 : vector<64x128xf32>
    %228 = vector.extract_strided_slice %33 {offsets = [1, 0, 0], sizes = [8, 8, 128], strides = [1, 1, 1]} : vector<9x9x128xbf16> to vector<8x8x128xbf16>
    %229 = vector.shape_cast %228 : vector<8x8x128xbf16> to vector<64x128xbf16>
    %230 = vector.extract_strided_slice %23 {offsets = [896, 0], sizes = [128, 128], strides = [1, 1]} : vector<1152x128xbf16> to vector<128x128xbf16>
    %cst_105 = arith.constant dense<0.000000e+00> : vector<64x128xf32>
    %231 = tpu.matmul %229, %230, %cst_105 {dimension_numbers = #tpu.dot_dimension_numbers<[1], [0], [0], [1], [0, 0, 1, 1], [], []>} : vector<64x128xbf16>, vector<128x128xbf16>, vector<64x128xf32> -> vector<64x128xf32>
    %232 = arith.addf %227, %231 : vector<64x128xf32>
    %233 = vector.extract_strided_slice %31 {offsets = [1, 1, 0], sizes = [8, 8, 128], strides = [1, 1, 1]} : vector<9x9x128xbf16> to vector<8x8x128xbf16>
    %234 = vector.shape_cast %233 : vector<8x8x128xbf16> to vector<64x128xbf16>
    %235 = vector.extract_strided_slice %23 {offsets = [1024, 0], sizes = [128, 128], strides = [1, 1]} : vector<1152x128xbf16> to vector<128x128xbf16>
    %cst_106 = arith.constant dense<0.000000e+00> : vector<64x128xf32>
    %236 = tpu.matmul %234, %235, %cst_106 {dimension_numbers = #tpu.dot_dimension_numbers<[1], [0], [0], [1], [0, 0, 1, 1], [], []>} : vector<64x128xbf16>, vector<128x128xbf16>, vector<64x128xf32> -> vector<64x128xf32>
    %237 = arith.addf %232, %236 : vector<64x128xf32>
    %238 = vector.extract_strided_slice %25 {offsets = [2, 1, 0], sizes = [8, 8, 128], strides = [1, 1, 1]} : vector<10x10x128xbf16> to vector<8x8x128xbf16>
    %239 = vector.shape_cast %238 : vector<8x8x128xbf16> to vector<64x128xbf16>
    %c8 = arith.constant 8 : index
    %c0_107 = arith.constant 0 : index
    %c0_108 = arith.constant 0 : index
    %240 = vector.load %arg7[%c8, %c0_107, %c0_108] : memref<16x128x128xbf16, #tpu.memory_space<vmem>>, vector<1x128x128xbf16>
    %241 = vector.shape_cast %240 : vector<1x128x128xbf16> to vector<128x128xbf16>
    %cst_109 = arith.constant dense<0.000000e+00> : vector<64x128xf32>
    %242 = tpu.matmul %239, %241, %cst_109 {dimension_numbers = #tpu.dot_dimension_numbers<[1], [0], [0], [1], [0, 0, 1, 1], [], []>} : vector<64x128xbf16>, vector<128x128xbf16>, vector<64x128xf32> -> vector<64x128xf32>
    %243 = arith.addf %237, %242 : vector<64x128xf32>
    %244 = vector.extract_strided_slice %25 {offsets = [2, 0, 0], sizes = [8, 8, 128], strides = [1, 1, 1]} : vector<10x10x128xbf16> to vector<8x8x128xbf16>
    %245 = vector.shape_cast %244 : vector<8x8x128xbf16> to vector<64x128xbf16>
    %c9 = arith.constant 9 : index
    %c0_110 = arith.constant 0 : index
    %c0_111 = arith.constant 0 : index
    %246 = vector.load %arg7[%c9, %c0_110, %c0_111] : memref<16x128x128xbf16, #tpu.memory_space<vmem>>, vector<1x128x128xbf16>
    %247 = vector.shape_cast %246 : vector<1x128x128xbf16> to vector<128x128xbf16>
    %cst_112 = arith.constant dense<0.000000e+00> : vector<64x128xf32>
    %248 = tpu.matmul %245, %247, %cst_112 {dimension_numbers = #tpu.dot_dimension_numbers<[1], [0], [0], [1], [0, 0, 1, 1], [], []>} : vector<64x128xbf16>, vector<128x128xbf16>, vector<64x128xf32> -> vector<64x128xf32>
    %249 = arith.addf %243, %248 : vector<64x128xf32>
    %250 = vector.extract_strided_slice %25 {offsets = [1, 1, 0], sizes = [8, 8, 128], strides = [1, 1, 1]} : vector<10x10x128xbf16> to vector<8x8x128xbf16>
    %251 = vector.shape_cast %250 : vector<8x8x128xbf16> to vector<64x128xbf16>
    %c10 = arith.constant 10 : index
    %c0_113 = arith.constant 0 : index
    %c0_114 = arith.constant 0 : index
    %252 = vector.load %arg7[%c10, %c0_113, %c0_114] : memref<16x128x128xbf16, #tpu.memory_space<vmem>>, vector<1x128x128xbf16>
    %253 = vector.shape_cast %252 : vector<1x128x128xbf16> to vector<128x128xbf16>
    %cst_115 = arith.constant dense<0.000000e+00> : vector<64x128xf32>
    %254 = tpu.matmul %251, %253, %cst_115 {dimension_numbers = #tpu.dot_dimension_numbers<[1], [0], [0], [1], [0, 0, 1, 1], [], []>} : vector<64x128xbf16>, vector<128x128xbf16>, vector<64x128xf32> -> vector<64x128xf32>
    %255 = arith.addf %249, %254 : vector<64x128xf32>
    %256 = vector.extract_strided_slice %25 {offsets = [1, 0, 0], sizes = [8, 8, 128], strides = [1, 1, 1]} : vector<10x10x128xbf16> to vector<8x8x128xbf16>
    %257 = vector.shape_cast %256 : vector<8x8x128xbf16> to vector<64x128xbf16>
    %c11 = arith.constant 11 : index
    %c0_116 = arith.constant 0 : index
    %c0_117 = arith.constant 0 : index
    %258 = vector.load %arg7[%c11, %c0_116, %c0_117] : memref<16x128x128xbf16, #tpu.memory_space<vmem>>, vector<1x128x128xbf16>
    %259 = vector.shape_cast %258 : vector<1x128x128xbf16> to vector<128x128xbf16>
    %cst_118 = arith.constant dense<0.000000e+00> : vector<64x128xf32>
    %260 = tpu.matmul %257, %259, %cst_118 {dimension_numbers = #tpu.dot_dimension_numbers<[1], [0], [0], [1], [0, 0, 1, 1], [], []>} : vector<64x128xbf16>, vector<128x128xbf16>, vector<64x128xf32> -> vector<64x128xf32>
    %261 = arith.addf %255, %260 : vector<64x128xf32>
    %262 = vector.broadcast %18 : vector<1x128xf32> to vector<64x128xf32>
    %263 = arith.addf %261, %262 : vector<64x128xf32>
    %cst_119 = arith.constant 0.000000e+00 : f32
    %264 = vector.broadcast %cst_119 : f32 to vector<64x128xf32>
    %265 = arith.maximumf %263, %264 : vector<64x128xf32>
    %266 = vector.shape_cast %265 : vector<64x128xf32> to vector<8x8x128xf32>
    %267 = arith.truncf %266 : vector<8x8x128xf32> to vector<8x8x128xbf16>
    %c0_120 = arith.constant 0 : index
    %c0_121 = arith.constant 0 : index
    %c2_122 = arith.constant 2 : index
    %c0_123 = arith.constant 0 : index
    %c0_124 = arith.constant 0 : index
    %c0_125 = arith.constant 0 : index
    %268 = vector.load %arg9[%c0_120, %c0_121, %c2_122, %c0_123, %c0_124, %c0_125] : memref<1x1x4x8x8x128xbf16, #tpu.memory_space<vmem>>, vector<1x1x1x8x8x128xbf16>
    %269 = vector.shape_cast %268 : vector<1x1x1x8x8x128xbf16> to vector<8x8x128xbf16>
    %270 = vector.shape_cast %267 : vector<8x8x128xbf16> to vector<1x1x1x8x8x128xbf16>
    tpu.vector_store %arg9[%c0_120, %c0_121, %c2_122, %c0_123, %c0_124, %c0_125], %270 {strides = array<i32>} : memref<1x1x4x8x8x128xbf16, #tpu.memory_space<vmem>>, vector<1x1x1x8x8x128xbf16>,
    %cst_126 = arith.constant 0.000000e+00 : f32
    %271 = vector.broadcast %cst_126 : f32 to vector<64x128xf32>
    %272 = vector.extract_strided_slice %33 {offsets = [0, 0, 0], sizes = [8, 8, 128], strides = [1, 1, 1]} : vector<9x9x128xbf16> to vector<8x8x128xbf16>
    %273 = vector.shape_cast %272 : vector<8x8x128xbf16> to vector<64x128xbf16>
    %274 = vector.extract_strided_slice %23 {offsets = [0, 0], sizes = [128, 128], strides = [1, 1]} : vector<1152x128xbf16> to vector<128x128xbf16>
    %cst_127 = arith.constant dense<0.000000e+00> : vector<64x128xf32>
    %275 = tpu.matmul %273, %274, %cst_127 {dimension_numbers = #tpu.dot_dimension_numbers<[1], [0], [0], [1], [0, 0, 1, 1], [], []>} : vector<64x128xbf16>, vector<128x128xbf16>, vector<64x128xf32> -> vector<64x128xf32>
    %276 = arith.addf %271, %275 : vector<64x128xf32>
    %277 = vector.extract_strided_slice %31 {offsets = [0, 1, 0], sizes = [8, 8, 128], strides = [1, 1, 1]} : vector<9x9x128xbf16> to vector<8x8x128xbf16>
    %278 = vector.shape_cast %277 : vector<8x8x128xbf16> to vector<64x128xbf16>
    %279 = vector.extract_strided_slice %23 {offsets = [128, 0], sizes = [128, 128], strides = [1, 1]} : vector<1152x128xbf16> to vector<128x128xbf16>
    %cst_128 = arith.constant dense<0.000000e+00> : vector<64x128xf32>
    %280 = tpu.matmul %278, %279, %cst_128 {dimension_numbers = #tpu.dot_dimension_numbers<[1], [0], [0], [1], [0, 0, 1, 1], [], []>} : vector<64x128xbf16>, vector<128x128xbf16>, vector<64x128xf32> -> vector<64x128xf32>
    %281 = arith.addf %276, %280 : vector<64x128xf32>
    %282 = vector.extract_strided_slice %33 {offsets = [0, 1, 0], sizes = [8, 8, 128], strides = [1, 1, 1]} : vector<9x9x128xbf16> to vector<8x8x128xbf16>
    %283 = vector.shape_cast %282 : vector<8x8x128xbf16> to vector<64x128xbf16>
    %284 = vector.extract_strided_slice %23 {offsets = [256, 0], sizes = [128, 128], strides = [1, 1]} : vector<1152x128xbf16> to vector<128x128xbf16>
    %cst_129 = arith.constant dense<0.000000e+00> : vector<64x128xf32>
    %285 = tpu.matmul %283, %284, %cst_129 {dimension_numbers = #tpu.dot_dimension_numbers<[1], [0], [0], [1], [0, 0, 1, 1], [], []>} : vector<64x128xbf16>, vector<128x128xbf16>, vector<64x128xf32> -> vector<64x128xf32>
    %286 = arith.addf %281, %285 : vector<64x128xf32>
    %287 = vector.extract_strided_slice %29 {offsets = [1, 0, 0], sizes = [8, 8, 128], strides = [1, 1, 1]} : vector<9x9x128xbf16> to vector<8x8x128xbf16>
    %288 = vector.shape_cast %287 : vector<8x8x128xbf16> to vector<64x128xbf16>
    %289 = vector.extract_strided_slice %23 {offsets = [384, 0], sizes = [128, 128], strides = [1, 1]} : vector<1152x128xbf16> to vector<128x128xbf16>
    %cst_130 = arith.constant dense<0.000000e+00> : vector<64x128xf32>
    %290 = tpu.matmul %288, %289, %cst_130 {dimension_numbers = #tpu.dot_dimension_numbers<[1], [0], [0], [1], [0, 0, 1, 1], [], []>} : vector<64x128xbf16>, vector<128x128xbf16>, vector<64x128xf32> -> vector<64x128xf32>
    %291 = arith.addf %286, %290 : vector<64x128xf32>
    %292 = vector.extract_strided_slice %27 {offsets = [1, 1, 0], sizes = [8, 8, 128], strides = [1, 1, 1]} : vector<9x9x128xbf16> to vector<8x8x128xbf16>
    %293 = vector.shape_cast %292 : vector<8x8x128xbf16> to vector<64x128xbf16>
    %294 = vector.extract_strided_slice %23 {offsets = [512, 0], sizes = [128, 128], strides = [1, 1]} : vector<1152x128xbf16> to vector<128x128xbf16>
    %cst_131 = arith.constant dense<0.000000e+00> : vector<64x128xf32>
    %295 = tpu.matmul %293, %294, %cst_131 {dimension_numbers = #tpu.dot_dimension_numbers<[1], [0], [0], [1], [0, 0, 1, 1], [], []>} : vector<64x128xbf16>, vector<128x128xbf16>, vector<64x128xf32> -> vector<64x128xf32>
    %296 = arith.addf %291, %295 : vector<64x128xf32>
    %297 = vector.extract_strided_slice %29 {offsets = [1, 1, 0], sizes = [8, 8, 128], strides = [1, 1, 1]} : vector<9x9x128xbf16> to vector<8x8x128xbf16>
    %298 = vector.shape_cast %297 : vector<8x8x128xbf16> to vector<64x128xbf16>
    %299 = vector.extract_strided_slice %23 {offsets = [640, 0], sizes = [128, 128], strides = [1, 1]} : vector<1152x128xbf16> to vector<128x128xbf16>
    %cst_132 = arith.constant dense<0.000000e+00> : vector<64x128xf32>
    %300 = tpu.matmul %298, %299, %cst_132 {dimension_numbers = #tpu.dot_dimension_numbers<[1], [0], [0], [1], [0, 0, 1, 1], [], []>} : vector<64x128xbf16>, vector<128x128xbf16>, vector<64x128xf32> -> vector<64x128xf32>
    %301 = arith.addf %296, %300 : vector<64x128xf32>
    %302 = vector.extract_strided_slice %33 {offsets = [1, 0, 0], sizes = [8, 8, 128], strides = [1, 1, 1]} : vector<9x9x128xbf16> to vector<8x8x128xbf16>
    %303 = vector.shape_cast %302 : vector<8x8x128xbf16> to vector<64x128xbf16>
    %304 = vector.extract_strided_slice %23 {offsets = [768, 0], sizes = [128, 128], strides = [1, 1]} : vector<1152x128xbf16> to vector<128x128xbf16>
    %cst_133 = arith.constant dense<0.000000e+00> : vector<64x128xf32>
    %305 = tpu.matmul %303, %304, %cst_133 {dimension_numbers = #tpu.dot_dimension_numbers<[1], [0], [0], [1], [0, 0, 1, 1], [], []>} : vector<64x128xbf16>, vector<128x128xbf16>, vector<64x128xf32> -> vector<64x128xf32>
    %306 = arith.addf %301, %305 : vector<64x128xf32>
    %307 = vector.extract_strided_slice %31 {offsets = [1, 1, 0], sizes = [8, 8, 128], strides = [1, 1, 1]} : vector<9x9x128xbf16> to vector<8x8x128xbf16>
    %308 = vector.shape_cast %307 : vector<8x8x128xbf16> to vector<64x128xbf16>
    %309 = vector.extract_strided_slice %23 {offsets = [896, 0], sizes = [128, 128], strides = [1, 1]} : vector<1152x128xbf16> to vector<128x128xbf16>
    %cst_134 = arith.constant dense<0.000000e+00> : vector<64x128xf32>
    %310 = tpu.matmul %308, %309, %cst_134 {dimension_numbers = #tpu.dot_dimension_numbers<[1], [0], [0], [1], [0, 0, 1, 1], [], []>} : vector<64x128xbf16>, vector<128x128xbf16>, vector<64x128xf32> -> vector<64x128xf32>
    %311 = arith.addf %306, %310 : vector<64x128xf32>
    %312 = vector.extract_strided_slice %33 {offsets = [1, 1, 0], sizes = [8, 8, 128], strides = [1, 1, 1]} : vector<9x9x128xbf16> to vector<8x8x128xbf16>
    %313 = vector.shape_cast %312 : vector<8x8x128xbf16> to vector<64x128xbf16>
    %314 = vector.extract_strided_slice %23 {offsets = [1024, 0], sizes = [128, 128], strides = [1, 1]} : vector<1152x128xbf16> to vector<128x128xbf16>
    %cst_135 = arith.constant dense<0.000000e+00> : vector<64x128xf32>
    %315 = tpu.matmul %313, %314, %cst_135 {dimension_numbers = #tpu.dot_dimension_numbers<[1], [0], [0], [1], [0, 0, 1, 1], [], []>} : vector<64x128xbf16>, vector<128x128xbf16>, vector<64x128xf32> -> vector<64x128xf32>
    %316 = arith.addf %311, %315 : vector<64x128xf32>
    %317 = vector.extract_strided_slice %25 {offsets = [2, 2, 0], sizes = [8, 8, 128], strides = [1, 1, 1]} : vector<10x10x128xbf16> to vector<8x8x128xbf16>
    %318 = vector.shape_cast %317 : vector<8x8x128xbf16> to vector<64x128xbf16>
    %c12 = arith.constant 12 : index
    %c0_136 = arith.constant 0 : index
    %c0_137 = arith.constant 0 : index
    %319 = vector.load %arg7[%c12, %c0_136, %c0_137] : memref<16x128x128xbf16, #tpu.memory_space<vmem>>, vector<1x128x128xbf16>
    %320 = vector.shape_cast %319 : vector<1x128x128xbf16> to vector<128x128xbf16>
    %cst_138 = arith.constant dense<0.000000e+00> : vector<64x128xf32>
    %321 = tpu.matmul %318, %320, %cst_138 {dimension_numbers = #tpu.dot_dimension_numbers<[1], [0], [0], [1], [0, 0, 1, 1], [], []>} : vector<64x128xbf16>, vector<128x128xbf16>, vector<64x128xf32> -> vector<64x128xf32>
    %322 = arith.addf %316, %321 : vector<64x128xf32>
    %323 = vector.extract_strided_slice %25 {offsets = [2, 1, 0], sizes = [8, 8, 128], strides = [1, 1, 1]} : vector<10x10x128xbf16> to vector<8x8x128xbf16>
    %324 = vector.shape_cast %323 : vector<8x8x128xbf16> to vector<64x128xbf16>
    %c13 = arith.constant 13 : index
    %c0_139 = arith.constant 0 : index
    %c0_140 = arith.constant 0 : index
    %325 = vector.load %arg7[%c13, %c0_139, %c0_140] : memref<16x128x128xbf16, #tpu.memory_space<vmem>>, vector<1x128x128xbf16>
    %326 = vector.shape_cast %325 : vector<1x128x128xbf16> to vector<128x128xbf16>
    %cst_141 = arith.constant dense<0.000000e+00> : vector<64x128xf32>
    %327 = tpu.matmul %324, %326, %cst_141 {dimension_numbers = #tpu.dot_dimension_numbers<[1], [0], [0], [1], [0, 0, 1, 1], [], []>} : vector<64x128xbf16>, vector<128x128xbf16>, vector<64x128xf32> -> vector<64x128xf32>
    %328 = arith.addf %322, %327 : vector<64x128xf32>
    %329 = vector.extract_strided_slice %25 {offsets = [1, 2, 0], sizes = [8, 8, 128], strides = [1, 1, 1]} : vector<10x10x128xbf16> to vector<8x8x128xbf16>
    %330 = vector.shape_cast %329 : vector<8x8x128xbf16> to vector<64x128xbf16>
    %c14 = arith.constant 14 : index
    %c0_142 = arith.constant 0 : index
    %c0_143 = arith.constant 0 : index
    %331 = vector.load %arg7[%c14, %c0_142, %c0_143] : memref<16x128x128xbf16, #tpu.memory_space<vmem>>, vector<1x128x128xbf16>
    %332 = vector.shape_cast %331 : vector<1x128x128xbf16> to vector<128x128xbf16>
    %cst_144 = arith.constant dense<0.000000e+00> : vector<64x128xf32>
    %333 = tpu.matmul %330, %332, %cst_144 {dimension_numbers = #tpu.dot_dimension_numbers<[1], [0], [0], [1], [0, 0, 1, 1], [], []>} : vector<64x128xbf16>, vector<128x128xbf16>, vector<64x128xf32> -> vector<64x128xf32>
    %334 = arith.addf %328, %333 : vector<64x128xf32>
    %335 = vector.extract_strided_slice %25 {offsets = [1, 1, 0], sizes = [8, 8, 128], strides = [1, 1, 1]} : vector<10x10x128xbf16> to vector<8x8x128xbf16>
    %336 = vector.shape_cast %335 : vector<8x8x128xbf16> to vector<64x128xbf16>
    %c15 = arith.constant 15 : index
    %c0_145 = arith.constant 0 : index
    %c0_146 = arith.constant 0 : index
    %337 = vector.load %arg7[%c15, %c0_145, %c0_146] : memref<16x128x128xbf16, #tpu.memory_space<vmem>>, vector<1x128x128xbf16>
    %338 = vector.shape_cast %337 : vector<1x128x128xbf16> to vector<128x128xbf16>
    %cst_147 = arith.constant dense<0.000000e+00> : vector<64x128xf32>
    %339 = tpu.matmul %336, %338, %cst_147 {dimension_numbers = #tpu.dot_dimension_numbers<[1], [0], [0], [1], [0, 0, 1, 1], [], []>} : vector<64x128xbf16>, vector<128x128xbf16>, vector<64x128xf32> -> vector<64x128xf32>
    %340 = arith.addf %334, %339 : vector<64x128xf32>
    %341 = vector.broadcast %18 : vector<1x128xf32> to vector<64x128xf32>
    %342 = arith.addf %340, %341 : vector<64x128xf32>
    %cst_148 = arith.constant 0.000000e+00 : f32
    %343 = vector.broadcast %cst_148 : f32 to vector<64x128xf32>
    %344 = arith.maximumf %342, %343 : vector<64x128xf32>
    %345 = vector.shape_cast %344 : vector<64x128xf32> to vector<8x8x128xf32>
    %346 = arith.truncf %345 : vector<8x8x128xf32> to vector<8x8x128xbf16>
    %c0_149 = arith.constant 0 : index
    %c0_150 = arith.constant 0 : index
    %c3_151 = arith.constant 3 : index
    %c0_152 = arith.constant 0 : index
    %c0_153 = arith.constant 0 : index
    %c0_154 = arith.constant 0 : index
    %347 = vector.load %arg9[%c0_149, %c0_150, %c3_151, %c0_152, %c0_153, %c0_154] : memref<1x1x4x8x8x128xbf16, #tpu.memory_space<vmem>>, vector<1x1x1x8x8x128xbf16>
    %348 = vector.shape_cast %347 : vector<1x1x1x8x8x128xbf16> to vector<8x8x128xbf16>
    %349 = vector.shape_cast %346 : vector<8x8x128xbf16> to vector<1x1x1x8x8x128xbf16>
    tpu.vector_store %arg9[%c0_149, %c0_150, %c3_151, %c0_152, %c0_153, %c0_154], %349 {strides = array<i32>} : memref<1x1x4x8x8x128xbf16, #tpu.memory_space<vmem>>, vector<1x1x1x8x8x128xbf16>,
    return
  }
  func.func @transform_0(%arg0: i32, %arg1: i32) -> (i32, i32, i32) {
    %c0_i32 = arith.constant 0 : i32
    %c0_i32_0 = arith.constant 0 : i32
    %c0_i32_1 = arith.constant 0 : i32
    return %arg0, %c0_i32, %c0_i32_0 : i32, i32, i32
  }
  func.func @transform_1(%arg0: i32, %arg1: i32) -> (i32, i32, i32, i32, i32) {
    %c0_i32 = arith.constant 0 : i32
    %c0_i32_0 = arith.constant 0 : i32
    %c0_i32_1 = arith.constant 0 : i32
    %c0_i32_2 = arith.constant 0 : i32
    return %arg0, %arg1, %c0_i32, %c0_i32_0, %c0_i32_1 : i32, i32, i32, i32, i32
  }
  func.func @transform_2(%arg0: i32, %arg1: i32) -> (i32, i32, i32, i32, i32, i32) {
    %c0_i32 = arith.constant 0 : i32
    %c0_i32_0 = arith.constant 0 : i32
    %c0_i32_1 = arith.constant 0 : i32
    %c0_i32_2 = arith.constant 0 : i32
    %c0_i32_3 = arith.constant 0 : i32
    return %arg0, %arg1, %c0_i32, %c0_i32_0, %c0_i32_1, %c0_i32_2 : i32, i32, i32, i32, i32, i32
  }
  func.func @transform_3(%arg0: i32, %arg1: i32) -> (i32, i32) {
    %c0_i32 = arith.constant 0 : i32
    %c0_i32_0 = arith.constant 0 : i32
    %c0_i32_1 = arith.constant 0 : i32
    return %c0_i32, %c0_i32_0 : i32, i32
  }
  func.func @transform_4(%arg0: i32, %arg1: i32) -> (i32, i32) {
    %c0_i32 = arith.constant 0 : i32
    %c0_i32_0 = arith.constant 0 : i32
    %c0_i32_1 = arith.constant 0 : i32
    return %c0_i32, %c0_i32_0 : i32, i32
  }
  func.func @transform_5(%arg0: i32, %arg1: i32) -> (i32, i32, i32) {
    %c0_i32 = arith.constant 0 : i32
    %c0_i32_0 = arith.constant 0 : i32
    %c0_i32_1 = arith.constant 0 : i32
    %c0_i32_2 = arith.constant 0 : i32
    return %c0_i32, %c0_i32_0, %c0_i32_1 : i32, i32, i32
  }
  func.func @transform_6(%arg0: i32, %arg1: i32) -> (i32, i32) {
    %c0_i32 = arith.constant 0 : i32
    %c0_i32_0 = arith.constant 0 : i32
    %c0_i32_1 = arith.constant 0 : i32
    return %c0_i32, %c0_i32_0 : i32, i32
  }
  func.func @transform_7(%arg0: i32, %arg1: i32) -> (i32, i32, i32, i32, i32, i32) {
    %c0_i32 = arith.constant 0 : i32
    %c0_i32_0 = arith.constant 0 : i32
    %c0_i32_1 = arith.constant 0 : i32
    %c0_i32_2 = arith.constant 0 : i32
    %c0_i32_3 = arith.constant 0 : i32
    return %arg0, %arg1, %c0_i32, %c0_i32_0, %c0_i32_1, %c0_i32_2 : i32, i32, i32, i32, i32, i32
  }
}

</mosaic_0001>

<llo_original>
// kernel: tpu_custom_call.1
$region0: #{tpu_custom_call.1}
  #allocation0 [shape = 'u32[]', space=smem, size = 0x4, offset = 0x4, fixed_abs, tag = 'smem constant byte address 0x4 - core index']
  #allocation1 [shape = 'u32[72,128]{1,0:T(1,128)}', space=vmem, size = 0x9000, scoped, tag = 'internal scratch']
  %s0 = inlined_call_operand.vmem [shape: f32[2,128,1], index: 0, kind: input, shape index: {}]
  %s1 = inlined_call_operand.vmem [shape: bf16[2,1,10,10,128], index: 1, kind: input, shape index: {}]
  %s2 = inlined_call_operand.vmem [shape: bf16[2,1,4,9,9,128], index: 2, kind: input, shape index: {}]
  %s3 = inlined_call_operand.vmem [shape: bf16[128,128], index: 3, kind: input, shape index: {}]
  %s4 = inlined_call_operand.hbm [shape: bf16[1152,128], index: 4, kind: input, shape index: {}]
  %s5 = inlined_call_operand.vmem [shape: bf16[16,128,128], index: 5, kind: input, shape index: {}]
  %s6 = inlined_call_operand.vmem [shape: f32[4,128], index: 6, kind: input, shape index: {}]
  %s7 = inlined_call_operand.hbm [shape: bf16[2,1,4,8,8,128], index: 7, kind: output, shape index: {}]
  %s8 = sld [smem:[#allocation0]]
  $region65: #{tpu_custom_call.1} parent=0
    _
  %s10 = ssub.s32 1, %s8
  %s11 = scalar_select 0, %s10, %s8
  $region1: #{tpu_custom_call.1} parent=0
    #allocation2 [shape = 'u8[294912]{0}', space=vmem, size = 0x48000, scoped, tag = 'input window, operand 4, single buffered']
    #allocation3 [shape = 's32[2]{0}', space=sflag, size = 0x8, scoped, tag = 'scoped memory for tpu_custom_call.1']
    #allocation4 [shape = 's32[2]{0}', space=sflag, size = 0x8, scoped, tag = 'scoped memory for tpu_custom_call.1']
    #allocation5 [shape = 'u8[131072]{0}', space=vmem, size = 0x20000, scoped, tag = 'output window, operand 0']
    %12 = vsyncpa [#allocation3], 0
    %13 = vsyncpa [#allocation4], 0
    %s14 = scalar_lea.sflag [#allocation4], 1
    %15 = vsyncpa %s14, 0
    loop: start=0, step=1, limit=4
    $region2: #{tpu_custom_call.1} parent=1 // loop_pre_header
      _
    $region3: #{tpu_custom_call.1} parent=1 // loop_header
      %s17 = sphi 0, %s21
      %p18 = scmp.ge.s32.totalorder %s17, 4
      %s24 = sphi 0, %s36
      %s25 = sphi 0, %s32
      %s26 = sphi 0, %s24
      %s27 = sphi 0, %s25
      %s28 = sphi 0, %s26
      %s29 = sphi 0, %s27
      %s39 = sphi 0, %s41
      %s42 = sphi 0, %s39
      %s43 = sphi 0, %s42
      %s59 = sphi 0, %s43
      %s67 = sphi 0, %s69
      %s70 = sphi 0, %s67
      %s71 = sphi 0, %s70
      %s87 = sphi 0, %s71
      %s95 = sphi 0, %s97
      %s98 = sphi 0, %s95
      %s99 = sphi 0, %s98
      %s115 = sphi 0, %s99
      %s119 = sphi 0, %s119
      %s121 = sphi 0, %s119
      %s122 = sphi 0, %s121
      %s136 = sphi 0, %s122
      %s140 = sphi 0, %s140
      %s142 = sphi 0, %s140
      %s143 = sphi 0, %s142
      %s157 = sphi 0, %s143
      %s161 = sphi 0, %s161
      %s163 = sphi 0, %s161
      %s164 = sphi 0, %s163
      %s178 = sphi 0, %s164
      %s182 = sphi 0, %s182
      %s184 = sphi 0, %s182
      %s185 = sphi 0, %s184
      %s199 = sphi 0, %s185
      %s207 = sphi 0, %s209
      %s210 = sphi 0, %s207
      %s211 = sphi 0, %s210
      %s227 = sphi 0, %s211
    $region4: #{tpu_custom_call.1} parent=1 // loop_header_branch
      %20 = sbr.rel (%p18) target = $region8
    $region5: #{tpu_custom_call.1} parent=1 // loop_body
      %s22 = ssub.s32 %s17, 1
      %s23 = ssub.s32 %s17, 2
      %s30 = sadd.s32 1, %s25
      %p31 = scmp.ge.s32.totalorder %s30, 1
      %s32 = scalar_select %p31, 0, %s30
      %s33 = sadd.s32 1, %s24
      %s34 = scalar_select %p31, %s33, %s24
      %p35 = scmp.ge.s32.totalorder %s34, 2
      %s36 = scalar_select %p35, 0, %s34
      %s37 = ssub.s32 %s24, %s36
      %p38 = scmp.eq.s32.totalorder %s37, 0
      %s40 = sadd.s32 %s39, 1
      %s41 = scalar_select %p38, %s39, %s40
      %p44 = pneg %p38
      %p45 = scmp.eq.s32.totalorder %s17, 1
      %p46 = por %p44, %p45
      %p47 = scmp.ne.s32.totalorder %s39, %s42
      %p48 = scmp.eq.s32.totalorder %s17, 0
      %p49 = por %p47, %p48
      %p50 = scmp.ne.s32.totalorder %s39, %s42
      %p51 = scmp.eq.s32.totalorder %s22, 1
      %p52 = por %p50, %p51
      %p53 = scmp.ne.s32.totalorder %s42, %s43
      %p54 = scmp.eq.s32.totalorder %s22, 0
      %p55 = por %p53, %p54
      %p56 = scmp.ne.s32.totalorder %s42, %s43
      %p57 = scmp.eq.s32.totalorder %s23, 1
      %p58 = por %p56, %p57
      %p60 = scmp.ne.s32.totalorder %s43, %s59
      %p61 = scmp.eq.s32.totalorder %s23, 0
      %p62 = por %p60, %p61
      %s63 = ssub.s32 %s24, %s36
      %s64 = ssub.s32 %s25, %s32
      %s65 = sor.u32 %s63, %s64
      %p66 = scmp.eq.s32.totalorder %s65, 0
      %s68 = sadd.s32 %s67, 1
      %s69 = scalar_select %p66, %s67, %s68
      %p72 = pneg %p66
      %p73 = scmp.eq.s32.totalorder %s17, 1
      %p74 = por %p72, %p73
      %p75 = scmp.ne.s32.totalorder %s67, %s70
      %p76 = scmp.eq.s32.totalorder %s17, 0
      %p77 = por %p75, %p76
      %p78 = scmp.ne.s32.totalorder %s67, %s70
      %p79 = scmp.eq.s32.totalorder %s22, 1
      %p80 = por %p78, %p79
      %p81 = scmp.ne.s32.totalorder %s70, %s71
      %p82 = scmp.eq.s32.totalorder %s22, 0
      %p83 = por %p81, %p82
      %p84 = scmp.ne.s32.totalorder %s70, %s71
      %p85 = scmp.eq.s32.totalorder %s23, 1
      %p86 = por %p84, %p85
      %p88 = scmp.ne.s32.totalorder %s71, %s87
      %p89 = scmp.eq.s32.totalorder %s23, 0
      %p90 = por %p88, %p89
      %s91 = ssub.s32 %s24, %s36
      %s92 = ssub.s32 %s25, %s32
      %s93 = sor.u32 %s91, %s92
      %p94 = scmp.eq.s32.totalorder %s93, 0
      %s96 = sadd.s32 %s95, 1
      %s97 = scalar_select %p94, %s95, %s96
      %p100 = pneg %p94
      %p101 = scmp.eq.s32.totalorder %s17, 1
      %p102 = por %p100, %p101
      %p103 = scmp.ne.s32.totalorder %s95, %s98
      %p104 = scmp.eq.s32.totalorder %s17, 0
      %p105 = por %p103, %p104
      %p106 = scmp.ne.s32.totalorder %s95, %s98
      %p107 = scmp.eq.s32.totalorder %s22, 1
      %p108 = por %p106, %p107
      %p109 = scmp.ne.s32.totalorder %s98, %s99
      %p110 = scmp.eq.s32.totalorder %s22, 0
      %p111 = por %p109, %p110
      %p112 = scmp.ne.s32.totalorder %s98, %s99
      %p113 = scmp.eq.s32.totalorder %s23, 1
      %p114 = por %p112, %p113
      %p116 = scmp.ne.s32.totalorder %s99, %s115
      %p117 = scmp.eq.s32.totalorder %s23, 0
      %p118 = por %p116, %p117
      %s120 = sadd.s32 %s119, 1
      %p123 = scmp.eq.s32.totalorder %s17, 1
      %p124 = scmp.ne.s32.totalorder %s119, %s121
      %p125 = scmp.eq.s32.totalorder %s17, 0
      %p126 = por %p124, %p125
      %p127 = scmp.ne.s32.totalorder %s119, %s121
      %p128 = scmp.eq.s32.totalorder %s22, 1
      %p129 = por %p127, %p128
      %p130 = scmp.ne.s32.totalorder %s121, %s122
      %p131 = scmp.eq.s32.totalorder %s22, 0
      %p132 = por %p130, %p131
      %p133 = scmp.ne.s32.totalorder %s121, %s122
      %p134 = scmp.eq.s32.totalorder %s23, 1
      %p135 = por %p133, %p134
      %p137 = scmp.ne.s32.totalorder %s122, %s136
      %p138 = scmp.eq.s32.totalorder %s23, 0
      %p139 = por %p137, %p138
      %s141 = sadd.s32 %s140, 1
      %p144 = scmp.eq.s32.totalorder %s17, 1
      %p145 = scmp.ne.s32.totalorder %s140, %s142
      %p146 = scmp.eq.s32.totalorder %s17, 0
      %p147 = por %p145, %p146
      %p148 = scmp.ne.s32.totalorder %s140, %s142
      %p149 = scmp.eq.s32.totalorder %s22, 1
      %p150 = por %p148, %p149
      %p151 = scmp.ne.s32.totalorder %s142, %s143
      %p152 = scmp.eq.s32.totalorder %s22, 0
      %p153 = por %p151, %p152
      %p154 = scmp.ne.s32.totalorder %s142, %s143
      %p155 = scmp.eq.s32.totalorder %s23, 1
      %p156 = por %p154, %p155
      %p158 = scmp.ne.s32.totalorder %s143, %s157
      %p159 = scmp.eq.s32.totalorder %s23, 0
      %p160 = por %p158, %p159
      %s162 = sadd.s32 %s161, 1
      %p165 = scmp.eq.s32.totalorder %s17, 1
      %p166 = scmp.ne.s32.totalorder %s161, %s163
      %p167 = scmp.eq.s32.totalorder %s17, 0
      %p168 = por %p166, %p167
      %p169 = scmp.ne.s32.totalorder %s161, %s163
      %p170 = scmp.eq.s32.totalorder %s22, 1
      %p171 = por %p169, %p170
      %p172 = scmp.ne.s32.totalorder %s163, %s164
      %p173 = scmp.eq.s32.totalorder %s22, 0
      %p174 = por %p172, %p173
      %p175 = scmp.ne.s32.totalorder %s163, %s164
      %p176 = scmp.eq.s32.totalorder %s23, 1
      %p177 = por %p175, %p176
      %p179 = scmp.ne.s32.totalorder %s164, %s178
      %p180 = scmp.eq.s32.totalorder %s23, 0
      %p181 = por %p179, %p180
      %s183 = sadd.s32 %s182, 1
      %p186 = scmp.eq.s32.totalorder %s17, 1
      %p187 = scmp.ne.s32.totalorder %s182, %s184
      %p188 = scmp.eq.s32.totalorder %s17, 0
      %p189 = por %p187, %p188
      %p190 = scmp.ne.s32.totalorder %s182, %s184
      %p191 = scmp.eq.s32.totalorder %s22, 1
      %p192 = por %p190, %p191
      %p193 = scmp.ne.s32.totalorder %s184, %s185
      %p194 = scmp.eq.s32.totalorder %s22, 0
      %p195 = por %p193, %p194
      %p196 = scmp.ne.s32.totalorder %s184, %s185
      %p197 = scmp.eq.s32.totalorder %s23, 1
      %p198 = por %p196, %p197
      %p200 = scmp.ne.s32.totalorder %s185, %s199
      %p201 = scmp.eq.s32.totalorder %s23, 0
      %p202 = por %p200, %p201
      %s203 = ssub.s32 %s24, %s36
      %s204 = ssub.s32 %s25, %s32
      %s205 = sor.u32 %s203, %s204
      %p206 = scmp.eq.s32.totalorder %s205, 0
      %s208 = sadd.s32 %s207, 1
      %s209 = scalar_select %p206, %s207, %s208
      %p212 = pneg %p206
      %p213 = scmp.eq.s32.totalorder %s17, 1
      %p214 = por %p212, %p213
      %p215 = scmp.ne.s32.totalorder %s207, %s210
      %p216 = scmp.eq.s32.totalorder %s17, 0
      %p217 = por %p215, %p216
      %p218 = scmp.ne.s32.totalorder %s207, %s210
      %p219 = scmp.eq.s32.totalorder %s22, 1
      %p220 = por %p218, %p219
      %p221 = scmp.ne.s32.totalorder %s210, %s211
      %p222 = scmp.eq.s32.totalorder %s22, 0
      %p223 = por %p221, %p222
      %p224 = scmp.ne.s32.totalorder %s210, %s211
      %p225 = scmp.eq.s32.totalorder %s23, 1
      %p226 = por %p224, %p225
      %p228 = scmp.ne.s32.totalorder %s211, %s227
      %p229 = scmp.eq.s32.totalorder %s23, 0
      %p230 = por %p228, %p229
      %p231 = scmp.le.s32.totalorder 1, %s17
      %p232 = scmp.lt.s32.totalorder %s17, 3
      %p233 = pnand %p231, %p232
      %p234 = pneg %p233
      // Predicated region
      $region9: #{tpu_custom_call.1} parent=5 // pred_check
        _
      $region10: #{tpu_custom_call.1} parent=5 // pred_check_branch
        %236 = sbr.rel (%p233) target = $region12
      $region11: #{tpu_custom_call.1} parent=5 // pred_region
        %s237 = ssub.s32 %s17, 1
        // Predicated region
        $region13: #{tpu_custom_call.1} parent=11 // pred_check
          %p238 = pneg %p132
        $region14: #{tpu_custom_call.1} parent=11 // pred_check_branch
          %240 = sbr.rel (%p238) target = $region16
        $region15: #{tpu_custom_call.1} parent=11 // pred_region
          _
        $region16: #{tpu_custom_call.1} parent=11 // pred_fallthru
          _
        // Predicated region
        $region17: #{tpu_custom_call.1} parent=11 // pred_check
          %p241 = pneg %p153
        $region18: #{tpu_custom_call.1} parent=11 // pred_check_branch
          %243 = sbr.rel (%p241) target = $region20
        $region19: #{tpu_custom_call.1} parent=11 // pred_region
          %245 = vsyncadd [#allocation3], 0
          %s246 = sshll.u32 %s4, 4
          %s247 = int_to_ptr.hbm [resolvable:$true] %s246
          %s248 = sshll.u32 [#allocation2], 4
          %s249 = int_to_ptr.vmem [resolvable:$true] %s248
          %254 = dma.hbm_to_vmem [thread:$0]  %s247, 9216, %s249, [#allocation3], 64, 64, 4
        $region20: #{tpu_custom_call.1} parent=11 // pred_fallthru
          _
        // Predicated region
        $region21: #{tpu_custom_call.1} parent=11 // pred_check
          %p255 = pneg %p174
        $region22: #{tpu_custom_call.1} parent=11 // pred_check_branch
          %257 = sbr.rel (%p255) target = $region24
        $region23: #{tpu_custom_call.1} parent=11 // pred_region
          _
        $region24: #{tpu_custom_call.1} parent=11 // pred_fallthru
          _
        // Predicated region
        $region25: #{tpu_custom_call.1} parent=11 // pred_check
          %p258 = pneg %p195
        $region26: #{tpu_custom_call.1} parent=11 // pred_check_branch
          %260 = sbr.rel (%p258) target = $region28
        $region27: #{tpu_custom_call.1} parent=11 // pred_region
          _
        $region28: #{tpu_custom_call.1} parent=11 // pred_fallthru
          _
      $region12: #{tpu_custom_call.1} parent=5 // pred_fallthru
        _
      %p261 = scmp.lt.s32.totalorder %s17, 2
      // Predicated region
      $region29: #{tpu_custom_call.1} parent=5 // pred_check
        %p262 = pneg %p261
      $region30: #{tpu_custom_call.1} parent=5 // pred_check_branch
        %264 = sbr.rel (%p262) target = $region32
      $region31: #{tpu_custom_call.1} parent=5 // pred_region
        // Predicated region
        $region33: #{tpu_custom_call.1} parent=31 // pred_check
          %p265 = pneg %p49
        $region34: #{tpu_custom_call.1} parent=31 // pred_check_branch
          %267 = sbr.rel (%p265) target = $region36
        $region35: #{tpu_custom_call.1} parent=31 // pred_region
          %p268 = scmp.lt.s32.totalorder %s24, 1
          %s269 = scalar_select %p268, %s24, 1
          %s270 = smul.addr %s269, 16
          %s271 = smul.addr %s270, 8
          %s272 = scalar_lea.vmem %s0, %s271
        $region36: #{tpu_custom_call.1} parent=31 // pred_fallthru
          _
        // Predicated region
        $region37: #{tpu_custom_call.1} parent=31 // pred_check
          %p273 = pneg %p77
        $region38: #{tpu_custom_call.1} parent=31 // pred_check_branch
          %275 = sbr.rel (%p273) target = $region40
        $region39: #{tpu_custom_call.1} parent=31 // pred_region
          %p276 = scmp.lt.s32.totalorder %s24, 1
          %s277 = scalar_select %p276, %s24, 1
          %p278 = scmp.lt.s32.totalorder %s25, 0
          %s279 = scalar_select %p278, %s25, 0
          %s280 = smul.addr %s279, 20
          %s281 = smul.addr %s277, 20
          %s282 = sadd.s32 %s280, %s281
          %s283 = smul.addr %s282, 4
          %s284 = scalar_lea.vmem %s1, %s283
        $region40: #{tpu_custom_call.1} parent=31 // pred_fallthru
          _
        // Predicated region
        $region41: #{tpu_custom_call.1} parent=31 // pred_check
          %p285 = pneg %p105
        $region42: #{tpu_custom_call.1} parent=31 // pred_check_branch
          %287 = sbr.rel (%p285) target = $region44
        $region43: #{tpu_custom_call.1} parent=31 // pred_region
          %p288 = scmp.lt.s32.totalorder %s24, 1
          %s289 = scalar_select %p288, %s24, 1
          %p290 = scmp.lt.s32.totalorder %s25, 0
          %s291 = scalar_select %p290, %s25, 0
          %s292 = smul.addr %s291, 72
          %s293 = smul.addr %s289, 72
          %s294 = sadd.s32 %s292, %s293
          %s295 = smul.addr %s294, 4
          %s296 = scalar_lea.vmem %s2, %s295
        $region44: #{tpu_custom_call.1} parent=31 // pred_fallthru
          _
      $region32: #{tpu_custom_call.1} parent=5 // pred_fallthru
        _
      %p297 = scmp.le.s32.totalorder 1, %s17
      %p298 = scmp.lt.s32.totalorder %s17, 3
      %p299 = pnand %p297, %p298
      %p300 = pneg %p299
      // Predicated region
      $region45: #{tpu_custom_call.1} parent=5 // pred_check
        _
      $region46: #{tpu_custom_call.1} parent=5 // pred_check_branch
        %302 = sbr.rel (%p299) target = $region48
      $region47: #{tpu_custom_call.1} parent=5 // pred_region
        %s303 = ssub.s32 %s17, 1
        // Predicated region
        $region49: #{tpu_custom_call.1} parent=47 // pred_check
          %p304 = pneg %p153
        $region50: #{tpu_custom_call.1} parent=47 // pred_check_branch
          %306 = sbr.rel (%p304) target = $region52
        $region51: #{tpu_custom_call.1} parent=47 // pred_region
          %308 = dma.done [#allocation3], 9216
        $region52: #{tpu_custom_call.1} parent=47 // pred_fallthru
          _
        %p309 = scmp.lt.s32.totalorder %s26, 1
        %s310 = scalar_select %p309, %s26, 1
        %s311 = smul.addr %s310, 16
        %s312 = smul.addr %s311, 8
        %s313 = scalar_lea.vmem %s0, %s312
        %p314 = pneg %p55
        %p315 = pneg %p52
        %p316 = scmp.lt.s32.totalorder %s26, 1
        %s317 = scalar_select %p316, %s26, 1
        %p318 = scmp.lt.s32.totalorder %s27, 0
        %s319 = scalar_select %p318, %s27, 0
        %s320 = smul.addr %s319, 20
        %s321 = smul.addr %s317, 20
        %s322 = sadd.s32 %s320, %s321
        %s323 = smul.addr %s322, 4
        %s324 = scalar_lea.vmem %s1, %s323
        %p325 = pneg %p83
        %p326 = pneg %p80
        %p327 = scmp.lt.s32.totalorder %s26, 1
        %s328 = scalar_select %p327, %s26, 1
        %p329 = scmp.lt.s32.totalorder %s27, 0
        %s330 = scalar_select %p329, %s27, 0
        %s331 = smul.addr %s330, 72
        %s332 = smul.addr %s328, 72
        %s333 = sadd.s32 %s331, %s332
        %s334 = smul.addr %s333, 4
        %s335 = scalar_lea.vmem %s2, %s334
        %p336 = pneg %p111
        %p337 = pneg %p108
        %p338 = pneg %p132
        %p339 = pneg %p129
        %p340 = pneg %p153
        %p341 = pneg %p150
        %p342 = pneg %p174
        %p343 = pneg %p171
        %p344 = pneg %p195
        %p345 = pneg %p192
        %p346 = pneg %p223
        %p347 = pneg %p220
        %s348 = sand.u32 %s210, 1
        %s349 = scalar_lea.sflag [#allocation4], %s348
        %s350 = sand.u32 %s210, 1
        %s351 = smul.addr %s350, 128
        %s352 = scalar_lea.vmem [#allocation5], %s351
        %p353 = scmp.lt.s32.totalorder %s26, 1
        %s354 = scalar_select %p353, %s26, 1
        %s355 = smul.addr %s354, 16
        %s356 = smul.addr %s355, 8
        %s357 = scalar_lea.vmem %s0, %s356
        %p358 = scmp.lt.s32.totalorder %s26, 1
        %s359 = scalar_select %p358, %s26, 1
        %p360 = scmp.lt.s32.totalorder %s27, 0
        %s361 = scalar_select %p360, %s27, 0
        %s362 = smul.addr %s361, 20
        %s363 = smul.addr %s359, 20
        %s364 = sadd.s32 %s362, %s363
        %s365 = smul.addr %s364, 4
        %s366 = scalar_lea.vmem %s1, %s365
        %p367 = scmp.lt.s32.totalorder %s26, 1
        %s368 = scalar_select %p367, %s26, 1
        %p369 = scmp.lt.s32.totalorder %s27, 0
        %s370 = scalar_select %p369, %s27, 0
        %s371 = smul.addr %s370, 72
        %s372 = smul.addr %s368, 72
        %s373 = sadd.s32 %s371, %s372
        %s374 = smul.addr %s373, 4
        %s375 = scalar_lea.vmem %s2, %s374
        %v376 = vld [vmem:[%s6] sm:$0xf]
        %v377 = vld [vmem:[%s357] sm:$0xff]
        %v378 = vld [vmem:[%s357 + $0x8] sm:$0xff]
        %v379 = vld [vmem:[%s357 + $0x10] sm:$0xff]
        %v380 = vld [vmem:[%s357 + $0x18] sm:$0xff]
        %v381 = vld [vmem:[%s357 + $0x20] sm:$0xff]
        %v382 = vld [vmem:[%s357 + $0x28] sm:$0xff]
        %v383 = vld [vmem:[%s357 + $0x30] sm:$0xff]
        %v384 = vld [vmem:[%s357 + $0x38] sm:$0xff]
        %v385 = vld [vmem:[%s357 + $0x40] sm:$0xff]
        %v386 = vld [vmem:[%s357 + $0x48] sm:$0xff]
        %v387 = vld [vmem:[%s357 + $0x50] sm:$0xff]
        %v388 = vld [vmem:[%s357 + $0x58] sm:$0xff]
        %v389 = vld [vmem:[%s357 + $0x60] sm:$0xff]
        %v390 = vld [vmem:[%s357 + $0x68] sm:$0xff]
        %v391 = vld [vmem:[%s357 + $0x70] sm:$0xff]
        %v392 = vld [vmem:[%s357 + $0x78] sm:$0xff]
        %v393 = vld [vmem:[%s3] sm:$0xf]
        %v394 = vld [vmem:[%s3 + $0x4] sm:$0xf]
        %v395 = vld [vmem:[%s3 + $0x8] sm:$0xf]
        %v396 = vld [vmem:[%s3 + $0xc] sm:$0xf]
        %v397 = vld [vmem:[%s3 + $0x10] sm:$0xf]
        %v398 = vld [vmem:[%s3 + $0x14] sm:$0xf]
        %v399 = vld [vmem:[%s3 + $0x18] sm:$0xf]
        %v400 = vld [vmem:[%s3 + $0x1c] sm:$0xf]
        %v401 = vld [vmem:[%s3 + $0x20] sm:$0xf]
        %v402 = vld [vmem:[%s3 + $0x24] sm:$0xf]
        %v403 = vld [vmem:[%s3 + $0x28] sm:$0xf]
        %v404 = vld [vmem:[%s3 + $0x2c] sm:$0xf]
        %v405 = vld [vmem:[%s3 + $0x30] sm:$0xf]
        %v406 = vld [vmem:[%s3 + $0x34] sm:$0xf]
        %v407 = vld [vmem:[%s3 + $0x38] sm:$0xf]
        %v408 = vld [vmem:[%s3 + $0x3c] sm:$0xf]
        %v409 = vunpack.c.l.bf16 %v393
        %v410 = vunpack.c.l.bf16 %v394
        %v411 = vunpack.c.l.bf16 %v395
        %v412 = vunpack.c.l.bf16 %v396
        %v413 = vunpack.c.l.bf16 %v397
        %v414 = vunpack.c.l.bf16 %v398
        %v415 = vunpack.c.l.bf16 %v399
        %v416 = vunpack.c.l.bf16 %v400
        %v417 = vunpack.c.l.bf16 %v401
        %v418 = vunpack.c.l.bf16 %v402
        %v419 = vunpack.c.l.bf16 %v403
        %v420 = vunpack.c.l.bf16 %v404
        %v421 = vunpack.c.l.bf16 %v405
        %v422 = vunpack.c.l.bf16 %v406
        %v423 = vunpack.c.l.bf16 %v407
        %v424 = vunpack.c.l.bf16 %v408
        %426 = vset.pattern.permute.xlu0 0
        %427 = vperm.xlu0 %426, %v377
        %v428 = vpop.permute.xlu0 %427
        %431 = vset.pattern.permute.xlu0 0
        %432 = vperm.xlu0 %431, %v378
        %v433 = vpop.permute.xlu0 %432
        %436 = vset.pattern.permute.xlu0 0
        %437 = vperm.xlu0 %436, %v379
        %v438 = vpop.permute.xlu0 %437
        %441 = vset.pattern.permute.xlu0 0
        %442 = vperm.xlu0 %441, %v380
        %v443 = vpop.permute.xlu0 %442
        %446 = vset.pattern.permute.xlu0 0
        %447 = vperm.xlu0 %446, %v381
        %v448 = vpop.permute.xlu0 %447
        %451 = vset.pattern.permute.xlu0 0
        %452 = vperm.xlu0 %451, %v382
        %v453 = vpop.permute.xlu0 %452
        %456 = vset.pattern.permute.xlu0 0
        %457 = vperm.xlu0 %456, %v383
        %v458 = vpop.permute.xlu0 %457
        %461 = vset.pattern.permute.xlu0 0
        %462 = vperm.xlu0 %461, %v384
        %v463 = vpop.permute.xlu0 %462
        %466 = vset.pattern.permute.xlu0 0
        %467 = vperm.xlu0 %466, %v385
        %v468 = vpop.permute.xlu0 %467
        %471 = vset.pattern.permute.xlu0 0
        %472 = vperm.xlu0 %471, %v386
        %v473 = vpop.permute.xlu0 %472
        %476 = vset.pattern.permute.xlu0 0
        %477 = vperm.xlu0 %476, %v387
        %v478 = vpop.permute.xlu0 %477
        %481 = vset.pattern.permute.xlu0 0
        %482 = vperm.xlu0 %481, %v388
        %v483 = vpop.permute.xlu0 %482
        %486 = vset.pattern.permute.xlu0 0
        %487 = vperm.xlu0 %486, %v389
        %v488 = vpop.permute.xlu0 %487
        %491 = vset.pattern.permute.xlu0 0
        %492 = vperm.xlu0 %491, %v390
        %v493 = vpop.permute.xlu0 %492
        %496 = vset.pattern.permute.xlu0 0
        %497 = vperm.xlu0 %496, %v391
        %v498 = vpop.permute.xlu0 %497
        %501 = vset.pattern.permute.xlu0 0
        %502 = vperm.xlu0 %501, %v392
        %v503 = vpop.permute.xlu0 %502
        %v505 = vmul.f32 %v409, %v428
        %v506 = vmul.f32 %v410, %v433
        %v507 = vmul.f32 %v411, %v438
        %v508 = vmul.f32 %v412, %v443
        %v509 = vmul.f32 %v413, %v448
        %v510 = vmul.f32 %v414, %v453
        %v511 = vmul.f32 %v415, %v458
        %v512 = vmul.f32 %v416, %v463
        %v513 = vmul.f32 %v417, %v468
        %v514 = vmul.f32 %v418, %v473
        %v515 = vmul.f32 %v419, %v478
        %v516 = vmul.f32 %v420, %v483
        %v517 = vmul.f32 %v421, %v488
        %v518 = vmul.f32 %v422, %v493
        %v519 = vmul.f32 %v423, %v498
        %v520 = vmul.f32 %v424, %v503
        %v521 = vadd.f32 %v505, %v506
        %v522 = vadd.f32 %v521, %v507
        %v523 = vadd.f32 %v522, %v508
        %v524 = vadd.f32 %v523, %v509
        %v525 = vadd.f32 %v524, %v510
        %v526 = vadd.f32 %v525, %v511
        %v527 = vadd.f32 %v526, %v512
        %v528 = vadd.f32 %v527, %v513
        %v529 = vadd.f32 %v528, %v514
        %v530 = vadd.f32 %v529, %v515
        %v531 = vadd.f32 %v530, %v516
        %v532 = vadd.f32 %v531, %v517
        %v533 = vadd.f32 %v532, %v518
        %v534 = vadd.f32 %v533, %v519
        %v535 = vadd.f32 %v534, %v520
        %v536 = vrot.slane %v535, 4
        %v537 = vadd.f32 %v535, %v536
        %v538 = vrot.slane %v537, 2
        %v539 = vadd.f32 %v537, %v538
        %v540 = vrot.slane %v539, 1
        %v541 = vadd.f32 %v539, %v540
        %v542 = vmul.f32 %v541, %v376
        %v544 = vrot.slane %v376, 1
        %v546 = vadd.f32 %v542, %v544
        %v547 = vmax.f32 %v546, 0.0
        %v549 = vrot.slane %v547, 6
        %v551 = vmul.f32 %v376, %v549
        %v553 = vrot.slane %v551, 7
        %v555 = vadd.f32 %v376, %v553
        %v556 = vld [vmem:[#allocation2] sm:$0xf]
        %v557 = vld [vmem:[#allocation2 + $0x4] sm:$0xf]
        %v558 = vld [vmem:[#allocation2 + $0x8] sm:$0xf]
        %v559 = vld [vmem:[#allocation2 + $0xc] sm:$0xf]
        %v560 = vld [vmem:[#allocation2 + $0x10] sm:$0xf]
        %v561 = vld [vmem:[#allocation2 + $0x14] sm:$0xf]
        %v562 = vld [vmem:[#allocation2 + $0x18] sm:$0xf]
        %v563 = vld [vmem:[#allocation2 + $0x1c] sm:$0xf]
        %v564 = vld [vmem:[#allocation2 + $0x20] sm:$0xf]
        %v565 = vld [vmem:[#allocation2 + $0x24] sm:$0xf]
        %v566 = vld [vmem:[#allocation2 + $0x28] sm:$0xf]
        %v567 = vld [vmem:[#allocation2 + $0x2c] sm:$0xf]
        %v568 = vld [vmem:[#allocation2 + $0x30] sm:$0xf]
        %v569 = vld [vmem:[#allocation2 + $0x34] sm:$0xf]
        %v570 = vld [vmem:[#allocation2 + $0x38] sm:$0xf]
        %v571 = vld [vmem:[#allocation2 + $0x3c] sm:$0xf]
        %v572 = vld [vmem:[#allocation2 + $0x40] sm:$0xf]
        %v573 = vld [vmem:[#allocation2 + $0x44] sm:$0xf]
        %v574 = vld [vmem:[#allocation2 + $0x48] sm:$0xf]
        %v575 = vld [vmem:[#allocation2 + $0x4c] sm:$0xf]
        %v576 = vld [vmem:[#allocation2 + $0x50] sm:$0xf]
        %v577 = vld [vmem:[#allocation2 + $0x54] sm:$0xf]
        %v578 = vld [vmem:[#allocation2 + $0x58] sm:$0xf]
        %v579 = vld [vmem:[#allocation2 + $0x5c] sm:$0xf]
        %v580 = vld [vmem:[#allocation2 + $0x60] sm:$0xf]
        %v581 = vld [vmem:[#allocation2 + $0x64] sm:$0xf]
        %v582 = vld [vmem:[#allocation2 + $0x68] sm:$0xf]
        %v583 = vld [vmem:[#allocation2 + $0x6c] sm:$0xf]
        %v584 = vld [vmem:[#allocation2 + $0x70] sm:$0xf]
        %v585 = vld [vmem:[#allocation2 + $0x74] sm:$0xf]
        %v586 = vld [vmem:[#allocation2 + $0x78] sm:$0xf]
        %v587 = vld [vmem:[#allocation2 + $0x7c] sm:$0xf]
        %v588 = vld [vmem:[#allocation2 + $0x80] sm:$0xf]
        %v589 = vld [vmem:[#allocation2 + $0x84] sm:$0xf]
        %v590 = vld [vmem:[#allocation2 + $0x88] sm:$0xf]
        %v591 = vld [vmem:[#allocation2 + $0x8c] sm:$0xf]
        %v592 = vld [vmem:[#allocation2 + $0x90] sm:$0xf]
        %v593 = vld [vmem:[#allocation2 + $0x94] sm:$0xf]
        %v594 = vld [vmem:[#allocation2 + $0x98] sm:$0xf]
        %v595 = vld [vmem:[#allocation2 + $0x9c] sm:$0xf]
        %v596 = vld [vmem:[#allocation2 + $0xa0] sm:$0xf]
        %v597 = vld [vmem:[#allocation2 + $0xa4] sm:$0xf]
        %v598 = vld [vmem:[#allocation2 + $0xa8] sm:$0xf]
        %v599 = vld [vmem:[#allocation2 + $0xac] sm:$0xf]
        %v600 = vld [vmem:[#allocation2 + $0xb0] sm:$0xf]
        %v601 = vld [vmem:[#allocation2 + $0xb4] sm:$0xf]
        %v602 = vld [vmem:[#allocation2 + $0xb8] sm:$0xf]
        %v603 = vld [vmem:[#allocation2 + $0xbc] sm:$0xf]
        %v604 = vld [vmem:[#allocation2 + $0xc0] sm:$0xf]
        %v605 = vld [vmem:[#allocation2 + $0xc4] sm:$0xf]
        %v606 = vld [vmem:[#allocation2 + $0xc8] sm:$0xf]
        %v607 = vld [vmem:[#allocation2 + $0xcc] sm:$0xf]
        %v608 = vld [vmem:[#allocation2 + $0xd0] sm:$0xf]
        %v609 = vld [vmem:[#allocation2 + $0xd4] sm:$0xf]
        %v610 = vld [vmem:[#allocation2 + $0xd8] sm:$0xf]
        %v611 = vld [vmem:[#allocation2 + $0xdc] sm:$0xf]
        %v612 = vld [vmem:[#allocation2 + $0xe0] sm:$0xf]
        %v613 = vld [vmem:[#allocation2 + $0xe4] sm:$0xf]
        %v614 = vld [vmem:[#allocation2 + $0xe8] sm:$0xf]
        %v615 = vld [vmem:[#allocation2 + $0xec] sm:$0xf]
        %v616 = vld [vmem:[#allocation2 + $0xf0] sm:$0xf]
        %v617 = vld [vmem:[#allocation2 + $0xf4] sm:$0xf]
        %v618 = vld [vmem:[#allocation2 + $0xf8] sm:$0xf]
        %v619 = vld [vmem:[#allocation2 + $0xfc] sm:$0xf]
        %v620 = vld [vmem:[#allocation2 + $0x100] sm:$0xf]
        %v621 = vld [vmem:[#allocation2 + $0x104] sm:$0xf]
        %v622 = vld [vmem:[#allocation2 + $0x108] sm:$0xf]
        %v623 = vld [vmem:[#allocation2 + $0x10c] sm:$0xf]
        %v624 = vld [vmem:[#allocation2 + $0x110] sm:$0xf]
        %v625 = vld [vmem:[#allocation2 + $0x114] sm:$0xf]
        %v626 = vld [vmem:[#allocation2 + $0x118] sm:$0xf]
        %v627 = vld [vmem:[#allocation2 + $0x11c] sm:$0xf]
        %v628 = vld [vmem:[#allocation2 + $0x120] sm:$0xf]
        %v629 = vld [vmem:[#allocation2 + $0x124] sm:$0xf]
        %v630 = vld [vmem:[#allocation2 + $0x128] sm:$0xf]
        %v631 = vld [vmem:[#allocation2 + $0x12c] sm:$0xf]
        %v632 = vld [vmem:[#allocation2 + $0x130] sm:$0xf]
        %v633 = vld [vmem:[#allocation2 + $0x134] sm:$0xf]
        %v634 = vld [vmem:[#allocation2 + $0x138] sm:$0xf]
        %v635 = vld [vmem:[#allocation2 + $0x13c] sm:$0xf]
        %v636 = vld [vmem:[#allocation2 + $0x140] sm:$0xf]
        %v637 = vld [vmem:[#allocation2 + $0x144] sm:$0xf]
        %v638 = vld [vmem:[#allocation2 + $0x148] sm:$0xf]
        %v639 = vld [vmem:[#allocation2 + $0x14c] sm:$0xf]
        %v640 = vld [vmem:[#allocation2 + $0x150] sm:$0xf]
        %v641 = vld [vmem:[#allocation2 + $0x154] sm:$0xf]
        %v642 = vld [vmem:[#allocation2 + $0x158] sm:$0xf]
        %v643 = vld [vmem:[#allocation2 + $0x15c] sm:$0xf]
        %v644 = vld [vmem:[#allocation2 + $0x160] sm:$0xf]
        %v645 = vld [vmem:[#allocation2 + $0x164] sm:$0xf]
        %v646 = vld [vmem:[#allocation2 + $0x168] sm:$0xf]
        %v647 = vld [vmem:[#allocation2 + $0x16c] sm:$0xf]
        %v648 = vld [vmem:[#allocation2 + $0x170] sm:$0xf]
        %v649 = vld [vmem:[#allocation2 + $0x174] sm:$0xf]
        %v650 = vld [vmem:[#allocation2 + $0x178] sm:$0xf]
        %v651 = vld [vmem:[#allocation2 + $0x17c] sm:$0xf]
        %v652 = vld [vmem:[#allocation2 + $0x180] sm:$0xf]
        %v653 = vld [vmem:[#allocation2 + $0x184] sm:$0xf]
        %v654 = vld [vmem:[#allocation2 + $0x188] sm:$0xf]
        %v655 = vld [vmem:[#allocation2 + $0x18c] sm:$0xf]
        %v656 = vld [vmem:[#allocation2 + $0x190] sm:$0xf]
        %v657 = vld [vmem:[#allocation2 + $0x194] sm:$0xf]
        %v658 = vld [vmem:[#allocation2 + $0x198] sm:$0xf]
        %v659 = vld [vmem:[#allocation2 + $0x19c] sm:$0xf]
        %v660 = vld [vmem:[#allocation2 + $0x1a0] sm:$0xf]
        %v661 = vld [vmem:[#allocation2 + $0x1a4] sm:$0xf]
        %v662 = vld [vmem:[#allocation2 + $0x1a8] sm:$0xf]
        %v663 = vld [vmem:[#allocation2 + $0x1ac] sm:$0xf]
        %v664 = vld [vmem:[#allocation2 + $0x1b0] sm:$0xf]
        %v665 = vld [vmem:[#allocation2 + $0x1b4] sm:$0xf]
        %v666 = vld [vmem:[#allocation2 + $0x1b8] sm:$0xf]
        %v667 = vld [vmem:[#allocation2 + $0x1bc] sm:$0xf]
        %v668 = vld [vmem:[#allocation2 + $0x1c0] sm:$0xf]
        %v669 = vld [vmem:[#allocation2 + $0x1c4] sm:$0xf]
        %v670 = vld [vmem:[#allocation2 + $0x1c8] sm:$0xf]
        %v671 = vld [vmem:[#allocation2 + $0x1cc] sm:$0xf]
        %v672 = vld [vmem:[#allocation2 + $0x1d0] sm:$0xf]
        %v673 = vld [vmem:[#allocation2 + $0x1d4] sm:$0xf]
        %v674 = vld [vmem:[#allocation2 + $0x1d8] sm:$0xf]
        %v675 = vld [vmem:[#allocation2 + $0x1dc] sm:$0xf]
        %v676 = vld [vmem:[#allocation2 + $0x1e0] sm:$0xf]
        %v677 = vld [vmem:[#allocation2 + $0x1e4] sm:$0xf]
        %v678 = vld [vmem:[#allocation2 + $0x1e8] sm:$0xf]
        %v679 = vld [vmem:[#allocation2 + $0x1ec] sm:$0xf]
        %v680 = vld [vmem:[#allocation2 + $0x1f0] sm:$0xf]
        %v681 = vld [vmem:[#allocation2 + $0x1f4] sm:$0xf]
        %v682 = vld [vmem:[#allocation2 + $0x1f8] sm:$0xf]
        %v683 = vld [vmem:[#allocation2 + $0x1fc] sm:$0xf]
        %v684 = vld [vmem:[#allocation2 + $0x200] sm:$0xf]
        %v685 = vld [vmem:[#allocation2 + $0x204] sm:$0xf]
        %v686 = vld [vmem:[#allocation2 + $0x208] sm:$0xf]
        %v687 = vld [vmem:[#allocation2 + $0x20c] sm:$0xf]
        %v688 = vld [vmem:[#allocation2 + $0x210] sm:$0xf]
        %v689 = vld [vmem:[#allocation2 + $0x214] sm:$0xf]
        %v690 = vld [vmem:[#allocation2 + $0x218] sm:$0xf]
        %v691 = vld [vmem:[#allocation2 + $0x21c] sm:$0xf]
        %v692 = vld [vmem:[#allocation2 + $0x220] sm:$0xf]
        %v693 = vld [vmem:[#allocation2 + $0x224] sm:$0xf]
        %v694 = vld [vmem:[#allocation2 + $0x228] sm:$0xf]
        %v695 = vld [vmem:[#allocation2 + $0x22c] sm:$0xf]
        %v696 = vld [vmem:[#allocation2 + $0x230] sm:$0xf]
        %v697 = vld [vmem:[#allocation2 + $0x234] sm:$0xf]
        %v698 = vld [vmem:[#allocation2 + $0x238] sm:$0xf]
        %v699 = vld [vmem:[#allocation2 + $0x23c] sm:$0xf]
        %v700 = vunpack.c.l.bf16 %v556
        %v701 = vunpack.c.l.bf16 %v557
        %v702 = vunpack.c.l.bf16 %v558
        %v703 = vunpack.c.l.bf16 %v559
        %v704 = vunpack.c.l.bf16 %v560
        %v705 = vunpack.c.l.bf16 %v561
        %v706 = vunpack.c.l.bf16 %v562
        %v707 = vunpack.c.l.bf16 %v563
        %v708 = vunpack.c.l.bf16 %v564
        %v709 = vunpack.c.l.bf16 %v565
        %v710 = vunpack.c.l.bf16 %v566
        %v711 = vunpack.c.l.bf16 %v567
        %v712 = vunpack.c.l.bf16 %v568
        %v713 = vunpack.c.l.bf16 %v569
        %v714 = vunpack.c.l.bf16 %v570
        %v715 = vunpack.c.l.bf16 %v571
        %v716 = vunpack.c.l.bf16 %v572
        %v717 = vunpack.c.l.bf16 %v573
        %v718 = vunpack.c.l.bf16 %v574
        %v719 = vunpack.c.l.bf16 %v575
        %v720 = vunpack.c.l.bf16 %v576
        %v721 = vunpack.c.l.bf16 %v577
        %v722 = vunpack.c.l.bf16 %v578
        %v723 = vunpack.c.l.bf16 %v579
        %v724 = vunpack.c.l.bf16 %v580
        %v725 = vunpack.c.l.bf16 %v581
        %v726 = vunpack.c.l.bf16 %v582
        %v727 = vunpack.c.l.bf16 %v583
        %v728 = vunpack.c.l.bf16 %v584
        %v729 = vunpack.c.l.bf16 %v585
        %v730 = vunpack.c.l.bf16 %v586
        %v731 = vunpack.c.l.bf16 %v587
        %v732 = vunpack.c.l.bf16 %v588
        %v733 = vunpack.c.l.bf16 %v589
        %v734 = vunpack.c.l.bf16 %v590
        %v735 = vunpack.c.l.bf16 %v591
        %v736 = vunpack.c.l.bf16 %v592
        %v737 = vunpack.c.l.bf16 %v593
        %v738 = vunpack.c.l.bf16 %v594
        %v739 = vunpack.c.l.bf16 %v595
        %v740 = vunpack.c.l.bf16 %v596
        %v741 = vunpack.c.l.bf16 %v597
        %v742 = vunpack.c.l.bf16 %v598
        %v743 = vunpack.c.l.bf16 %v599
        %v744 = vunpack.c.l.bf16 %v600
        %v745 = vunpack.c.l.bf16 %v601
        %v746 = vunpack.c.l.bf16 %v602
        %v747 = vunpack.c.l.bf16 %v603
        %v748 = vunpack.c.l.bf16 %v604
        %v749 = vunpack.c.l.bf16 %v605
        %v750 = vunpack.c.l.bf16 %v606
        %v751 = vunpack.c.l.bf16 %v607
        %v752 = vunpack.c.l.bf16 %v608
        %v753 = vunpack.c.l.bf16 %v609
        %v754 = vunpack.c.l.bf16 %v610
        %v755 = vunpack.c.l.bf16 %v611
        %v756 = vunpack.c.l.bf16 %v612
        %v757 = vunpack.c.l.bf16 %v613
        %v758 = vunpack.c.l.bf16 %v614
        %v759 = vunpack.c.l.bf16 %v615
        %v760 = vunpack.c.l.bf16 %v616
        %v761 = vunpack.c.l.bf16 %v617
        %v762 = vunpack.c.l.bf16 %v618
        %v763 = vunpack.c.l.bf16 %v619
        %v764 = vunpack.c.l.bf16 %v620
        %v765 = vunpack.c.l.bf16 %v621
        %v766 = vunpack.c.l.bf16 %v622
        %v767 = vunpack.c.l.bf16 %v623
        %v768 = vunpack.c.l.bf16 %v624
        %v769 = vunpack.c.l.bf16 %v625
        %v770 = vunpack.c.l.bf16 %v626
        %v771 = vunpack.c.l.bf16 %v627
        %v772 = vunpack.c.l.bf16 %v628
        %v773 = vunpack.c.l.bf16 %v629
        %v774 = vunpack.c.l.bf16 %v630
        %v775 = vunpack.c.l.bf16 %v631
        %v776 = vunpack.c.l.bf16 %v632
        %v777 = vunpack.c.l.bf16 %v633
        %v778 = vunpack.c.l.bf16 %v634
        %v779 = vunpack.c.l.bf16 %v635
        %v780 = vunpack.c.l.bf16 %v636
        %v781 = vunpack.c.l.bf16 %v637
        %v782 = vunpack.c.l.bf16 %v638
        %v783 = vunpack.c.l.bf16 %v639
        %v784 = vunpack.c.l.bf16 %v640
        %v785 = vunpack.c.l.bf16 %v641
        %v786 = vunpack.c.l.bf16 %v642
        %v787 = vunpack.c.l.bf16 %v643
        %v788 = vunpack.c.l.bf16 %v644
        %v789 = vunpack.c.l.bf16 %v645
        %v790 = vunpack.c.l.bf16 %v646
        %v791 = vunpack.c.l.bf16 %v647
        %v792 = vunpack.c.l.bf16 %v648
        %v793 = vunpack.c.l.bf16 %v649
        %v794 = vunpack.c.l.bf16 %v650
        %v795 = vunpack.c.l.bf16 %v651
        %v796 = vunpack.c.l.bf16 %v652
        %v797 = vunpack.c.l.bf16 %v653
        %v798 = vunpack.c.l.bf16 %v654
        %v799 = vunpack.c.l.bf16 %v655
        %v800 = vunpack.c.l.bf16 %v656
        %v801 = vunpack.c.l.bf16 %v657
        %v802 = vunpack.c.l.bf16 %v658
        %v803 = vunpack.c.l.bf16 %v659
        %v804 = vunpack.c.l.bf16 %v660
        %v805 = vunpack.c.l.bf16 %v661
        %v806 = vunpack.c.l.bf16 %v662
        %v807 = vunpack.c.l.bf16 %v663
        %v808 = vunpack.c.l.bf16 %v664
        %v809 = vunpack.c.l.bf16 %v665
        %v810 = vunpack.c.l.bf16 %v666
        %v811 = vunpack.c.l.bf16 %v667
        %v812 = vunpack.c.l.bf16 %v668
        %v813 = vunpack.c.l.bf16 %v669
        %v814 = vunpack.c.l.bf16 %v670
        %v815 = vunpack.c.l.bf16 %v671
        %v816 = vunpack.c.l.bf16 %v672
        %v817 = vunpack.c.l.bf16 %v673
        %v818 = vunpack.c.l.bf16 %v674
        %v819 = vunpack.c.l.bf16 %v675
        %v820 = vunpack.c.l.bf16 %v676
        %v821 = vunpack.c.l.bf16 %v677
        %v822 = vunpack.c.l.bf16 %v678
        %v823 = vunpack.c.l.bf16 %v679
        %v824 = vunpack.c.l.bf16 %v680
        %v825 = vunpack.c.l.bf16 %v681
        %v826 = vunpack.c.l.bf16 %v682
        %v827 = vunpack.c.l.bf16 %v683
        %v828 = vunpack.c.l.bf16 %v684
        %v829 = vunpack.c.l.bf16 %v685
        %v830 = vunpack.c.l.bf16 %v686
        %v831 = vunpack.c.l.bf16 %v687
        %v832 = vunpack.c.l.bf16 %v688
        %v833 = vunpack.c.l.bf16 %v689
        %v834 = vunpack.c.l.bf16 %v690
        %v835 = vunpack.c.l.bf16 %v691
        %v836 = vunpack.c.l.bf16 %v692
        %v837 = vunpack.c.l.bf16 %v693
        %v838 = vunpack.c.l.bf16 %v694
        %v839 = vunpack.c.l.bf16 %v695
        %v840 = vunpack.c.l.bf16 %v696
        %v841 = vunpack.c.l.bf16 %v697
        %v842 = vunpack.c.l.bf16 %v698
        %v843 = vunpack.c.l.bf16 %v699
        %v844 = vperm.slane %v547, 0
        %v845 = vmul.f32 %v700, %v844
        %v846 = vmul.f32 %v701, %v844
        %v847 = vmul.f32 %v702, %v844
        %v848 = vmul.f32 %v703, %v844
        %v849 = vmul.f32 %v704, %v844
        %v850 = vmul.f32 %v705, %v844
        %v851 = vmul.f32 %v706, %v844
        %v852 = vmul.f32 %v707, %v844
        %v853 = vmul.f32 %v708, %v844
        %v854 = vmul.f32 %v709, %v844
        %v855 = vmul.f32 %v710, %v844
        %v856 = vmul.f32 %v711, %v844
        %v857 = vmul.f32 %v712, %v844
        %v858 = vmul.f32 %v713, %v844
        %v859 = vmul.f32 %v714, %v844
        %v860 = vmul.f32 %v715, %v844
        %v861 = vmul.f32 %v716, %v844
        %v862 = vmul.f32 %v717, %v844
        %v863 = vmul.f32 %v718, %v844
        %v864 = vmul.f32 %v719, %v844
        %v865 = vmul.f32 %v720, %v844
        %v866 = vmul.f32 %v721, %v844
        %v867 = vmul.f32 %v722, %v844
        %v868 = vmul.f32 %v723, %v844
        %v869 = vmul.f32 %v724, %v844
        %v870 = vmul.f32 %v725, %v844
        %v871 = vmul.f32 %v726, %v844
        %v872 = vmul.f32 %v727, %v844
        %v873 = vmul.f32 %v728, %v844
        %v874 = vmul.f32 %v729, %v844
        %v875 = vmul.f32 %v730, %v844
        %v876 = vmul.f32 %v731, %v844
        %v877 = vmul.f32 %v732, %v844
        %v878 = vmul.f32 %v733, %v844
        %v879 = vmul.f32 %v734, %v844
        %v880 = vmul.f32 %v735, %v844
        %v881 = vmul.f32 %v736, %v844
        %v882 = vmul.f32 %v737, %v844
        %v883 = vmul.f32 %v738, %v844
        %v884 = vmul.f32 %v739, %v844
        %v885 = vmul.f32 %v740, %v844
        %v886 = vmul.f32 %v741, %v844
        %v887 = vmul.f32 %v742, %v844
        %v888 = vmul.f32 %v743, %v844
        %v889 = vmul.f32 %v744, %v844
        %v890 = vmul.f32 %v745, %v844
        %v891 = vmul.f32 %v746, %v844
        %v892 = vmul.f32 %v747, %v844
        %v893 = vmul.f32 %v748, %v844
        %v894 = vmul.f32 %v749, %v844
        %v895 = vmul.f32 %v750, %v844
        %v896 = vmul.f32 %v751, %v844
        %v897 = vmul.f32 %v752, %v844
        %v898 = vmul.f32 %v753, %v844
        %v899 = vmul.f32 %v754, %v844
        %v900 = vmul.f32 %v755, %v844
        %v901 = vmul.f32 %v756, %v844
        %v902 = vmul.f32 %v757, %v844
        %v903 = vmul.f32 %v758, %v844
        %v904 = vmul.f32 %v759, %v844
        %v905 = vmul.f32 %v760, %v844
        %v906 = vmul.f32 %v761, %v844
        %v907 = vmul.f32 %v762, %v844
        %v908 = vmul.f32 %v763, %v844
        %v909 = vmul.f32 %v764, %v844
        %v910 = vmul.f32 %v765, %v844
        %v911 = vmul.f32 %v766, %v844
        %v912 = vmul.f32 %v767, %v844
        %v913 = vmul.f32 %v768, %v844
        %v914 = vmul.f32 %v769, %v844
        %v915 = vmul.f32 %v770, %v844
        %v916 = vmul.f32 %v771, %v844
        %v917 = vmul.f32 %v772, %v844
        %v918 = vmul.f32 %v773, %v844
        %v919 = vmul.f32 %v774, %v844
        %v920 = vmul.f32 %v775, %v844
        %v921 = vmul.f32 %v776, %v844
        %v922 = vmul.f32 %v777, %v844
        %v923 = vmul.f32 %v778, %v844
        %v924 = vmul.f32 %v779, %v844
        %v925 = vmul.f32 %v780, %v844
        %v926 = vmul.f32 %v781, %v844
        %v927 = vmul.f32 %v782, %v844
        %v928 = vmul.f32 %v783, %v844
        %v929 = vmul.f32 %v784, %v844
        %v930 = vmul.f32 %v785, %v844
        %v931 = vmul.f32 %v786, %v844
        %v932 = vmul.f32 %v787, %v844
        %v933 = vmul.f32 %v788, %v844
        %v934 = vmul.f32 %v789, %v844
        %v935 = vmul.f32 %v790, %v844
        %v936 = vmul.f32 %v791, %v844
        %v937 = vmul.f32 %v792, %v844
        %v938 = vmul.f32 %v793, %v844
        %v939 = vmul.f32 %v794, %v844
        %v940 = vmul.f32 %v795, %v844
        %v941 = vmul.f32 %v796, %v844
        %v942 = vmul.f32 %v797, %v844
        %v943 = vmul.f32 %v798, %v844
        %v944 = vmul.f32 %v799, %v844
        %v945 = vmul.f32 %v800, %v844
        %v946 = vmul.f32 %v801, %v844
        %v947 = vmul.f32 %v802, %v844
        %v948 = vmul.f32 %v803, %v844
        %v949 = vmul.f32 %v804, %v844
        %v950 = vmul.f32 %v805, %v844
        %v951 = vmul.f32 %v806, %v844
        %v952 = vmul.f32 %v807, %v844
        %v953 = vmul.f32 %v808, %v844
        %v954 = vmul.f32 %v809, %v844
        %v955 = vmul.f32 %v810, %v844
        %v956 = vmul.f32 %v811, %v844
        %v957 = vmul.f32 %v812, %v844
        %v958 = vmul.f32 %v813, %v844
        %v959 = vmul.f32 %v814, %v844
        %v960 = vmul.f32 %v815, %v844
        %v961 = vmul.f32 %v816, %v844
        %v962 = vmul.f32 %v817, %v844
        %v963 = vmul.f32 %v818, %v844
        %v964 = vmul.f32 %v819, %v844
        %v965 = vmul.f32 %v820, %v844
        %v966 = vmul.f32 %v821, %v844
        %v967 = vmul.f32 %v822, %v844
        %v968 = vmul.f32 %v823, %v844
        %v969 = vmul.f32 %v824, %v844
        %v970 = vmul.f32 %v825, %v844
        %v971 = vmul.f32 %v826, %v844
        %v972 = vmul.f32 %v827, %v844
        %v973 = vmul.f32 %v828, %v844
        %v974 = vmul.f32 %v829, %v844
        %v975 = vmul.f32 %v830, %v844
        %v976 = vmul.f32 %v831, %v844
        %v977 = vmul.f32 %v832, %v844
        %v978 = vmul.f32 %v833, %v844
        %v979 = vmul.f32 %v834, %v844
        %v980 = vmul.f32 %v835, %v844
        %v981 = vmul.f32 %v836, %v844
        %v982 = vmul.f32 %v837, %v844
        %v983 = vmul.f32 %v838, %v844
        %v984 = vmul.f32 %v839, %v844
        %v985 = vmul.f32 %v840, %v844
        %v986 = vmul.f32 %v841, %v844
        %v987 = vmul.f32 %v842, %v844
        %v988 = vmul.f32 %v843, %v844
        %v989 = vpack.c.bf16 %v845, %v845
        %v990 = vpack.c.bf16 %v846, %v846
        %v991 = vpack.c.bf16 %v847, %v847
        %v992 = vpack.c.bf16 %v848, %v848
        %v993 = vpack.c.bf16 %v849, %v849
        %v994 = vpack.c.bf16 %v850, %v850
        %v995 = vpack.c.bf16 %v851, %v851
        %v996 = vpack.c.bf16 %v852, %v852
        %v997 = vpack.c.bf16 %v853, %v853
        %v998 = vpack.c.bf16 %v854, %v854
        %v999 = vpack.c.bf16 %v855, %v855
        %v1000 = vpack.c.bf16 %v856, %v856
        %v1001 = vpack.c.bf16 %v857, %v857
        %v1002 = vpack.c.bf16 %v858, %v858
        %v1003 = vpack.c.bf16 %v859, %v859
        %v1004 = vpack.c.bf16 %v860, %v860
        %v1005 = vpack.c.bf16 %v861, %v861
        %v1006 = vpack.c.bf16 %v862, %v862
        %v1007 = vpack.c.bf16 %v863, %v863
        %v1008 = vpack.c.bf16 %v864, %v864
        %v1009 = vpack.c.bf16 %v865, %v865
        %v1010 = vpack.c.bf16 %v866, %v866
        %v1011 = vpack.c.bf16 %v867, %v867
        %v1012 = vpack.c.bf16 %v868, %v868
        %v1013 = vpack.c.bf16 %v869, %v869
        %v1014 = vpack.c.bf16 %v870, %v870
        %v1015 = vpack.c.bf16 %v871, %v871
        %v1016 = vpack.c.bf16 %v872, %v872
        %v1017 = vpack.c.bf16 %v873, %v873
        %v1018 = vpack.c.bf16 %v874, %v874
        %v1019 = vpack.c.bf16 %v875, %v875
        %v1020 = vpack.c.bf16 %v876, %v876
        %v1021 = vpack.c.bf16 %v877, %v877
        %v1022 = vpack.c.bf16 %v878, %v878
        %v1023 = vpack.c.bf16 %v879, %v879
        %v1024 = vpack.c.bf16 %v880, %v880
        %v1025 = vpack.c.bf16 %v881, %v881
        %v1026 = vpack.c.bf16 %v882, %v882
        %v1027 = vpack.c.bf16 %v883, %v883
        %v1028 = vpack.c.bf16 %v884, %v884
        %v1029 = vpack.c.bf16 %v885, %v885
        %v1030 = vpack.c.bf16 %v886, %v886
        %v1031 = vpack.c.bf16 %v887, %v887
        %v1032 = vpack.c.bf16 %v888, %v888
        %v1033 = vpack.c.bf16 %v889, %v889
        %v1034 = vpack.c.bf16 %v890, %v890
        %v1035 = vpack.c.bf16 %v891, %v891
        %v1036 = vpack.c.bf16 %v892, %v892
        %v1037 = vpack.c.bf16 %v893, %v893
        %v1038 = vpack.c.bf16 %v894, %v894
        %v1039 = vpack.c.bf16 %v895, %v895
        %v1040 = vpack.c.bf16 %v896, %v896
        %v1041 = vpack.c.bf16 %v897, %v897
        %v1042 = vpack.c.bf16 %v898, %v898
        %v1043 = vpack.c.bf16 %v899, %v899
        %v1044 = vpack.c.bf16 %v900, %v900
        %v1045 = vpack.c.bf16 %v901, %v901
        %v1046 = vpack.c.bf16 %v902, %v902
        %v1047 = vpack.c.bf16 %v903, %v903
        %v1048 = vpack.c.bf16 %v904, %v904
        %v1049 = vpack.c.bf16 %v905, %v905
        %v1050 = vpack.c.bf16 %v906, %v906
        %v1051 = vpack.c.bf16 %v907, %v907
        %v1052 = vpack.c.bf16 %v908, %v908
        %v1053 = vpack.c.bf16 %v909, %v909
        %v1054 = vpack.c.bf16 %v910, %v910
        %v1055 = vpack.c.bf16 %v911, %v911
        %v1056 = vpack.c.bf16 %v912, %v912
        %v1057 = vpack.c.bf16 %v913, %v913
        %v1058 = vpack.c.bf16 %v914, %v914
        %v1059 = vpack.c.bf16 %v915, %v915
        %v1060 = vpack.c.bf16 %v916, %v916
        %v1061 = vpack.c.bf16 %v917, %v917
        %v1062 = vpack.c.bf16 %v918, %v918
        %v1063 = vpack.c.bf16 %v919, %v919
        %v1064 = vpack.c.bf16 %v920, %v920
        %v1065 = vpack.c.bf16 %v921, %v921
        %v1066 = vpack.c.bf16 %v922, %v922
        %v1067 = vpack.c.bf16 %v923, %v923
        %v1068 = vpack.c.bf16 %v924, %v924
        %v1069 = vpack.c.bf16 %v925, %v925
        %v1070 = vpack.c.bf16 %v926, %v926
        %v1071 = vpack.c.bf16 %v927, %v927
        %v1072 = vpack.c.bf16 %v928, %v928
        %v1073 = vpack.c.bf16 %v929, %v929
        %v1074 = vpack.c.bf16 %v930, %v930
        %v1075 = vpack.c.bf16 %v931, %v931
        %v1076 = vpack.c.bf16 %v932, %v932
        %v1077 = vpack.c.bf16 %v933, %v933
        %v1078 = vpack.c.bf16 %v934, %v934
        %v1079 = vpack.c.bf16 %v935, %v935
        %v1080 = vpack.c.bf16 %v936, %v936
        %v1081 = vpack.c.bf16 %v937, %v937
        %v1082 = vpack.c.bf16 %v938, %v938
        %v1083 = vpack.c.bf16 %v939, %v939
        %v1084 = vpack.c.bf16 %v940, %v940
        %v1085 = vpack.c.bf16 %v941, %v941
        %v1086 = vpack.c.bf16 %v942, %v942
        %v1087 = vpack.c.bf16 %v943, %v943
        %v1088 = vpack.c.bf16 %v944, %v944
        %v1089 = vpack.c.bf16 %v945, %v945
        %v1090 = vpack.c.bf16 %v946, %v946
        %v1091 = vpack.c.bf16 %v947, %v947
        %v1092 = vpack.c.bf16 %v948, %v948
        %v1093 = vpack.c.bf16 %v949, %v949
        %v1094 = vpack.c.bf16 %v950, %v950
        %v1095 = vpack.c.bf16 %v951, %v951
        %v1096 = vpack.c.bf16 %v952, %v952
        %v1097 = vpack.c.bf16 %v953, %v953
        %v1098 = vpack.c.bf16 %v954, %v954
        %v1099 = vpack.c.bf16 %v955, %v955
        %v1100 = vpack.c.bf16 %v956, %v956
        %v1101 = vpack.c.bf16 %v957, %v957
        %v1102 = vpack.c.bf16 %v958, %v958
        %v1103 = vpack.c.bf16 %v959, %v959
        %v1104 = vpack.c.bf16 %v960, %v960
        %v1105 = vpack.c.bf16 %v961, %v961
        %v1106 = vpack.c.bf16 %v962, %v962
        %v1107 = vpack.c.bf16 %v963, %v963
        %v1108 = vpack.c.bf16 %v964, %v964
        %v1109 = vpack.c.bf16 %v965, %v965
        %v1110 = vpack.c.bf16 %v966, %v966
        %v1111 = vpack.c.bf16 %v967, %v967
        %v1112 = vpack.c.bf16 %v968, %v968
        %v1113 = vpack.c.bf16 %v969, %v969
        %v1114 = vpack.c.bf16 %v970, %v970
        %v1115 = vpack.c.bf16 %v971, %v971
        %v1116 = vpack.c.bf16 %v972, %v972
        %v1117 = vpack.c.bf16 %v973, %v973
        %v1118 = vpack.c.bf16 %v974, %v974
        %v1119 = vpack.c.bf16 %v975, %v975
        %v1120 = vpack.c.bf16 %v976, %v976
        %v1121 = vpack.c.bf16 %v977, %v977
        %v1122 = vpack.c.bf16 %v978, %v978
        %v1123 = vpack.c.bf16 %v979, %v979
        %v1124 = vpack.c.bf16 %v980, %v980
        %v1125 = vpack.c.bf16 %v981, %v981
        %v1126 = vpack.c.bf16 %v982, %v982
        %v1127 = vpack.c.bf16 %v983, %v983
        %v1128 = vpack.c.bf16 %v984, %v984
        %v1129 = vpack.c.bf16 %v985, %v985
        %v1130 = vpack.c.bf16 %v986, %v986
        %v1131 = vpack.c.bf16 %v987, %v987
        %v1132 = vpack.c.bf16 %v988, %v988
        %v1133 = vld [vmem:[%s366] sm:$0xf]
        %v1134 = vld [vmem:[%s366 + $0x4] sm:$0x1]
        %v1135 = vld [vmem:[%s366 + $0x8] sm:$0xf]
        %v1136 = vld [vmem:[%s366 + $0xc] sm:$0x1]
        %v1137 = vld [vmem:[%s366 + $0x10] sm:$0xf]
        %v1138 = vld [vmem:[%s366 + $0x14] sm:$0x1]
        %v1139 = vld [vmem:[%s366 + $0x18] sm:$0xf]
        %v1140 = vld [vmem:[%s366 + $0x1c] sm:$0x1]
        %v1141 = vld [vmem:[%s366 + $0x20] sm:$0xf]
        %v1142 = vld [vmem:[%s366 + $0x24] sm:$0x1]
        %v1143 = vld [vmem:[%s366 + $0x28] sm:$0xf]
        %v1144 = vld [vmem:[%s366 + $0x2c] sm:$0x1]
        %v1145 = vld [vmem:[%s366 + $0x30] sm:$0xf]
        %v1146 = vld [vmem:[%s366 + $0x34] sm:$0x1]
        %v1147 = vld [vmem:[%s366 + $0x38] sm:$0xf]
        %v1148 = vld [vmem:[%s366 + $0x3c] sm:$0x1]
        %v1149 = vld [vmem:[%s366 + $0x40] sm:$0xf]
        %v1150 = vld [vmem:[%s366 + $0x44] sm:$0x1]
        %v1151 = vld [vmem:[%s366 + $0x48] sm:$0xf]
        %v1152 = vld [vmem:[%s366 + $0x4c] sm:$0x1]
        %v1153 = vld [vmem:[%s375] sm:$0xf]
        %v1154 = vld [vmem:[%s375 + $0x4] sm:$0x1]
        %v1155 = vld [vmem:[%s375 + $0x8] sm:$0xf]
        %v1156 = vld [vmem:[%s375 + $0xc] sm:$0x1]
        %v1157 = vld [vmem:[%s375 + $0x10] sm:$0xf]
        %v1158 = vld [vmem:[%s375 + $0x14] sm:$0x1]
        %v1159 = vld [vmem:[%s375 + $0x18] sm:$0xf]
        %v1160 = vld [vmem:[%s375 + $0x1c] sm:$0x1]
        %v1161 = vld [vmem:[%s375 + $0x20] sm:$0xf]
        %v1162 = vld [vmem:[%s375 + $0x24] sm:$0x1]
        %v1163 = vld [vmem:[%s375 + $0x28] sm:$0xf]
        %v1164 = vld [vmem:[%s375 + $0x2c] sm:$0x1]
        %v1165 = vld [vmem:[%s375 + $0x30] sm:$0xf]
        %v1166 = vld [vmem:[%s375 + $0x34] sm:$0x1]
        %v1167 = vld [vmem:[%s375 + $0x38] sm:$0xf]
        %v1168 = vld [vmem:[%s375 + $0x3c] sm:$0x1]
        %v1169 = vld [vmem:[%s375 + $0x40] sm:$0xf]
        %v1170 = vld [vmem:[%s375 + $0x44] sm:$0x1]
        %s1171 = scalar_lea.vmem %s375, 72
        %v1172 = vld [vmem:[%s1171] sm:$0xf]
        %v1173 = vld [vmem:[%s1171 + $0x4] sm:$0x1]
        %v1174 = vld [vmem:[%s1171 + $0x8] sm:$0xf]
        %v1175 = vld [vmem:[%s1171 + $0xc] sm:$0x1]
        %v1176 = vld [vmem:[%s1171 + $0x10] sm:$0xf]
        %v1177 = vld [vmem:[%s1171 + $0x14] sm:$0x1]
        %v1178 = vld [vmem:[%s1171 + $0x18] sm:$0xf]
        %v1179 = vld [vmem:[%s1171 + $0x1c] sm:$0x1]
        %v1180 = vld [vmem:[%s1171 + $0x20] sm:$0xf]
        %v1181 = vld [vmem:[%s1171 + $0x24] sm:$0x1]
        %v1182 = vld [vmem:[%s1171 + $0x28] sm:$0xf]
        %v1183 = vld [vmem:[%s1171 + $0x2c] sm:$0x1]
        %v1184 = vld [vmem:[%s1171 + $0x30] sm:$0xf]
        %v1185 = vld [vmem:[%s1171 + $0x34] sm:$0x1]
        %v1186 = vld [vmem:[%s1171 + $0x38] sm:$0xf]
        %v1187 = vld [vmem:[%s1171 + $0x3c] sm:$0x1]
        %v1188 = vld [vmem:[%s1171 + $0x40] sm:$0xf]
        %v1189 = vld [vmem:[%s1171 + $0x44] sm:$0x1]
        %s1190 = scalar_lea.vmem %s375, 144
        %v1191 = vld [vmem:[%s1190] sm:$0xf]
        %v1192 = vld [vmem:[%s1190 + $0x4] sm:$0x1]
        %v1193 = vld [vmem:[%s1190 + $0x8] sm:$0xf]
        %v1194 = vld [vmem:[%s1190 + $0xc] sm:$0x1]
        %v1195 = vld [vmem:[%s1190 + $0x10] sm:$0xf]
        %v1196 = vld [vmem:[%s1190 + $0x14] sm:$0x1]
        %v1197 = vld [vmem:[%s1190 + $0x18] sm:$0xf]
        %v1198 = vld [vmem:[%s1190 + $0x1c] sm:$0x1]
        %v1199 = vld [vmem:[%s1190 + $0x20] sm:$0xf]
        %v1200 = vld [vmem:[%s1190 + $0x24] sm:$0x1]
        %v1201 = vld [vmem:[%s1190 + $0x28] sm:$0xf]
        %v1202 = vld [vmem:[%s1190 + $0x2c] sm:$0x1]
        %v1203 = vld [vmem:[%s1190 + $0x30] sm:$0xf]
        %v1204 = vld [vmem:[%s1190 + $0x34] sm:$0x1]
        %v1205 = vld [vmem:[%s1190 + $0x38] sm:$0xf]
        %v1206 = vld [vmem:[%s1190 + $0x3c] sm:$0x1]
        %v1207 = vld [vmem:[%s1190 + $0x40] sm:$0xf]
        %v1208 = vld [vmem:[%s1190 + $0x44] sm:$0x1]
        %s1209 = scalar_lea.vmem %s375, 216
        %v1210 = vld [vmem:[%s1209] sm:$0xf]
        %v1211 = vld [vmem:[%s1209 + $0x4] sm:$0x1]
        %v1212 = vld [vmem:[%s1209 + $0x8] sm:$0xf]
        %v1213 = vld [vmem:[%s1209 + $0xc] sm:$0x1]
        %v1214 = vld [vmem:[%s1209 + $0x10] sm:$0xf]
        %v1215 = vld [vmem:[%s1209 + $0x14] sm:$0x1]
        %v1216 = vld [vmem:[%s1209 + $0x18] sm:$0xf]
        %v1217 = vld [vmem:[%s1209 + $0x1c] sm:$0x1]
        %v1218 = vld [vmem:[%s1209 + $0x20] sm:$0xf]
        %v1219 = vld [vmem:[%s1209 + $0x24] sm:$0x1]
        %v1220 = vld [vmem:[%s1209 + $0x28] sm:$0xf]
        %v1221 = vld [vmem:[%s1209 + $0x2c] sm:$0x1]
        %v1222 = vld [vmem:[%s1209 + $0x30] sm:$0xf]
        %v1223 = vld [vmem:[%s1209 + $0x34] sm:$0x1]
        %v1224 = vld [vmem:[%s1209 + $0x38] sm:$0xf]
        %v1225 = vld [vmem:[%s1209 + $0x3c] sm:$0x1]
        %v1226 = vld [vmem:[%s1209 + $0x40] sm:$0xf]
        %v1227 = vld [vmem:[%s1209 + $0x44] sm:$0x1]
        %v1236 = vunpack.c.l.b16 %v1172
        %v1237 = vunpack.c.l.b16 %v1174
        %v1238 = vunpack.c.l.b16 %v1176
        %v1239 = vunpack.c.l.b16 %v1178
        %v1240 = vunpack.c.l.b16 %v1180
        %v1241 = vunpack.c.l.b16 %v1182
        %v1242 = vunpack.c.l.b16 %v1184
        %v1243 = vunpack.c.l.b16 %v1186
        %v1244 = vpack.c.b16 %v1237, %v1236
        %v1245 = vpack.c.b16 %v1239, %v1238
        %v1246 = vpack.c.b16 %v1241, %v1240
        %v1247 = vpack.c.b16 %v1243, %v1242
        %v1268 = vunpack.c.l.b16 %v1005
        %v1269 = vunpack.c.l.b16 %v1006
        %v1270 = vunpack.c.l.b16 %v1007
        %v1271 = vunpack.c.l.b16 %v1008
        %v1272 = vunpack.c.l.b16 %v1009
        %v1273 = vunpack.c.l.b16 %v1010
        %v1274 = vunpack.c.l.b16 %v1011
        %v1275 = vunpack.c.l.b16 %v1012
        %v1276 = vunpack.c.l.b16 %v1013
        %v1277 = vunpack.c.l.b16 %v1014
        %v1278 = vunpack.c.l.b16 %v1015
        %v1279 = vunpack.c.l.b16 %v1016
        %v1280 = vunpack.c.l.b16 %v1017
        %v1281 = vunpack.c.l.b16 %v1018
        %v1282 = vunpack.c.l.b16 %v1019
        %v1283 = vunpack.c.l.b16 %v1020
        %v1284 = vpack.c.b16 %v1269, %v1268
        %v1285 = vpack.c.b16 %v1271, %v1270
        %v1286 = vpack.c.b16 %v1273, %v1272
        %v1287 = vpack.c.b16 %v1275, %v1274
        %v1288 = vpack.c.b16 %v1277, %v1276
        %v1289 = vpack.c.b16 %v1279, %v1278
        %v1290 = vpack.c.b16 %v1281, %v1280
        %v1291 = vpack.c.b16 %v1283, %v1282
        %1300 = vmatpush.bf16.msra.mxu0 %v1291
        %1301 = vmatpush.bf16.msra.mxu0 %v1290
        %1302 = vmatpush.bf16.msra.mxu0 %v1289
        %1303 = vmatpush.bf16.msra.mxu0 %v1288
        %1304 = vmatpush.bf16.msra.mxu0 %v1287
        %1305 = vmatpush.bf16.msra.mxu0 %v1286
        %1306 = vmatpush.bf16.msra.mxu0 %v1285
        %1307 = vmatpush.bf16.msra.mxu0 %v1284
        %1308 = vmatmul.bf16.gmra.mxu0 %v1244
        %v1309 = vpop.f32.mrf.mxu0
        %v1310 = vadd.f32 0.0, %v1309
        %v1311 = vpop.f32.mrf.mxu0
        %v1312 = vadd.f32 0.0, %v1311
        %1313 = vmatmul.bf16.gmra.mxu0 %v1245
        %v1314 = vpop.f32.mrf.mxu0
        %v1315 = vadd.f32 0.0, %v1314
        %v1316 = vpop.f32.mrf.mxu0
        %v1317 = vadd.f32 0.0, %v1316
        %1318 = vmatmul.bf16.gmra.mxu0 %v1246
        %v1319 = vpop.f32.mrf.mxu0
        %v1320 = vadd.f32 0.0, %v1319
        %v1321 = vpop.f32.mrf.mxu0
        %v1322 = vadd.f32 0.0, %v1321
        %1323 = vmatmul.bf16.gmra.mxu0 %v1247
        %v1324 = vpop.f32.mrf.mxu0
        %v1325 = vadd.f32 0.0, %v1324
        %v1326 = vpop.f32.mrf.mxu0
        %v1327 = vadd.f32 0.0, %v1326
        %1328 = vdwg.mxu0
        %v1337 = vunpack.c.l.b16 %v1153
        %v1338 = vunpack.c.l.b16 %v1155
        %v1339 = vunpack.c.l.b16 %v1157
        %v1340 = vunpack.c.l.b16 %v1159
        %v1341 = vunpack.c.l.b16 %v1161
        %v1342 = vunpack.c.l.b16 %v1163
        %v1343 = vunpack.c.l.b16 %v1165
        %v1344 = vunpack.c.l.b16 %v1167
        %v1345 = vpack.c.b16 %v1338, %v1337
        %v1346 = vpack.c.b16 %v1340, %v1339
        %v1347 = vpack.c.b16 %v1342, %v1341
        %v1348 = vpack.c.b16 %v1344, %v1343
        %v1369 = vunpack.c.l.b16 %v989
        %v1370 = vunpack.c.l.b16 %v990
        %v1371 = vunpack.c.l.b16 %v991
        %v1372 = vunpack.c.l.b16 %v992
        %v1373 = vunpack.c.l.b16 %v993
        %v1374 = vunpack.c.l.b16 %v994
        %v1375 = vunpack.c.l.b16 %v995
        %v1376 = vunpack.c.l.b16 %v996
        %v1377 = vunpack.c.l.b16 %v997
        %v1378 = vunpack.c.l.b16 %v998
        %v1379 = vunpack.c.l.b16 %v999
        %v1380 = vunpack.c.l.b16 %v1000
        %v1381 = vunpack.c.l.b16 %v1001
        %v1382 = vunpack.c.l.b16 %v1002
        %v1383 = vunpack.c.l.b16 %v1003
        %v1384 = vunpack.c.l.b16 %v1004
        %v1385 = vpack.c.b16 %v1370, %v1369
        %v1386 = vpack.c.b16 %v1372, %v1371
        %v1387 = vpack.c.b16 %v1374, %v1373
        %v1388 = vpack.c.b16 %v1376, %v1375
        %v1389 = vpack.c.b16 %v1378, %v1377
        %v1390 = vpack.c.b16 %v1380, %v1379
        %v1391 = vpack.c.b16 %v1382, %v1381
        %v1392 = vpack.c.b16 %v1384, %v1383
        %1401 = vmatpush.bf16.msra.mxu0 %v1392
        %1402 = vmatpush.bf16.msra.mxu0 %v1391
        %1403 = vmatpush.bf16.msra.mxu0 %v1390
        %1404 = vmatpush.bf16.msra.mxu0 %v1389
        %1405 = vmatpush.bf16.msra.mxu0 %v1388
        %1406 = vmatpush.bf16.msra.mxu0 %v1387
        %1407 = vmatpush.bf16.msra.mxu0 %v1386
        %1408 = vmatpush.bf16.msra.mxu0 %v1385
        %1409 = vmatmul.bf16.gmra.mxu0 %v1345
        %v1410 = vpop.f32.mrf.mxu0
        %v1411 = vadd.f32 %v1310, %v1410
        %v1412 = vpop.f32.mrf.mxu0
        %v1413 = vadd.f32 %v1312, %v1412
        %1414 = vmatmul.bf16.gmra.mxu0 %v1346
        %v1415 = vpop.f32.mrf.mxu0
        %v1416 = vadd.f32 %v1315, %v1415
        %v1417 = vpop.f32.mrf.mxu0
        %v1418 = vadd.f32 %v1317, %v1417
        %1419 = vmatmul.bf16.gmra.mxu0 %v1347
        %v1420 = vpop.f32.mrf.mxu0
        %v1421 = vadd.f32 %v1320, %v1420
        %v1422 = vpop.f32.mrf.mxu0
        %v1423 = vadd.f32 %v1322, %v1422
        %1424 = vmatmul.bf16.gmra.mxu0 %v1348
        %v1425 = vpop.f32.mrf.mxu0
        %v1426 = vadd.f32 %v1325, %v1425
        %v1427 = vpop.f32.mrf.mxu0
        %v1428 = vadd.f32 %v1327, %v1427
        %1429 = vdwg.mxu0
        %vm1430 = vsmask.f32 3328
        %vm1431 = vsmask.f32 7440
        %vm1432 = vmor %vm1430, %vm1431
        %v1434 = vshrl.u32 %v1153, 16
        %v1436 = vrot.slane %v1434, 4
        %v1437 = vshll.u32 %v1153, 16
        %v1439 = vrot.slane %v1437, 5
        %v1440 = vor.u32 %v1436, %v1439
        %v1441 = vrot.slane %v1440, 4
        %v1443 = vshll.u32 %v1154, 16
        %v1445 = vrot.slane %v1443, 5
        %v1446 = vsel %vm1432, %v1441, %v1445
        %v1448 = vshrl.u32 %v1155, 16
        %v1450 = vrot.slane %v1448, 4
        %v1451 = vshll.u32 %v1155, 16
        %v1453 = vrot.slane %v1451, 5
        %v1454 = vor.u32 %v1450, %v1453
        %v1455 = vrot.slane %v1454, 4
        %v1457 = vshll.u32 %v1156, 16
        %v1459 = vrot.slane %v1457, 5
        %v1460 = vsel %vm1432, %v1455, %v1459
        %v1462 = vshrl.u32 %v1157, 16
        %v1464 = vrot.slane %v1462, 4
        %v1465 = vshll.u32 %v1157, 16
        %v1467 = vrot.slane %v1465, 5
        %v1468 = vor.u32 %v1464, %v1467
        %v1469 = vrot.slane %v1468, 4
        %v1471 = vshll.u32 %v1158, 16
        %v1473 = vrot.slane %v1471, 5
        %v1474 = vsel %vm1432, %v1469, %v1473
        %v1476 = vshrl.u32 %v1159, 16
        %v1478 = vrot.slane %v1476, 4
        %v1479 = vshll.u32 %v1159, 16
        %v1481 = vrot.slane %v1479, 5
        %v1482 = vor.u32 %v1478, %v1481
        %v1483 = vrot.slane %v1482, 4
        %v1485 = vshll.u32 %v1160, 16
        %v1487 = vrot.slane %v1485, 5
        %v1488 = vsel %vm1432, %v1483, %v1487
        %v1490 = vshrl.u32 %v1161, 16
        %v1492 = vrot.slane %v1490, 4
        %v1493 = vshll.u32 %v1161, 16
        %v1495 = vrot.slane %v1493, 5
        %v1496 = vor.u32 %v1492, %v1495
        %v1497 = vrot.slane %v1496, 4
        %v1499 = vshll.u32 %v1162, 16
        %v1501 = vrot.slane %v1499, 5
        %v1502 = vsel %vm1432, %v1497, %v1501
        %v1504 = vshrl.u32 %v1163, 16
        %v1506 = vrot.slane %v1504, 4
        %v1507 = vshll.u32 %v1163, 16
        %v1509 = vrot.slane %v1507, 5
        %v1510 = vor.u32 %v1506, %v1509
        %v1511 = vrot.slane %v1510, 4
        %v1513 = vshll.u32 %v1164, 16
        %v1515 = vrot.slane %v1513, 5
        %v1516 = vsel %vm1432, %v1511, %v1515
        %v1518 = vshrl.u32 %v1165, 16
        %v1520 = vrot.slane %v1518, 4
        %v1521 = vshll.u32 %v1165, 16
        %v1523 = vrot.slane %v1521, 5
        %v1524 = vor.u32 %v1520, %v1523
        %v1525 = vrot.slane %v1524, 4
        %v1527 = vshll.u32 %v1166, 16
        %v1529 = vrot.slane %v1527, 5
        %v1530 = vsel %vm1432, %v1525, %v1529
        %v1532 = vshrl.u32 %v1167, 16
        %v1534 = vrot.slane %v1532, 4
        %v1535 = vshll.u32 %v1167, 16
        %v1537 = vrot.slane %v1535, 5
        %v1538 = vor.u32 %v1534, %v1537
        %v1539 = vrot.slane %v1538, 4
        %v1541 = vshll.u32 %v1168, 16
        %v1543 = vrot.slane %v1541, 5
        %v1544 = vsel %vm1432, %v1539, %v1543
        %v1545 = vunpack.c.l.b16 %v1446
        %v1546 = vunpack.c.l.b16 %v1460
        %v1547 = vunpack.c.l.b16 %v1474
        %v1548 = vunpack.c.l.b16 %v1488
        %v1549 = vunpack.c.l.b16 %v1502
        %v1550 = vunpack.c.l.b16 %v1516
        %v1551 = vunpack.c.l.b16 %v1530
        %v1552 = vunpack.c.l.b16 %v1544
        %v1553 = vpack.c.b16 %v1546, %v1545
        %v1554 = vpack.c.b16 %v1548, %v1547
        %v1555 = vpack.c.b16 %v1550, %v1549
        %v1556 = vpack.c.b16 %v1552, %v1551
        %v1577 = vunpack.c.l.b16 %v1021
        %v1578 = vunpack.c.l.b16 %v1022
        %v1579 = vunpack.c.l.b16 %v1023
        %v1580 = vunpack.c.l.b16 %v1024
        %v1581 = vunpack.c.l.b16 %v1025
        %v1582 = vunpack.c.l.b16 %v1026
        %v1583 = vunpack.c.l.b16 %v1027
        %v1584 = vunpack.c.l.b16 %v1028
        %v1585 = vunpack.c.l.b16 %v1029
        %v1586 = vunpack.c.l.b16 %v1030
        %v1587 = vunpack.c.l.b16 %v1031
        %v1588 = vunpack.c.l.b16 %v1032
        %v1589 = vunpack.c.l.b16 %v1033
        %v1590 = vunpack.c.l.b16 %v1034
        %v1591 = vunpack.c.l.b16 %v1035
        %v1592 = vunpack.c.l.b16 %v1036
        %v1593 = vpack.c.b16 %v1578, %v1577
        %v1594 = vpack.c.b16 %v1580, %v1579
        %v1595 = vpack.c.b16 %v1582, %v1581
        %v1596 = vpack.c.b16 %v1584, %v1583
        %v1597 = vpack.c.b16 %v1586, %v1585
        %v1598 = vpack.c.b16 %v1588, %v1587
        %v1599 = vpack.c.b16 %v1590, %v1589
        %v1600 = vpack.c.b16 %v1592, %v1591
        %1609 = vmatpush.bf16.msra.mxu0 %v1600
        %1610 = vmatpush.bf16.msra.mxu0 %v1599
        %1611 = vmatpush.bf16.msra.mxu0 %v1598
        %1612 = vmatpush.bf16.msra.mxu0 %v1597
        %1613 = vmatpush.bf16.msra.mxu0 %v1596
        %1614 = vmatpush.bf16.msra.mxu0 %v1595
        %1615 = vmatpush.bf16.msra.mxu0 %v1594
        %1616 = vmatpush.bf16.msra.mxu0 %v1593
        %1617 = vmatmul.bf16.gmra.mxu0 %v1553
        %v1618 = vpop.f32.mrf.mxu0
        %v1619 = vadd.f32 0.0, %v1618
        %v1620 = vpop.f32.mrf.mxu0
        %v1621 = vadd.f32 0.0, %v1620
        %1622 = vmatmul.bf16.gmra.mxu0 %v1554
        %v1623 = vpop.f32.mrf.mxu0
        %v1624 = vadd.f32 0.0, %v1623
        %v1625 = vpop.f32.mrf.mxu0
        %v1626 = vadd.f32 0.0, %v1625
        %1627 = vmatmul.bf16.gmra.mxu0 %v1555
        %v1628 = vpop.f32.mrf.mxu0
        %v1629 = vadd.f32 0.0, %v1628
        %v1630 = vpop.f32.mrf.mxu0
        %v1631 = vadd.f32 0.0, %v1630
        %1632 = vmatmul.bf16.gmra.mxu0 %v1556
        %v1633 = vpop.f32.mrf.mxu0
        %v1634 = vadd.f32 0.0, %v1633
        %v1635 = vpop.f32.mrf.mxu0
        %v1636 = vadd.f32 0.0, %v1635
        %1637 = vdwg.mxu0
        %v1638 = vadd.f32 %v1411, %v1619
        %v1639 = vadd.f32 %v1413, %v1621
        %v1640 = vadd.f32 %v1416, %v1624
        %v1641 = vadd.f32 %v1418, %v1626
        %v1642 = vadd.f32 %v1421, %v1629
        %v1643 = vadd.f32 %v1423, %v1631
        %v1644 = vadd.f32 %v1426, %v1634
        %v1645 = vadd.f32 %v1428, %v1636
        %v1654 = vunpack.c.l.b16 %v1191
        %v1655 = vunpack.c.l.b16 %v1193
        %v1656 = vunpack.c.l.b16 %v1195
        %v1657 = vunpack.c.l.b16 %v1197
        %v1658 = vunpack.c.l.b16 %v1199
        %v1659 = vunpack.c.l.b16 %v1201
        %v1660 = vunpack.c.l.b16 %v1203
        %v1661 = vunpack.c.l.b16 %v1205
        %v1662 = vpack.c.b16 %v1655, %v1654
        %v1663 = vpack.c.b16 %v1657, %v1656
        %v1664 = vpack.c.b16 %v1659, %v1658
        %v1665 = vpack.c.b16 %v1661, %v1660
        %v1686 = vunpack.c.l.b16 %v1037
        %v1687 = vunpack.c.l.b16 %v1038
        %v1688 = vunpack.c.l.b16 %v1039
        %v1689 = vunpack.c.l.b16 %v1040
        %v1690 = vunpack.c.l.b16 %v1041
        %v1691 = vunpack.c.l.b16 %v1042
        %v1692 = vunpack.c.l.b16 %v1043
        %v1693 = vunpack.c.l.b16 %v1044
        %v1694 = vunpack.c.l.b16 %v1045
        %v1695 = vunpack.c.l.b16 %v1046
        %v1696 = vunpack.c.l.b16 %v1047
        %v1697 = vunpack.c.l.b16 %v1048
        %v1698 = vunpack.c.l.b16 %v1049
        %v1699 = vunpack.c.l.b16 %v1050
        %v1700 = vunpack.c.l.b16 %v1051
        %v1701 = vunpack.c.l.b16 %v1052
        %v1702 = vpack.c.b16 %v1687, %v1686
        %v1703 = vpack.c.b16 %v1689, %v1688
        %v1704 = vpack.c.b16 %v1691, %v1690
        %v1705 = vpack.c.b16 %v1693, %v1692
        %v1706 = vpack.c.b16 %v1695, %v1694
        %v1707 = vpack.c.b16 %v1697, %v1696
        %v1708 = vpack.c.b16 %v1699, %v1698
        %v1709 = vpack.c.b16 %v1701, %v1700
        %1718 = vmatpush.bf16.msra.mxu0 %v1709
        %1719 = vmatpush.bf16.msra.mxu0 %v1708
        %1720 = vmatpush.bf16.msra.mxu0 %v1707
        %1721 = vmatpush.bf16.msra.mxu0 %v1706
        %1722 = vmatpush.bf16.msra.mxu0 %v1705
        %1723 = vmatpush.bf16.msra.mxu0 %v1704
        %1724 = vmatpush.bf16.msra.mxu0 %v1703
        %1725 = vmatpush.bf16.msra.mxu0 %v1702
        %1726 = vmatmul.bf16.gmra.mxu0 %v1662
        %v1727 = vpop.f32.mrf.mxu0
        %v1728 = vadd.f32 0.0, %v1727
        %v1729 = vpop.f32.mrf.mxu0
        %v1730 = vadd.f32 0.0, %v1729
        %1731 = vmatmul.bf16.gmra.mxu0 %v1663
        %v1732 = vpop.f32.mrf.mxu0
        %v1733 = vadd.f32 0.0, %v1732
        %v1734 = vpop.f32.mrf.mxu0
        %v1735 = vadd.f32 0.0, %v1734
        %1736 = vmatmul.bf16.gmra.mxu0 %v1664
        %v1737 = vpop.f32.mrf.mxu0
        %v1738 = vadd.f32 0.0, %v1737
        %v1739 = vpop.f32.mrf.mxu0
        %v1740 = vadd.f32 0.0, %v1739
        %1741 = vmatmul.bf16.gmra.mxu0 %v1665
        %v1742 = vpop.f32.mrf.mxu0
        %v1743 = vadd.f32 0.0, %v1742
        %v1744 = vpop.f32.mrf.mxu0
        %v1745 = vadd.f32 0.0, %v1744
        %1746 = vdwg.mxu0
        %v1747 = vadd.f32 %v1638, %v1728
        %v1748 = vadd.f32 %v1639, %v1730
        %v1749 = vadd.f32 %v1640, %v1733
        %v1750 = vadd.f32 %v1641, %v1735
        %v1751 = vadd.f32 %v1642, %v1738
        %v1752 = vadd.f32 %v1643, %v1740
        %v1753 = vadd.f32 %v1644, %v1743
        %v1754 = vadd.f32 %v1645, %v1745
        %v1763 = vunpack.c.l.b16 %v1210
        %v1764 = vunpack.c.l.b16 %v1212
        %v1765 = vunpack.c.l.b16 %v1214
        %v1766 = vunpack.c.l.b16 %v1216
        %v1767 = vunpack.c.l.b16 %v1218
        %v1768 = vunpack.c.l.b16 %v1220
        %v1769 = vunpack.c.l.b16 %v1222
        %v1770 = vunpack.c.l.b16 %v1224
        %v1771 = vpack.c.b16 %v1764, %v1763
        %v1772 = vpack.c.b16 %v1766, %v1765
        %v1773 = vpack.c.b16 %v1768, %v1767
        %v1774 = vpack.c.b16 %v1770, %v1769
        %v1795 = vunpack.c.l.b16 %v1053
        %v1796 = vunpack.c.l.b16 %v1054
        %v1797 = vunpack.c.l.b16 %v1055
        %v1798 = vunpack.c.l.b16 %v1056
        %v1799 = vunpack.c.l.b16 %v1057
        %v1800 = vunpack.c.l.b16 %v1058
        %v1801 = vunpack.c.l.b16 %v1059
        %v1802 = vunpack.c.l.b16 %v1060
        %v1803 = vunpack.c.l.b16 %v1061
        %v1804 = vunpack.c.l.b16 %v1062
        %v1805 = vunpack.c.l.b16 %v1063
        %v1806 = vunpack.c.l.b16 %v1064
        %v1807 = vunpack.c.l.b16 %v1065
        %v1808 = vunpack.c.l.b16 %v1066
        %v1809 = vunpack.c.l.b16 %v1067
        %v1810 = vunpack.c.l.b16 %v1068
        %v1811 = vpack.c.b16 %v1796, %v1795
        %v1812 = vpack.c.b16 %v1798, %v1797
        %v1813 = vpack.c.b16 %v1800, %v1799
        %v1814 = vpack.c.b16 %v1802, %v1801
        %v1815 = vpack.c.b16 %v1804, %v1803
        %v1816 = vpack.c.b16 %v1806, %v1805
        %v1817 = vpack.c.b16 %v1808, %v1807
        %v1818 = vpack.c.b16 %v1810, %v1809
        %1827 = vmatpush.bf16.msra.mxu0 %v1818
        %1828 = vmatpush.bf16.msra.mxu0 %v1817
        %1829 = vmatpush.bf16.msra.mxu0 %v1816
        %1830 = vmatpush.bf16.msra.mxu0 %v1815
        %1831 = vmatpush.bf16.msra.mxu0 %v1814
        %1832 = vmatpush.bf16.msra.mxu0 %v1813
        %1833 = vmatpush.bf16.msra.mxu0 %v1812
        %1834 = vmatpush.bf16.msra.mxu0 %v1811
        %1835 = vmatmul.bf16.gmra.mxu0 %v1771
        %v1836 = vpop.f32.mrf.mxu0
        %v1837 = vadd.f32 0.0, %v1836
        %v1838 = vpop.f32.mrf.mxu0
        %v1839 = vadd.f32 0.0, %v1838
        %1840 = vmatmul.bf16.gmra.mxu0 %v1772
        %v1841 = vpop.f32.mrf.mxu0
        %v1842 = vadd.f32 0.0, %v1841
        %v1843 = vpop.f32.mrf.mxu0
        %v1844 = vadd.f32 0.0, %v1843
        %1845 = vmatmul.bf16.gmra.mxu0 %v1773
        %v1846 = vpop.f32.mrf.mxu0
        %v1847 = vadd.f32 0.0, %v1846
        %v1848 = vpop.f32.mrf.mxu0
        %v1849 = vadd.f32 0.0, %v1848
        %1850 = vmatmul.bf16.gmra.mxu0 %v1774
        %v1851 = vpop.f32.mrf.mxu0
        %v1852 = vadd.f32 0.0, %v1851
        %v1853 = vpop.f32.mrf.mxu0
        %v1854 = vadd.f32 0.0, %v1853
        %1855 = vdwg.mxu0
        %v1856 = vadd.f32 %v1747, %v1837
        %v1857 = vadd.f32 %v1748, %v1839
        %v1858 = vadd.f32 %v1749, %v1842
        %v1859 = vadd.f32 %v1750, %v1844
        %v1860 = vadd.f32 %v1751, %v1847
        %v1861 = vadd.f32 %v1752, %v1849
        %v1862 = vadd.f32 %v1753, %v1852
        %v1863 = vadd.f32 %v1754, %v1854
        %v1865 = vshrl.u32 %v1191, 16
        %v1867 = vrot.slane %v1865, 4
        %v1868 = vshll.u32 %v1191, 16
        %v1870 = vrot.slane %v1868, 5
        %v1871 = vor.u32 %v1867, %v1870
        %v1872 = vrot.slane %v1871, 4
        %v1874 = vshll.u32 %v1192, 16
        %v1876 = vrot.slane %v1874, 5
        %v1877 = vsel %vm1432, %v1872, %v1876
        %v1879 = vshrl.u32 %v1193, 16
        %v1881 = vrot.slane %v1879, 4
        %v1882 = vshll.u32 %v1193, 16
        %v1884 = vrot.slane %v1882, 5
        %v1885 = vor.u32 %v1881, %v1884
        %v1886 = vrot.slane %v1885, 4
        %v1888 = vshll.u32 %v1194, 16
        %v1890 = vrot.slane %v1888, 5
        %v1891 = vsel %vm1432, %v1886, %v1890
        %v1893 = vshrl.u32 %v1195, 16
        %v1895 = vrot.slane %v1893, 4
        %v1896 = vshll.u32 %v1195, 16
        %v1898 = vrot.slane %v1896, 5
        %v1899 = vor.u32 %v1895, %v1898
        %v1900 = vrot.slane %v1899, 4
        %v1902 = vshll.u32 %v1196, 16
        %v1904 = vrot.slane %v1902, 5
        %v1905 = vsel %vm1432, %v1900, %v1904
        %v1907 = vshrl.u32 %v1197, 16
        %v1909 = vrot.slane %v1907, 4
        %v1910 = vshll.u32 %v1197, 16
        %v1912 = vrot.slane %v1910, 5
        %v1913 = vor.u32 %v1909, %v1912
        %v1914 = vrot.slane %v1913, 4
        %v1916 = vshll.u32 %v1198, 16
        %v1918 = vrot.slane %v1916, 5
        %v1919 = vsel %vm1432, %v1914, %v1918
        %v1921 = vshrl.u32 %v1199, 16
        %v1923 = vrot.slane %v1921, 4
        %v1924 = vshll.u32 %v1199, 16
        %v1926 = vrot.slane %v1924, 5
        %v1927 = vor.u32 %v1923, %v1926
        %v1928 = vrot.slane %v1927, 4
        %v1930 = vshll.u32 %v1200, 16
        %v1932 = vrot.slane %v1930, 5
        %v1933 = vsel %vm1432, %v1928, %v1932
        %v1935 = vshrl.u32 %v1201, 16
        %v1937 = vrot.slane %v1935, 4
        %v1938 = vshll.u32 %v1201, 16
        %v1940 = vrot.slane %v1938, 5
        %v1941 = vor.u32 %v1937, %v1940
        %v1942 = vrot.slane %v1941, 4
        %v1944 = vshll.u32 %v1202, 16
        %v1946 = vrot.slane %v1944, 5
        %v1947 = vsel %vm1432, %v1942, %v1946
        %v1949 = vshrl.u32 %v1203, 16
        %v1951 = vrot.slane %v1949, 4
        %v1952 = vshll.u32 %v1203, 16
        %v1954 = vrot.slane %v1952, 5
        %v1955 = vor.u32 %v1951, %v1954
        %v1956 = vrot.slane %v1955, 4
        %v1958 = vshll.u32 %v1204, 16
        %v1960 = vrot.slane %v1958, 5
        %v1961 = vsel %vm1432, %v1956, %v1960
        %v1963 = vshrl.u32 %v1205, 16
        %v1965 = vrot.slane %v1963, 4
        %v1966 = vshll.u32 %v1205, 16
        %v1968 = vrot.slane %v1966, 5
        %v1969 = vor.u32 %v1965, %v1968
        %v1970 = vrot.slane %v1969, 4
        %v1972 = vshll.u32 %v1206, 16
        %v1974 = vrot.slane %v1972, 5
        %v1975 = vsel %vm1432, %v1970, %v1974
        %v1976 = vunpack.c.l.b16 %v1877
        %v1977 = vunpack.c.l.b16 %v1891
        %v1978 = vunpack.c.l.b16 %v1905
        %v1979 = vunpack.c.l.b16 %v1919
        %v1980 = vunpack.c.l.b16 %v1933
        %v1981 = vunpack.c.l.b16 %v1947
        %v1982 = vunpack.c.l.b16 %v1961
        %v1983 = vunpack.c.l.b16 %v1975
        %v1984 = vpack.c.b16 %v1977, %v1976
        %v1985 = vpack.c.b16 %v1979, %v1978
        %v1986 = vpack.c.b16 %v1981, %v1980
        %v1987 = vpack.c.b16 %v1983, %v1982
        %v2008 = vunpack.c.l.b16 %v1069
        %v2009 = vunpack.c.l.b16 %v1070
        %v2010 = vunpack.c.l.b16 %v1071
        %v2011 = vunpack.c.l.b16 %v1072
        %v2012 = vunpack.c.l.b16 %v1073
        %v2013 = vunpack.c.l.b16 %v1074
        %v2014 = vunpack.c.l.b16 %v1075
        %v2015 = vunpack.c.l.b16 %v1076
        %v2016 = vunpack.c.l.b16 %v1077
        %v2017 = vunpack.c.l.b16 %v1078
        %v2018 = vunpack.c.l.b16 %v1079
        %v2019 = vunpack.c.l.b16 %v1080
        %v2020 = vunpack.c.l.b16 %v1081
        %v2021 = vunpack.c.l.b16 %v1082
        %v2022 = vunpack.c.l.b16 %v1083
        %v2023 = vunpack.c.l.b16 %v1084
        %v2024 = vpack.c.b16 %v2009, %v2008
        %v2025 = vpack.c.b16 %v2011, %v2010
        %v2026 = vpack.c.b16 %v2013, %v2012
        %v2027 = vpack.c.b16 %v2015, %v2014
        %v2028 = vpack.c.b16 %v2017, %v2016
        %v2029 = vpack.c.b16 %v2019, %v2018
        %v2030 = vpack.c.b16 %v2021, %v2020
        %v2031 = vpack.c.b16 %v2023, %v2022
        %2040 = vmatpush.bf16.msra.mxu0 %v2031
        %2041 = vmatpush.bf16.msra.mxu0 %v2030
        %2042 = vmatpush.bf16.msra.mxu0 %v2029
        %2043 = vmatpush.bf16.msra.mxu0 %v2028
        %2044 = vmatpush.bf16.msra.mxu0 %v2027
        %2045 = vmatpush.bf16.msra.mxu0 %v2026
        %2046 = vmatpush.bf16.msra.mxu0 %v2025
        %2047 = vmatpush.bf16.msra.mxu0 %v2024
        %2048 = vmatmul.bf16.gmra.mxu0 %v1984
        %v2049 = vpop.f32.mrf.mxu0
        %v2050 = vadd.f32 0.0, %v2049
        %v2051 = vpop.f32.mrf.mxu0
        %v2052 = vadd.f32 0.0, %v2051
        %2053 = vmatmul.bf16.gmra.mxu0 %v1985
        %v2054 = vpop.f32.mrf.mxu0
        %v2055 = vadd.f32 0.0, %v2054
        %v2056 = vpop.f32.mrf.mxu0
        %v2057 = vadd.f32 0.0, %v2056
        %2058 = vmatmul.bf16.gmra.mxu0 %v1986
        %v2059 = vpop.f32.mrf.mxu0
        %v2060 = vadd.f32 0.0, %v2059
        %v2061 = vpop.f32.mrf.mxu0
        %v2062 = vadd.f32 0.0, %v2061
        %2063 = vmatmul.bf16.gmra.mxu0 %v1987
        %v2064 = vpop.f32.mrf.mxu0
        %v2065 = vadd.f32 0.0, %v2064
        %v2066 = vpop.f32.mrf.mxu0
        %v2067 = vadd.f32 0.0, %v2066
        %2068 = vdwg.mxu0
        %v2069 = vadd.f32 %v1856, %v2050
        %v2070 = vadd.f32 %v1857, %v2052
        %v2071 = vadd.f32 %v1858, %v2055
        %v2072 = vadd.f32 %v1859, %v2057
        %v2073 = vadd.f32 %v1860, %v2060
        %v2074 = vadd.f32 %v1861, %v2062
        %v2075 = vadd.f32 %v1862, %v2065
        %v2076 = vadd.f32 %v1863, %v2067
        %v2078 = vunpack.c.l.b16 %v1169
        %v2079 = vpack.c.b16 %v1339, %v1338
        %v2080 = vpack.c.b16 %v1341, %v1340
        %v2081 = vpack.c.b16 %v1343, %v1342
        %v2082 = vpack.c.b16 %v2078, %v1344
        %v2103 = vunpack.c.l.b16 %v1085
        %v2104 = vunpack.c.l.b16 %v1086
        %v2105 = vunpack.c.l.b16 %v1087
        %v2106 = vunpack.c.l.b16 %v1088
        %v2107 = vunpack.c.l.b16 %v1089
        %v2108 = vunpack.c.l.b16 %v1090
        %v2109 = vunpack.c.l.b16 %v1091
        %v2110 = vunpack.c.l.b16 %v1092
        %v2111 = vunpack.c.l.b16 %v1093
        %v2112 = vunpack.c.l.b16 %v1094
        %v2113 = vunpack.c.l.b16 %v1095
        %v2114 = vunpack.c.l.b16 %v1096
        %v2115 = vunpack.c.l.b16 %v1097
        %v2116 = vunpack.c.l.b16 %v1098
        %v2117 = vunpack.c.l.b16 %v1099
        %v2118 = vunpack.c.l.b16 %v1100
        %v2119 = vpack.c.b16 %v2104, %v2103
        %v2120 = vpack.c.b16 %v2106, %v2105
        %v2121 = vpack.c.b16 %v2108, %v2107
        %v2122 = vpack.c.b16 %v2110, %v2109
        %v2123 = vpack.c.b16 %v2112, %v2111
        %v2124 = vpack.c.b16 %v2114, %v2113
        %v2125 = vpack.c.b16 %v2116, %v2115
        %v2126 = vpack.c.b16 %v2118, %v2117
        %2135 = vmatpush.bf16.msra.mxu0 %v2126
        %2136 = vmatpush.bf16.msra.mxu0 %v2125
        %2137 = vmatpush.bf16.msra.mxu0 %v2124
        %2138 = vmatpush.bf16.msra.mxu0 %v2123
        %2139 = vmatpush.bf16.msra.mxu0 %v2122
        %2140 = vmatpush.bf16.msra.mxu0 %v2121
        %2141 = vmatpush.bf16.msra.mxu0 %v2120
        %2142 = vmatpush.bf16.msra.mxu0 %v2119
        %2143 = vmatmul.bf16.gmra.mxu0 %v2079
        %v2144 = vpop.f32.mrf.mxu0
        %v2145 = vadd.f32 0.0, %v2144
        %v2146 = vpop.f32.mrf.mxu0
        %v2147 = vadd.f32 0.0, %v2146
        %2148 = vmatmul.bf16.gmra.mxu0 %v2080
        %v2149 = vpop.f32.mrf.mxu0
        %v2150 = vadd.f32 0.0, %v2149
        %v2151 = vpop.f32.mrf.mxu0
        %v2152 = vadd.f32 0.0, %v2151
        %2153 = vmatmul.bf16.gmra.mxu0 %v2081
        %v2154 = vpop.f32.mrf.mxu0
        %v2155 = vadd.f32 0.0, %v2154
        %v2156 = vpop.f32.mrf.mxu0
        %v2157 = vadd.f32 0.0, %v2156
        %2158 = vmatmul.bf16.gmra.mxu0 %v2082
        %v2159 = vpop.f32.mrf.mxu0
        %v2160 = vadd.f32 0.0, %v2159
        %v2161 = vpop.f32.mrf.mxu0
        %v2162 = vadd.f32 0.0, %v2161
        %2163 = vdwg.mxu0
        %v2164 = vadd.f32 %v2069, %v2145
        %v2165 = vadd.f32 %v2070, %v2147
        %v2166 = vadd.f32 %v2071, %v2150
        %v2167 = vadd.f32 %v2072, %v2152
        %v2168 = vadd.f32 %v2073, %v2155
        %v2169 = vadd.f32 %v2074, %v2157
        %v2170 = vadd.f32 %v2075, %v2160
        %v2171 = vadd.f32 %v2076, %v2162
        %v2173 = vunpack.c.l.b16 %v1188
        %v2174 = vpack.c.b16 %v1238, %v1237
        %v2175 = vpack.c.b16 %v1240, %v1239
        %v2176 = vpack.c.b16 %v1242, %v1241
        %v2177 = vpack.c.b16 %v2173, %v1243
        %v2198 = vunpack.c.l.b16 %v1101
        %v2199 = vunpack.c.l.b16 %v1102
        %v2200 = vunpack.c.l.b16 %v1103
        %v2201 = vunpack.c.l.b16 %v1104
        %v2202 = vunpack.c.l.b16 %v1105
        %v2203 = vunpack.c.l.b16 %v1106
        %v2204 = vunpack.c.l.b16 %v1107
        %v2205 = vunpack.c.l.b16 %v1108
        %v2206 = vunpack.c.l.b16 %v1109
        %v2207 = vunpack.c.l.b16 %v1110
        %v2208 = vunpack.c.l.b16 %v1111
        %v2209 = vunpack.c.l.b16 %v1112
        %v2210 = vunpack.c.l.b16 %v1113
        %v2211 = vunpack.c.l.b16 %v1114
        %v2212 = vunpack.c.l.b16 %v1115
        %v2213 = vunpack.c.l.b16 %v1116
        %v2214 = vpack.c.b16 %v2199, %v2198
        %v2215 = vpack.c.b16 %v2201, %v2200
        %v2216 = vpack.c.b16 %v2203, %v2202
        %v2217 = vpack.c.b16 %v2205, %v2204
        %v2218 = vpack.c.b16 %v2207, %v2206
        %v2219 = vpack.c.b16 %v2209, %v2208
        %v2220 = vpack.c.b16 %v2211, %v2210
        %v2221 = vpack.c.b16 %v2213, %v2212
        %2230 = vmatpush.bf16.msra.mxu0 %v2221
        %2231 = vmatpush.bf16.msra.mxu0 %v2220
        %2232 = vmatpush.bf16.msra.mxu0 %v2219
        %2233 = vmatpush.bf16.msra.mxu0 %v2218
        %2234 = vmatpush.bf16.msra.mxu0 %v2217
        %2235 = vmatpush.bf16.msra.mxu0 %v2216
        %2236 = vmatpush.bf16.msra.mxu0 %v2215
        %2237 = vmatpush.bf16.msra.mxu0 %v2214
        %2238 = vmatmul.bf16.gmra.mxu0 %v2174
        %v2239 = vpop.f32.mrf.mxu0
        %v2240 = vadd.f32 0.0, %v2239
        %v2241 = vpop.f32.mrf.mxu0
        %v2242 = vadd.f32 0.0, %v2241
        %2243 = vmatmul.bf16.gmra.mxu0 %v2175
        %v2244 = vpop.f32.mrf.mxu0
        %v2245 = vadd.f32 0.0, %v2244
        %v2246 = vpop.f32.mrf.mxu0
        %v2247 = vadd.f32 0.0, %v2246
        %2248 = vmatmul.bf16.gmra.mxu0 %v2176
        %v2249 = vpop.f32.mrf.mxu0
        %v2250 = vadd.f32 0.0, %v2249
        %v2251 = vpop.f32.mrf.mxu0
        %v2252 = vadd.f32 0.0, %v2251
        %2253 = vmatmul.bf16.gmra.mxu0 %v2177
        %v2254 = vpop.f32.mrf.mxu0
        %v2255 = vadd.f32 0.0, %v2254
        %v2256 = vpop.f32.mrf.mxu0
        %v2257 = vadd.f32 0.0, %v2256
        %2258 = vdwg.mxu0
        %v2259 = vadd.f32 %v2164, %v2240
        %v2260 = vadd.f32 %v2165, %v2242
        %v2261 = vadd.f32 %v2166, %v2245
        %v2262 = vadd.f32 %v2167, %v2247
        %v2263 = vadd.f32 %v2168, %v2250
        %v2264 = vadd.f32 %v2169, %v2252
        %v2265 = vadd.f32 %v2170, %v2255
        %v2266 = vadd.f32 %v2171, %v2257
        %v2268 = vshrl.u32 %v1169, 16
        %v2270 = vrot.slane %v2268, 4
        %v2271 = vshll.u32 %v1169, 16
        %v2273 = vrot.slane %v2271, 5
        %v2274 = vor.u32 %v2270, %v2273
        %v2275 = vrot.slane %v2274, 4
        %v2277 = vshll.u32 %v1170, 16
        %v2279 = vrot.slane %v2277, 5
        %v2280 = vsel %vm1432, %v2275, %v2279
        %v2281 = vunpack.c.l.b16 %v2280
        %v2282 = vpack.c.b16 %v1547, %v1546
        %v2283 = vpack.c.b16 %v1549, %v1548
        %v2284 = vpack.c.b16 %v1551, %v1550
        %v2285 = vpack.c.b16 %v2281, %v1552
        %v2306 = vunpack.c.l.b16 %v1117
        %v2307 = vunpack.c.l.b16 %v1118
        %v2308 = vunpack.c.l.b16 %v1119
        %v2309 = vunpack.c.l.b16 %v1120
        %v2310 = vunpack.c.l.b16 %v1121
        %v2311 = vunpack.c.l.b16 %v1122
        %v2312 = vunpack.c.l.b16 %v1123
        %v2313 = vunpack.c.l.b16 %v1124
        %v2314 = vunpack.c.l.b16 %v1125
        %v2315 = vunpack.c.l.b16 %v1126
        %v2316 = vunpack.c.l.b16 %v1127
        %v2317 = vunpack.c.l.b16 %v1128
        %v2318 = vunpack.c.l.b16 %v1129
        %v2319 = vunpack.c.l.b16 %v1130
        %v2320 = vunpack.c.l.b16 %v1131
        %v2321 = vunpack.c.l.b16 %v1132
        %v2322 = vpack.c.b16 %v2307, %v2306
        %v2323 = vpack.c.b16 %v2309, %v2308
        %v2324 = vpack.c.b16 %v2311, %v2310
        %v2325 = vpack.c.b16 %v2313, %v2312
        %v2326 = vpack.c.b16 %v2315, %v2314
        %v2327 = vpack.c.b16 %v2317, %v2316
        %v2328 = vpack.c.b16 %v2319, %v2318
        %v2329 = vpack.c.b16 %v2321, %v2320
        %2338 = vmatpush.bf16.msra.mxu0 %v2329
        %2339 = vmatpush.bf16.msra.mxu0 %v2328
        %2340 = vmatpush.bf16.msra.mxu0 %v2327
        %2341 = vmatpush.bf16.msra.mxu0 %v2326
        %2342 = vmatpush.bf16.msra.mxu0 %v2325
        %2343 = vmatpush.bf16.msra.mxu0 %v2324
        %2344 = vmatpush.bf16.msra.mxu0 %v2323
        %2345 = vmatpush.bf16.msra.mxu0 %v2322
        %2346 = vmatmul.bf16.gmra.mxu0 %v2282
        %v2347 = vpop.f32.mrf.mxu0
        %v2348 = vadd.f32 0.0, %v2347
        %v2349 = vpop.f32.mrf.mxu0
        %v2350 = vadd.f32 0.0, %v2349
        %2351 = vmatmul.bf16.gmra.mxu0 %v2283
        %v2352 = vpop.f32.mrf.mxu0
        %v2353 = vadd.f32 0.0, %v2352
        %v2354 = vpop.f32.mrf.mxu0
        %v2355 = vadd.f32 0.0, %v2354
        %2356 = vmatmul.bf16.gmra.mxu0 %v2284
        %v2357 = vpop.f32.mrf.mxu0
        %v2358 = vadd.f32 0.0, %v2357
        %v2359 = vpop.f32.mrf.mxu0
        %v2360 = vadd.f32 0.0, %v2359
        %2361 = vmatmul.bf16.gmra.mxu0 %v2285
        %v2362 = vpop.f32.mrf.mxu0
        %v2363 = vadd.f32 0.0, %v2362
        %v2364 = vpop.f32.mrf.mxu0
        %v2365 = vadd.f32 0.0, %v2364
        %2366 = vdwg.mxu0
        %v2367 = vadd.f32 %v2259, %v2348
        %v2368 = vadd.f32 %v2260, %v2350
        %v2369 = vadd.f32 %v2261, %v2353
        %v2370 = vadd.f32 %v2262, %v2355
        %v2371 = vadd.f32 %v2263, %v2358
        %v2372 = vadd.f32 %v2264, %v2360
        %v2373 = vadd.f32 %v2265, %v2363
        %v2374 = vadd.f32 %v2266, %v2365
        %v2376 = vshrl.u32 %v1135, 16
        %v2378 = vrot.slane %v2376, 4
        %v2379 = vshll.u32 %v1135, 16
        %v2381 = vrot.slane %v2379, 5
        %v2382 = vor.u32 %v2378, %v2381
        %v2383 = vrot.slane %v2382, 4
        %v2385 = vshll.u32 %v1136, 16
        %v2387 = vrot.slane %v2385, 5
        %v2388 = vsel %vm1432, %v2383, %v2387
        %v2390 = vshrl.u32 %v1137, 16
        %v2392 = vrot.slane %v2390, 4
        %v2393 = vshll.u32 %v1137, 16
        %v2395 = vrot.slane %v2393, 5
        %v2396 = vor.u32 %v2392, %v2395
        %v2397 = vrot.slane %v2396, 4
        %v2399 = vshll.u32 %v1138, 16
        %v2401 = vrot.slane %v2399, 5
        %v2402 = vsel %vm1432, %v2397, %v2401
        %v2404 = vshrl.u32 %v1139, 16
        %v2406 = vrot.slane %v2404, 4
        %v2407 = vshll.u32 %v1139, 16
        %v2409 = vrot.slane %v2407, 5
        %v2410 = vor.u32 %v2406, %v2409
        %v2411 = vrot.slane %v2410, 4
        %v2413 = vshll.u32 %v1140, 16
        %v2415 = vrot.slane %v2413, 5
        %v2416 = vsel %vm1432, %v2411, %v2415
        %v2418 = vshrl.u32 %v1141, 16
        %v2420 = vrot.slane %v2418, 4
        %v2421 = vshll.u32 %v1141, 16
        %v2423 = vrot.slane %v2421, 5
        %v2424 = vor.u32 %v2420, %v2423
        %v2425 = vrot.slane %v2424, 4
        %v2427 = vshll.u32 %v1142, 16
        %v2429 = vrot.slane %v2427, 5
        %v2430 = vsel %vm1432, %v2425, %v2429
        %v2432 = vshrl.u32 %v1143, 16
        %v2434 = vrot.slane %v2432, 4
        %v2435 = vshll.u32 %v1143, 16
        %v2437 = vrot.slane %v2435, 5
        %v2438 = vor.u32 %v2434, %v2437
        %v2439 = vrot.slane %v2438, 4
        %v2441 = vshll.u32 %v1144, 16
        %v2443 = vrot.slane %v2441, 5
        %v2444 = vsel %vm1432, %v2439, %v2443
        %v2446 = vshrl.u32 %v1145, 16
        %v2448 = vrot.slane %v2446, 4
        %v2449 = vshll.u32 %v1145, 16
        %v2451 = vrot.slane %v2449, 5
        %v2452 = vor.u32 %v2448, %v2451
        %v2453 = vrot.slane %v2452, 4
        %v2455 = vshll.u32 %v1146, 16
        %v2457 = vrot.slane %v2455, 5
        %v2458 = vsel %vm1432, %v2453, %v2457
        %v2460 = vshrl.u32 %v1147, 16
        %v2462 = vrot.slane %v2460, 4
        %v2463 = vshll.u32 %v1147, 16
        %v2465 = vrot.slane %v2463, 5
        %v2466 = vor.u32 %v2462, %v2465
        %v2467 = vrot.slane %v2466, 4
        %v2469 = vshll.u32 %v1148, 16
        %v2471 = vrot.slane %v2469, 5
        %v2472 = vsel %vm1432, %v2467, %v2471
        %v2474 = vshrl.u32 %v1149, 16
        %v2476 = vrot.slane %v2474, 4
        %v2477 = vshll.u32 %v1149, 16
        %v2479 = vrot.slane %v2477, 5
        %v2480 = vor.u32 %v2476, %v2479
        %v2481 = vrot.slane %v2480, 4
        %v2483 = vshll.u32 %v1150, 16
        %v2485 = vrot.slane %v2483, 5
        %v2486 = vsel %vm1432, %v2481, %v2485
        %v2487 = vld [vmem:[%s5] sm:$0xf]
        %v2488 = vld [vmem:[%s5 + $0x4] sm:$0xf]
        %v2489 = vld [vmem:[%s5 + $0x8] sm:$0xf]
        %v2490 = vld [vmem:[%s5 + $0xc] sm:$0xf]
        %v2491 = vld [vmem:[%s5 + $0x10] sm:$0xf]
        %v2492 = vld [vmem:[%s5 + $0x14] sm:$0xf]
        %v2493 = vld [vmem:[%s5 + $0x18] sm:$0xf]
        %v2494 = vld [vmem:[%s5 + $0x1c] sm:$0xf]
        %v2495 = vld [vmem:[%s5 + $0x20] sm:$0xf]
        %v2496 = vld [vmem:[%s5 + $0x24] sm:$0xf]
        %v2497 = vld [vmem:[%s5 + $0x28] sm:$0xf]
        %v2498 = vld [vmem:[%s5 + $0x2c] sm:$0xf]
        %v2499 = vld [vmem:[%s5 + $0x30] sm:$0xf]
        %v2500 = vld [vmem:[%s5 + $0x34] sm:$0xf]
        %v2501 = vld [vmem:[%s5 + $0x38] sm:$0xf]
        %v2502 = vld [vmem:[%s5 + $0x3c] sm:$0xf]
        %v2503 = vunpack.c.l.b16 %v2388
        %v2504 = vunpack.c.l.b16 %v2402
        %v2505 = vunpack.c.l.b16 %v2416
        %v2506 = vunpack.c.l.b16 %v2430
        %v2507 = vunpack.c.l.b16 %v2444
        %v2508 = vunpack.c.l.b16 %v2458
        %v2509 = vunpack.c.l.b16 %v2472
        %v2510 = vunpack.c.l.b16 %v2486
        %v2511 = vpack.c.b16 %v2504, %v2503
        %v2512 = vpack.c.b16 %v2506, %v2505
        %v2513 = vpack.c.b16 %v2508, %v2507
        %v2514 = vpack.c.b16 %v2510, %v2509
        %v2535 = vunpack.c.l.b16 %v2487
        %v2536 = vunpack.c.l.b16 %v2488
        %v2537 = vunpack.c.l.b16 %v2489
        %v2538 = vunpack.c.l.b16 %v2490
        %v2539 = vunpack.c.l.b16 %v2491
        %v2540 = vunpack.c.l.b16 %v2492
        %v2541 = vunpack.c.l.b16 %v2493
        %v2542 = vunpack.c.l.b16 %v2494
        %v2543 = vunpack.c.l.b16 %v2495
        %v2544 = vunpack.c.l.b16 %v2496
        %v2545 = vunpack.c.l.b16 %v2497
        %v2546 = vunpack.c.l.b16 %v2498
        %v2547 = vunpack.c.l.b16 %v2499
        %v2548 = vunpack.c.l.b16 %v2500
        %v2549 = vunpack.c.l.b16 %v2501
        %v2550 = vunpack.c.l.b16 %v2502
        %v2551 = vpack.c.b16 %v2536, %v2535
        %v2552 = vpack.c.b16 %v2538, %v2537
        %v2553 = vpack.c.b16 %v2540, %v2539
        %v2554 = vpack.c.b16 %v2542, %v2541
        %v2555 = vpack.c.b16 %v2544, %v2543
        %v2556 = vpack.c.b16 %v2546, %v2545
        %v2557 = vpack.c.b16 %v2548, %v2547
        %v2558 = vpack.c.b16 %v2550, %v2549
        %2567 = vmatpush.bf16.msra.mxu0 %v2558
        %2568 = vmatpush.bf16.msra.mxu0 %v2557
        %2569 = vmatpush.bf16.msra.mxu0 %v2556
        %2570 = vmatpush.bf16.msra.mxu0 %v2555
        %2571 = vmatpush.bf16.msra.mxu0 %v2554
        %2572 = vmatpush.bf16.msra.mxu0 %v2553
        %2573 = vmatpush.bf16.msra.mxu0 %v2552
        %2574 = vmatpush.bf16.msra.mxu0 %v2551
        %2575 = vmatmul.bf16.gmra.mxu0 %v2511
        %v2576 = vpop.f32.mrf.mxu0
        %v2577 = vadd.f32 0.0, %v2576
        %v2578 = vpop.f32.mrf.mxu0
        %v2579 = vadd.f32 0.0, %v2578
        %2580 = vmatmul.bf16.gmra.mxu0 %v2512
        %v2581 = vpop.f32.mrf.mxu0
        %v2582 = vadd.f32 0.0, %v2581
        %v2583 = vpop.f32.mrf.mxu0
        %v2584 = vadd.f32 0.0, %v2583
        %2585 = vmatmul.bf16.gmra.mxu0 %v2513
        %v2586 = vpop.f32.mrf.mxu0
        %v2587 = vadd.f32 0.0, %v2586
        %v2588 = vpop.f32.mrf.mxu0
        %v2589 = vadd.f32 0.0, %v2588
        %2590 = vmatmul.bf16.gmra.mxu0 %v2514
        %v2591 = vpop.f32.mrf.mxu0
        %v2592 = vadd.f32 0.0, %v2591
        %v2593 = vpop.f32.mrf.mxu0
        %v2594 = vadd.f32 0.0, %v2593
        %2595 = vdwg.mxu0
        %v2596 = vadd.f32 %v2367, %v2577
        %v2597 = vadd.f32 %v2368, %v2579
        %v2598 = vadd.f32 %v2369, %v2582
        %v2599 = vadd.f32 %v2370, %v2584
        %v2600 = vadd.f32 %v2371, %v2587
        %v2601 = vadd.f32 %v2372, %v2589
        %v2602 = vadd.f32 %v2373, %v2592
        %v2603 = vadd.f32 %v2374, %v2594
        %s2604 = scalar_lea.vmem %s5, 64
        %v2605 = vld [vmem:[%s2604] sm:$0xf]
        %v2606 = vld [vmem:[%s2604 + $0x4] sm:$0xf]
        %v2607 = vld [vmem:[%s2604 + $0x8] sm:$0xf]
        %v2608 = vld [vmem:[%s2604 + $0xc] sm:$0xf]
        %v2609 = vld [vmem:[%s2604 + $0x10] sm:$0xf]
        %v2610 = vld [vmem:[%s2604 + $0x14] sm:$0xf]
        %v2611 = vld [vmem:[%s2604 + $0x18] sm:$0xf]
        %v2612 = vld [vmem:[%s2604 + $0x1c] sm:$0xf]
        %v2613 = vld [vmem:[%s2604 + $0x20] sm:$0xf]
        %v2614 = vld [vmem:[%s2604 + $0x24] sm:$0xf]
        %v2615 = vld [vmem:[%s2604 + $0x28] sm:$0xf]
        %v2616 = vld [vmem:[%s2604 + $0x2c] sm:$0xf]
        %v2617 = vld [vmem:[%s2604 + $0x30] sm:$0xf]
        %v2618 = vld [vmem:[%s2604 + $0x34] sm:$0xf]
        %v2619 = vld [vmem:[%s2604 + $0x38] sm:$0xf]
        %v2620 = vld [vmem:[%s2604 + $0x3c] sm:$0xf]
        %v2629 = vunpack.c.l.b16 %v1135
        %v2630 = vunpack.c.l.b16 %v1137
        %v2631 = vunpack.c.l.b16 %v1139
        %v2632 = vunpack.c.l.b16 %v1141
        %v2633 = vunpack.c.l.b16 %v1143
        %v2634 = vunpack.c.l.b16 %v1145
        %v2635 = vunpack.c.l.b16 %v1147
        %v2636 = vunpack.c.l.b16 %v1149
        %v2637 = vpack.c.b16 %v2630, %v2629
        %v2638 = vpack.c.b16 %v2632, %v2631
        %v2639 = vpack.c.b16 %v2634, %v2633
        %v2640 = vpack.c.b16 %v2636, %v2635
        %v2661 = vunpack.c.l.b16 %v2605
        %v2662 = vunpack.c.l.b16 %v2606
        %v2663 = vunpack.c.l.b16 %v2607
        %v2664 = vunpack.c.l.b16 %v2608
        %v2665 = vunpack.c.l.b16 %v2609
        %v2666 = vunpack.c.l.b16 %v2610
        %v2667 = vunpack.c.l.b16 %v2611
        %v2668 = vunpack.c.l.b16 %v2612
        %v2669 = vunpack.c.l.b16 %v2613
        %v2670 = vunpack.c.l.b16 %v2614
        %v2671 = vunpack.c.l.b16 %v2615
        %v2672 = vunpack.c.l.b16 %v2616
        %v2673 = vunpack.c.l.b16 %v2617
        %v2674 = vunpack.c.l.b16 %v2618
        %v2675 = vunpack.c.l.b16 %v2619
        %v2676 = vunpack.c.l.b16 %v2620
        %v2677 = vpack.c.b16 %v2662, %v2661
        %v2678 = vpack.c.b16 %v2664, %v2663
        %v2679 = vpack.c.b16 %v2666, %v2665
        %v2680 = vpack.c.b16 %v2668, %v2667
        %v2681 = vpack.c.b16 %v2670, %v2669
        %v2682 = vpack.c.b16 %v2672, %v2671
        %v2683 = vpack.c.b16 %v2674, %v2673
        %v2684 = vpack.c.b16 %v2676, %v2675
        %2693 = vmatpush.bf16.msra.mxu0 %v2684
        %2694 = vmatpush.bf16.msra.mxu0 %v2683
        %2695 = vmatpush.bf16.msra.mxu0 %v2682
        %2696 = vmatpush.bf16.msra.mxu0 %v2681
        %2697 = vmatpush.bf16.msra.mxu0 %v2680
        %2698 = vmatpush.bf16.msra.mxu0 %v2679
        %2699 = vmatpush.bf16.msra.mxu0 %v2678
        %2700 = vmatpush.bf16.msra.mxu0 %v2677
        %2701 = vmatmul.bf16.gmra.mxu0 %v2637
        %v2702 = vpop.f32.mrf.mxu0
        %v2703 = vadd.f32 0.0, %v2702
        %v2704 = vpop.f32.mrf.mxu0
        %v2705 = vadd.f32 0.0, %v2704
        %2706 = vmatmul.bf16.gmra.mxu0 %v2638
        %v2707 = vpop.f32.mrf.mxu0
        %v2708 = vadd.f32 0.0, %v2707
        %v2709 = vpop.f32.mrf.mxu0
        %v2710 = vadd.f32 0.0, %v2709
        %2711 = vmatmul.bf16.gmra.mxu0 %v2639
        %v2712 = vpop.f32.mrf.mxu0
        %v2713 = vadd.f32 0.0, %v2712
        %v2714 = vpop.f32.mrf.mxu0
        %v2715 = vadd.f32 0.0, %v2714
        %2716 = vmatmul.bf16.gmra.mxu0 %v2640
        %v2717 = vpop.f32.mrf.mxu0
        %v2718 = vadd.f32 0.0, %v2717
        %v2719 = vpop.f32.mrf.mxu0
        %v2720 = vadd.f32 0.0, %v2719
        %2721 = vdwg.mxu0
        %v2722 = vadd.f32 %v2596, %v2703
        %v2723 = vadd.f32 %v2597, %v2705
        %v2724 = vadd.f32 %v2598, %v2708
        %v2725 = vadd.f32 %v2599, %v2710
        %v2726 = vadd.f32 %v2600, %v2713
        %v2727 = vadd.f32 %v2601, %v2715
        %v2728 = vadd.f32 %v2602, %v2718
        %v2729 = vadd.f32 %v2603, %v2720
        %v2731 = vshrl.u32 %v1133, 16
        %v2733 = vrot.slane %v2731, 4
        %v2734 = vshll.u32 %v1133, 16
        %v2736 = vrot.slane %v2734, 5
        %v2737 = vor.u32 %v2733, %v2736
        %v2738 = vrot.slane %v2737, 4
        %v2740 = vshll.u32 %v1134, 16
        %v2742 = vrot.slane %v2740, 5
        %v2743 = vsel %vm1432, %v2738, %v2742
        %s2744 = scalar_lea.vmem %s5, 128
        %v2745 = vld [vmem:[%s2744] sm:$0xf]
        %v2746 = vld [vmem:[%s2744 + $0x4] sm:$0xf]
        %v2747 = vld [vmem:[%s2744 + $0x8] sm:$0xf]
        %v2748 = vld [vmem:[%s2744 + $0xc] sm:$0xf]
        %v2749 = vld [vmem:[%s2744 + $0x10] sm:$0xf]
        %v2750 = vld [vmem:[%s2744 + $0x14] sm:$0xf]
        %v2751 = vld [vmem:[%s2744 + $0x18] sm:$0xf]
        %v2752 = vld [vmem:[%s2744 + $0x1c] sm:$0xf]
        %v2753 = vld [vmem:[%s2744 + $0x20] sm:$0xf]
        %v2754 = vld [vmem:[%s2744 + $0x24] sm:$0xf]
        %v2755 = vld [vmem:[%s2744 + $0x28] sm:$0xf]
        %v2756 = vld [vmem:[%s2744 + $0x2c] sm:$0xf]
        %v2757 = vld [vmem:[%s2744 + $0x30] sm:$0xf]
        %v2758 = vld [vmem:[%s2744 + $0x34] sm:$0xf]
        %v2759 = vld [vmem:[%s2744 + $0x38] sm:$0xf]
        %v2760 = vld [vmem:[%s2744 + $0x3c] sm:$0xf]
        %v2761 = vunpack.c.l.b16 %v2743
        %v2762 = vpack.c.b16 %v2503, %v2761
        %v2763 = vpack.c.b16 %v2505, %v2504
        %v2764 = vpack.c.b16 %v2507, %v2506
        %v2765 = vpack.c.b16 %v2509, %v2508
        %v2786 = vunpack.c.l.b16 %v2745
        %v2787 = vunpack.c.l.b16 %v2746
        %v2788 = vunpack.c.l.b16 %v2747
        %v2789 = vunpack.c.l.b16 %v2748
        %v2790 = vunpack.c.l.b16 %v2749
        %v2791 = vunpack.c.l.b16 %v2750
        %v2792 = vunpack.c.l.b16 %v2751
        %v2793 = vunpack.c.l.b16 %v2752
        %v2794 = vunpack.c.l.b16 %v2753
        %v2795 = vunpack.c.l.b16 %v2754
        %v2796 = vunpack.c.l.b16 %v2755
        %v2797 = vunpack.c.l.b16 %v2756
        %v2798 = vunpack.c.l.b16 %v2757
        %v2799 = vunpack.c.l.b16 %v2758
        %v2800 = vunpack.c.l.b16 %v2759
        %v2801 = vunpack.c.l.b16 %v2760
        %v2802 = vpack.c.b16 %v2787, %v2786
        %v2803 = vpack.c.b16 %v2789, %v2788
        %v2804 = vpack.c.b16 %v2791, %v2790
        %v2805 = vpack.c.b16 %v2793, %v2792
        %v2806 = vpack.c.b16 %v2795, %v2794
        %v2807 = vpack.c.b16 %v2797, %v2796
        %v2808 = vpack.c.b16 %v2799, %v2798
        %v2809 = vpack.c.b16 %v2801, %v2800
        %2818 = vmatpush.bf16.msra.mxu0 %v2809
        %2819 = vmatpush.bf16.msra.mxu0 %v2808
        %2820 = vmatpush.bf16.msra.mxu0 %v2807
        %2821 = vmatpush.bf16.msra.mxu0 %v2806
        %2822 = vmatpush.bf16.msra.mxu0 %v2805
        %2823 = vmatpush.bf16.msra.mxu0 %v2804
        %2824 = vmatpush.bf16.msra.mxu0 %v2803
        %2825 = vmatpush.bf16.msra.mxu0 %v2802
        %2826 = vmatmul.bf16.gmra.mxu0 %v2762
        %v2827 = vpop.f32.mrf.mxu0
        %v2828 = vadd.f32 0.0, %v2827
        %v2829 = vpop.f32.mrf.mxu0
        %v2830 = vadd.f32 0.0, %v2829
        %2831 = vmatmul.bf16.gmra.mxu0 %v2763
        %v2832 = vpop.f32.mrf.mxu0
        %v2833 = vadd.f32 0.0, %v2832
        %v2834 = vpop.f32.mrf.mxu0
        %v2835 = vadd.f32 0.0, %v2834
        %2836 = vmatmul.bf16.gmra.mxu0 %v2764
        %v2837 = vpop.f32.mrf.mxu0
        %v2838 = vadd.f32 0.0, %v2837
        %v2839 = vpop.f32.mrf.mxu0
        %v2840 = vadd.f32 0.0, %v2839
        %2841 = vmatmul.bf16.gmra.mxu0 %v2765
        %v2842 = vpop.f32.mrf.mxu0
        %v2843 = vadd.f32 0.0, %v2842
        %v2844 = vpop.f32.mrf.mxu0
        %v2845 = vadd.f32 0.0, %v2844
        %2846 = vdwg.mxu0
        %v2847 = vadd.f32 %v2722, %v2828
        %v2848 = vadd.f32 %v2723, %v2830
        %v2849 = vadd.f32 %v2724, %v2833
        %v2850 = vadd.f32 %v2725, %v2835
        %v2851 = vadd.f32 %v2726, %v2838
        %v2852 = vadd.f32 %v2727, %v2840
        %v2853 = vadd.f32 %v2728, %v2843
        %v2854 = vadd.f32 %v2729, %v2845
        %s2855 = scalar_lea.vmem %s5, 192
        %v2856 = vld [vmem:[%s2855] sm:$0xf]
        %v2857 = vld [vmem:[%s2855 + $0x4] sm:$0xf]
        %v2858 = vld [vmem:[%s2855 + $0x8] sm:$0xf]
        %v2859 = vld [vmem:[%s2855 + $0xc] sm:$0xf]
        %v2860 = vld [vmem:[%s2855 + $0x10] sm:$0xf]
        %v2861 = vld [vmem:[%s2855 + $0x14] sm:$0xf]
        %v2862 = vld [vmem:[%s2855 + $0x18] sm:$0xf]
        %v2863 = vld [vmem:[%s2855 + $0x1c] sm:$0xf]
        %v2864 = vld [vmem:[%s2855 + $0x20] sm:$0xf]
        %v2865 = vld [vmem:[%s2855 + $0x24] sm:$0xf]
        %v2866 = vld [vmem:[%s2855 + $0x28] sm:$0xf]
        %v2867 = vld [vmem:[%s2855 + $0x2c] sm:$0xf]
        %v2868 = vld [vmem:[%s2855 + $0x30] sm:$0xf]
        %v2869 = vld [vmem:[%s2855 + $0x34] sm:$0xf]
        %v2870 = vld [vmem:[%s2855 + $0x38] sm:$0xf]
        %v2871 = vld [vmem:[%s2855 + $0x3c] sm:$0xf]
        %v2873 = vunpack.c.l.b16 %v1133
        %v2874 = vpack.c.b16 %v2629, %v2873
        %v2875 = vpack.c.b16 %v2631, %v2630
        %v2876 = vpack.c.b16 %v2633, %v2632
        %v2877 = vpack.c.b16 %v2635, %v2634
        %v2898 = vunpack.c.l.b16 %v2856
        %v2899 = vunpack.c.l.b16 %v2857
        %v2900 = vunpack.c.l.b16 %v2858
        %v2901 = vunpack.c.l.b16 %v2859
        %v2902 = vunpack.c.l.b16 %v2860
        %v2903 = vunpack.c.l.b16 %v2861
        %v2904 = vunpack.c.l.b16 %v2862
        %v2905 = vunpack.c.l.b16 %v2863
        %v2906 = vunpack.c.l.b16 %v2864
        %v2907 = vunpack.c.l.b16 %v2865
        %v2908 = vunpack.c.l.b16 %v2866
        %v2909 = vunpack.c.l.b16 %v2867
        %v2910 = vunpack.c.l.b16 %v2868
        %v2911 = vunpack.c.l.b16 %v2869
        %v2912 = vunpack.c.l.b16 %v2870
        %v2913 = vunpack.c.l.b16 %v2871
        %v2914 = vpack.c.b16 %v2899, %v2898
        %v2915 = vpack.c.b16 %v2901, %v2900
        %v2916 = vpack.c.b16 %v2903, %v2902
        %v2917 = vpack.c.b16 %v2905, %v2904
        %v2918 = vpack.c.b16 %v2907, %v2906
        %v2919 = vpack.c.b16 %v2909, %v2908
        %v2920 = vpack.c.b16 %v2911, %v2910
        %v2921 = vpack.c.b16 %v2913, %v2912
        %2930 = vmatpush.bf16.msra.mxu0 %v2921
        %2931 = vmatpush.bf16.msra.mxu0 %v2920
        %2932 = vmatpush.bf16.msra.mxu0 %v2919
        %2933 = vmatpush.bf16.msra.mxu0 %v2918
        %2934 = vmatpush.bf16.msra.mxu0 %v2917
        %2935 = vmatpush.bf16.msra.mxu0 %v2916
        %2936 = vmatpush.bf16.msra.mxu0 %v2915
        %2937 = vmatpush.bf16.msra.mxu0 %v2914
        %2938 = vmatmul.bf16.gmra.mxu0 %v2874
        %v2939 = vpop.f32.mrf.mxu0
        %v2940 = vadd.f32 0.0, %v2939
        %v2941 = vpop.f32.mrf.mxu0
        %v2942 = vadd.f32 0.0, %v2941
        %2943 = vmatmul.bf16.gmra.mxu0 %v2875
        %v2944 = vpop.f32.mrf.mxu0
        %v2945 = vadd.f32 0.0, %v2944
        %v2946 = vpop.f32.mrf.mxu0
        %v2947 = vadd.f32 0.0, %v2946
        %2948 = vmatmul.bf16.gmra.mxu0 %v2876
        %v2949 = vpop.f32.mrf.mxu0
        %v2950 = vadd.f32 0.0, %v2949
        %v2951 = vpop.f32.mrf.mxu0
        %v2952 = vadd.f32 0.0, %v2951
        %2953 = vmatmul.bf16.gmra.mxu0 %v2877
        %v2954 = vpop.f32.mrf.mxu0
        %v2955 = vadd.f32 0.0, %v2954
        %v2956 = vpop.f32.mrf.mxu0
        %v2957 = vadd.f32 0.0, %v2956
        %2958 = vdwg.mxu0
        %v2959 = vadd.f32 %v2847, %v2940
        %v2960 = vadd.f32 %v2848, %v2942
        %v2961 = vadd.f32 %v2849, %v2945
        %v2962 = vadd.f32 %v2850, %v2947
        %v2963 = vadd.f32 %v2851, %v2950
        %v2964 = vadd.f32 %v2852, %v2952
        %v2965 = vadd.f32 %v2853, %v2955
        %v2966 = vadd.f32 %v2854, %v2957
        %v2967 = vperm.slane %v555, 3
        %v2968 = vadd.f32 %v2959, %v2967
        %v2969 = vadd.f32 %v2960, %v2967
        %v2970 = vadd.f32 %v2961, %v2967
        %v2971 = vadd.f32 %v2962, %v2967
        %v2972 = vadd.f32 %v2963, %v2967
        %v2973 = vadd.f32 %v2964, %v2967
        %v2974 = vadd.f32 %v2965, %v2967
        %v2975 = vadd.f32 %v2966, %v2967
        %v2976 = vmax.f32 %v2968, 0.0
        %v2977 = vmax.f32 %v2969, 0.0
        %v2978 = vmax.f32 %v2970, 0.0
        %v2979 = vmax.f32 %v2971, 0.0
        %v2980 = vmax.f32 %v2972, 0.0
        %v2981 = vmax.f32 %v2973, 0.0
        %v2982 = vmax.f32 %v2974, 0.0
        %v2983 = vmax.f32 %v2975, 0.0
        %v2984 = vpack.c.bf16 %v2976, %v2976
        %v2985 = vpack.c.bf16 %v2977, %v2977
        %v2986 = vpack.c.bf16 %v2978, %v2978
        %v2987 = vpack.c.bf16 %v2979, %v2979
        %v2988 = vpack.c.bf16 %v2980, %v2980
        %v2989 = vpack.c.bf16 %v2981, %v2981
        %v2990 = vpack.c.bf16 %v2982, %v2982
        %v2991 = vpack.c.bf16 %v2983, %v2983
        %2992 = vst [vmem:[%s352] sm:$0xf] %v2984
        %2993 = vst [vmem:[%s352 + $0x4] sm:$0xf] %v2985
        %2994 = vst [vmem:[%s352 + $0x8] sm:$0xf] %v2986
        %2995 = vst [vmem:[%s352 + $0xc] sm:$0xf] %v2987
        %2996 = vst [vmem:[%s352 + $0x10] sm:$0xf] %v2988
        %2997 = vst [vmem:[%s352 + $0x14] sm:$0xf] %v2989
        %2998 = vst [vmem:[%s352 + $0x18] sm:$0xf] %v2990
        %2999 = vst [vmem:[%s352 + $0x1c] sm:$0xf] %v2991
        %3000 = vmatpush.bf16.msra.mxu0 %v1291
        %3001 = vmatpush.bf16.msra.mxu0 %v1290
        %3002 = vmatpush.bf16.msra.mxu0 %v1289
        %3003 = vmatpush.bf16.msra.mxu0 %v1288
        %3004 = vmatpush.bf16.msra.mxu0 %v1287
        %3005 = vmatpush.bf16.msra.mxu0 %v1286
        %3006 = vmatpush.bf16.msra.mxu0 %v1285
        %3007 = vmatpush.bf16.msra.mxu0 %v1284
        %3008 = vmatmul.bf16.gmra.mxu0 %v1553
        %v3009 = vpop.f32.mrf.mxu0
        %v3010 = vadd.f32 0.0, %v3009
        %v3011 = vpop.f32.mrf.mxu0
        %v3012 = vadd.f32 0.0, %v3011
        %3013 = vmatmul.bf16.gmra.mxu0 %v1554
        %v3014 = vpop.f32.mrf.mxu0
        %v3015 = vadd.f32 0.0, %v3014
        %v3016 = vpop.f32.mrf.mxu0
        %v3017 = vadd.f32 0.0, %v3016
        %3018 = vmatmul.bf16.gmra.mxu0 %v1555
        %v3019 = vpop.f32.mrf.mxu0
        %v3020 = vadd.f32 0.0, %v3019
        %v3021 = vpop.f32.mrf.mxu0
        %v3022 = vadd.f32 0.0, %v3021
        %3023 = vmatmul.bf16.gmra.mxu0 %v1556
        %v3024 = vpop.f32.mrf.mxu0
        %v3025 = vadd.f32 0.0, %v3024
        %v3026 = vpop.f32.mrf.mxu0
        %v3027 = vadd.f32 0.0, %v3026
        %3028 = vdwg.mxu0
        %3029 = vmatpush.bf16.msra.mxu0 %v1392
        %3030 = vmatpush.bf16.msra.mxu0 %v1391
        %3031 = vmatpush.bf16.msra.mxu0 %v1390
        %3032 = vmatpush.bf16.msra.mxu0 %v1389
        %3033 = vmatpush.bf16.msra.mxu0 %v1388
        %3034 = vmatpush.bf16.msra.mxu0 %v1387
        %3035 = vmatpush.bf16.msra.mxu0 %v1386
        %3036 = vmatpush.bf16.msra.mxu0 %v1385
        %3037 = vmatmul.bf16.gmra.mxu0 %v1244
        %v3038 = vpop.f32.mrf.mxu0
        %v3039 = vadd.f32 %v3010, %v3038
        %v3040 = vpop.f32.mrf.mxu0
        %v3041 = vadd.f32 %v3012, %v3040
        %3042 = vmatmul.bf16.gmra.mxu0 %v1245
        %v3043 = vpop.f32.mrf.mxu0
        %v3044 = vadd.f32 %v3015, %v3043
        %v3045 = vpop.f32.mrf.mxu0
        %v3046 = vadd.f32 %v3017, %v3045
        %3047 = vmatmul.bf16.gmra.mxu0 %v1246
        %v3048 = vpop.f32.mrf.mxu0
        %v3049 = vadd.f32 %v3020, %v3048
        %v3050 = vpop.f32.mrf.mxu0
        %v3051 = vadd.f32 %v3022, %v3050
        %3052 = vmatmul.bf16.gmra.mxu0 %v1247
        %v3053 = vpop.f32.mrf.mxu0
        %v3054 = vadd.f32 %v3025, %v3053
        %v3055 = vpop.f32.mrf.mxu0
        %v3056 = vadd.f32 %v3027, %v3055
        %3057 = vdwg.mxu0
        %v3059 = vshrl.u32 %v1172, 16
        %v3061 = vrot.slane %v3059, 4
        %v3062 = vshll.u32 %v1172, 16
        %v3064 = vrot.slane %v3062, 5
        %v3065 = vor.u32 %v3061, %v3064
        %v3066 = vrot.slane %v3065, 4
        %v3068 = vshll.u32 %v1173, 16
        %v3070 = vrot.slane %v3068, 5
        %v3071 = vsel %vm1432, %v3066, %v3070
        %v3073 = vshrl.u32 %v1174, 16
        %v3075 = vrot.slane %v3073, 4
        %v3076 = vshll.u32 %v1174, 16
        %v3078 = vrot.slane %v3076, 5
        %v3079 = vor.u32 %v3075, %v3078
        %v3080 = vrot.slane %v3079, 4
        %v3082 = vshll.u32 %v1175, 16
        %v3084 = vrot.slane %v3082, 5
        %v3085 = vsel %vm1432, %v3080, %v3084
        %v3087 = vshrl.u32 %v1176, 16
        %v3089 = vrot.slane %v3087, 4
        %v3090 = vshll.u32 %v1176, 16
        %v3092 = vrot.slane %v3090, 5
        %v3093 = vor.u32 %v3089, %v3092
        %v3094 = vrot.slane %v3093, 4
        %v3096 = vshll.u32 %v1177, 16
        %v3098 = vrot.slane %v3096, 5
        %v3099 = vsel %vm1432, %v3094, %v3098
        %v3101 = vshrl.u32 %v1178, 16
        %v3103 = vrot.slane %v3101, 4
        %v3104 = vshll.u32 %v1178, 16
        %v3106 = vrot.slane %v3104, 5
        %v3107 = vor.u32 %v3103, %v3106
        %v3108 = vrot.slane %v3107, 4
        %v3110 = vshll.u32 %v1179, 16
        %v3112 = vrot.slane %v3110, 5
        %v3113 = vsel %vm1432, %v3108, %v3112
        %v3115 = vshrl.u32 %v1180, 16
        %v3117 = vrot.slane %v3115, 4
        %v3118 = vshll.u32 %v1180, 16
        %v3120 = vrot.slane %v3118, 5
        %v3121 = vor.u32 %v3117, %v3120
        %v3122 = vrot.slane %v3121, 4
        %v3124 = vshll.u32 %v1181, 16
        %v3126 = vrot.slane %v3124, 5
        %v3127 = vsel %vm1432, %v3122, %v3126
        %v3129 = vshrl.u32 %v1182, 16
        %v3131 = vrot.slane %v3129, 4
        %v3132 = vshll.u32 %v1182, 16
        %v3134 = vrot.slane %v3132, 5
        %v3135 = vor.u32 %v3131, %v3134
        %v3136 = vrot.slane %v3135, 4
        %v3138 = vshll.u32 %v1183, 16
        %v3140 = vrot.slane %v3138, 5
        %v3141 = vsel %vm1432, %v3136, %v3140
        %v3143 = vshrl.u32 %v1184, 16
        %v3145 = vrot.slane %v3143, 4
        %v3146 = vshll.u32 %v1184, 16
        %v3148 = vrot.slane %v3146, 5
        %v3149 = vor.u32 %v3145, %v3148
        %v3150 = vrot.slane %v3149, 4
        %v3152 = vshll.u32 %v1185, 16
        %v3154 = vrot.slane %v3152, 5
        %v3155 = vsel %vm1432, %v3150, %v3154
        %v3157 = vshrl.u32 %v1186, 16
        %v3159 = vrot.slane %v3157, 4
        %v3160 = vshll.u32 %v1186, 16
        %v3162 = vrot.slane %v3160, 5
        %v3163 = vor.u32 %v3159, %v3162
        %v3164 = vrot.slane %v3163, 4
        %v3166 = vshll.u32 %v1187, 16
        %v3168 = vrot.slane %v3166, 5
        %v3169 = vsel %vm1432, %v3164, %v3168
        %v3170 = vunpack.c.l.b16 %v3071
        %v3171 = vunpack.c.l.b16 %v3085
        %v3172 = vunpack.c.l.b16 %v3099
        %v3173 = vunpack.c.l.b16 %v3113
        %v3174 = vunpack.c.l.b16 %v3127
        %v3175 = vunpack.c.l.b16 %v3141
        %v3176 = vunpack.c.l.b16 %v3155
        %v3177 = vunpack.c.l.b16 %v3169
        %v3178 = vpack.c.b16 %v3171, %v3170
        %v3179 = vpack.c.b16 %v3173, %v3172
        %v3180 = vpack.c.b16 %v3175, %v3174
        %v3181 = vpack.c.b16 %v3177, %v3176
        %3186 = vmatpush.bf16.msra.mxu0 %v1600
        %3187 = vmatpush.bf16.msra.mxu0 %v1599
        %3188 = vmatpush.bf16.msra.mxu0 %v1598
        %3189 = vmatpush.bf16.msra.mxu0 %v1597
        %3190 = vmatpush.bf16.msra.mxu0 %v1596
        %3191 = vmatpush.bf16.msra.mxu0 %v1595
        %3192 = vmatpush.bf16.msra.mxu0 %v1594
        %3193 = vmatpush.bf16.msra.mxu0 %v1593
        %3194 = vmatmul.bf16.gmra.mxu0 %v3178
        %v3195 = vpop.f32.mrf.mxu0
        %v3196 = vadd.f32 0.0, %v3195
        %v3197 = vpop.f32.mrf.mxu0
        %v3198 = vadd.f32 0.0, %v3197
        %3199 = vmatmul.bf16.gmra.mxu0 %v3179
        %v3200 = vpop.f32.mrf.mxu0
        %v3201 = vadd.f32 0.0, %v3200
        %v3202 = vpop.f32.mrf.mxu0
        %v3203 = vadd.f32 0.0, %v3202
        %3204 = vmatmul.bf16.gmra.mxu0 %v3180
        %v3205 = vpop.f32.mrf.mxu0
        %v3206 = vadd.f32 0.0, %v3205
        %v3207 = vpop.f32.mrf.mxu0
        %v3208 = vadd.f32 0.0, %v3207
        %3209 = vmatmul.bf16.gmra.mxu0 %v3181
        %v3210 = vpop.f32.mrf.mxu0
        %v3211 = vadd.f32 0.0, %v3210
        %v3212 = vpop.f32.mrf.mxu0
        %v3213 = vadd.f32 0.0, %v3212
        %3214 = vdwg.mxu0
        %v3215 = vadd.f32 %v3039, %v3196
        %v3216 = vadd.f32 %v3041, %v3198
        %v3217 = vadd.f32 %v3044, %v3201
        %v3218 = vadd.f32 %v3046, %v3203
        %v3219 = vadd.f32 %v3049, %v3206
        %v3220 = vadd.f32 %v3051, %v3208
        %v3221 = vadd.f32 %v3054, %v3211
        %v3222 = vadd.f32 %v3056, %v3213
        %3223 = vmatpush.bf16.msra.mxu0 %v1709
        %3224 = vmatpush.bf16.msra.mxu0 %v1708
        %3225 = vmatpush.bf16.msra.mxu0 %v1707
        %3226 = vmatpush.bf16.msra.mxu0 %v1706
        %3227 = vmatpush.bf16.msra.mxu0 %v1705
        %3228 = vmatpush.bf16.msra.mxu0 %v1704
        %3229 = vmatpush.bf16.msra.mxu0 %v1703
        %3230 = vmatpush.bf16.msra.mxu0 %v1702
        %3231 = vmatmul.bf16.gmra.mxu0 %v1771
        %v3232 = vpop.f32.mrf.mxu0
        %v3233 = vadd.f32 0.0, %v3232
        %v3234 = vpop.f32.mrf.mxu0
        %v3235 = vadd.f32 0.0, %v3234
        %3236 = vmatmul.bf16.gmra.mxu0 %v1772
        %v3237 = vpop.f32.mrf.mxu0
        %v3238 = vadd.f32 0.0, %v3237
        %v3239 = vpop.f32.mrf.mxu0
        %v3240 = vadd.f32 0.0, %v3239
        %3241 = vmatmul.bf16.gmra.mxu0 %v1773
        %v3242 = vpop.f32.mrf.mxu0
        %v3243 = vadd.f32 0.0, %v3242
        %v3244 = vpop.f32.mrf.mxu0
        %v3245 = vadd.f32 0.0, %v3244
        %3246 = vmatmul.bf16.gmra.mxu0 %v1774
        %v3247 = vpop.f32.mrf.mxu0
        %v3248 = vadd.f32 0.0, %v3247
        %v3249 = vpop.f32.mrf.mxu0
        %v3250 = vadd.f32 0.0, %v3249
        %3251 = vdwg.mxu0
        %v3252 = vadd.f32 %v3215, %v3233
        %v3253 = vadd.f32 %v3216, %v3235
        %v3254 = vadd.f32 %v3217, %v3238
        %v3255 = vadd.f32 %v3218, %v3240
        %v3256 = vadd.f32 %v3219, %v3243
        %v3257 = vadd.f32 %v3220, %v3245
        %v3258 = vadd.f32 %v3221, %v3248
        %v3259 = vadd.f32 %v3222, %v3250
        %3260 = vmatpush.bf16.msra.mxu0 %v1818
        %3261 = vmatpush.bf16.msra.mxu0 %v1817
        %3262 = vmatpush.bf16.msra.mxu0 %v1816
        %3263 = vmatpush.bf16.msra.mxu0 %v1815
        %3264 = vmatpush.bf16.msra.mxu0 %v1814
        %3265 = vmatpush.bf16.msra.mxu0 %v1813
        %3266 = vmatpush.bf16.msra.mxu0 %v1812
        %3267 = vmatpush.bf16.msra.mxu0 %v1811
        %3268 = vmatmul.bf16.gmra.mxu0 %v1984
        %v3269 = vpop.f32.mrf.mxu0
        %v3270 = vadd.f32 0.0, %v3269
        %v3271 = vpop.f32.mrf.mxu0
        %v3272 = vadd.f32 0.0, %v3271
        %3273 = vmatmul.bf16.gmra.mxu0 %v1985
        %v3274 = vpop.f32.mrf.mxu0
        %v3275 = vadd.f32 0.0, %v3274
        %v3276 = vpop.f32.mrf.mxu0
        %v3277 = vadd.f32 0.0, %v3276
        %3278 = vmatmul.bf16.gmra.mxu0 %v1986
        %v3279 = vpop.f32.mrf.mxu0
        %v3280 = vadd.f32 0.0, %v3279
        %v3281 = vpop.f32.mrf.mxu0
        %v3282 = vadd.f32 0.0, %v3281
        %3283 = vmatmul.bf16.gmra.mxu0 %v1987
        %v3284 = vpop.f32.mrf.mxu0
        %v3285 = vadd.f32 0.0, %v3284
        %v3286 = vpop.f32.mrf.mxu0
        %v3287 = vadd.f32 0.0, %v3286
        %3288 = vdwg.mxu0
        %v3289 = vadd.f32 %v3252, %v3270
        %v3290 = vadd.f32 %v3253, %v3272
        %v3291 = vadd.f32 %v3254, %v3275
        %v3292 = vadd.f32 %v3255, %v3277
        %v3293 = vadd.f32 %v3256, %v3280
        %v3294 = vadd.f32 %v3257, %v3282
        %v3295 = vadd.f32 %v3258, %v3285
        %v3296 = vadd.f32 %v3259, %v3287
        %v3298 = vshrl.u32 %v1210, 16
        %v3300 = vrot.slane %v3298, 4
        %v3301 = vshll.u32 %v1210, 16
        %v3303 = vrot.slane %v3301, 5
        %v3304 = vor.u32 %v3300, %v3303
        %v3305 = vrot.slane %v3304, 4
        %v3307 = vshll.u32 %v1211, 16
        %v3309 = vrot.slane %v3307, 5
        %v3310 = vsel %vm1432, %v3305, %v3309
        %v3312 = vshrl.u32 %v1212, 16
        %v3314 = vrot.slane %v3312, 4
        %v3315 = vshll.u32 %v1212, 16
        %v3317 = vrot.slane %v3315, 5
        %v3318 = vor.u32 %v3314, %v3317
        %v3319 = vrot.slane %v3318, 4
        %v3321 = vshll.u32 %v1213, 16
        %v3323 = vrot.slane %v3321, 5
        %v3324 = vsel %vm1432, %v3319, %v3323
        %v3326 = vshrl.u32 %v1214, 16
        %v3328 = vrot.slane %v3326, 4
        %v3329 = vshll.u32 %v1214, 16
        %v3331 = vrot.slane %v3329, 5
        %v3332 = vor.u32 %v3328, %v3331
        %v3333 = vrot.slane %v3332, 4
        %v3335 = vshll.u32 %v1215, 16
        %v3337 = vrot.slane %v3335, 5
        %v3338 = vsel %vm1432, %v3333, %v3337
        %v3340 = vshrl.u32 %v1216, 16
        %v3342 = vrot.slane %v3340, 4
        %v3343 = vshll.u32 %v1216, 16
        %v3345 = vrot.slane %v3343, 5
        %v3346 = vor.u32 %v3342, %v3345
        %v3347 = vrot.slane %v3346, 4
        %v3349 = vshll.u32 %v1217, 16
        %v3351 = vrot.slane %v3349, 5
        %v3352 = vsel %vm1432, %v3347, %v3351
        %v3354 = vshrl.u32 %v1218, 16
        %v3356 = vrot.slane %v3354, 4
        %v3357 = vshll.u32 %v1218, 16
        %v3359 = vrot.slane %v3357, 5
        %v3360 = vor.u32 %v3356, %v3359
        %v3361 = vrot.slane %v3360, 4
        %v3363 = vshll.u32 %v1219, 16
        %v3365 = vrot.slane %v3363, 5
        %v3366 = vsel %vm1432, %v3361, %v3365
        %v3368 = vshrl.u32 %v1220, 16
        %v3370 = vrot.slane %v3368, 4
        %v3371 = vshll.u32 %v1220, 16
        %v3373 = vrot.slane %v3371, 5
        %v3374 = vor.u32 %v3370, %v3373
        %v3375 = vrot.slane %v3374, 4
        %v3377 = vshll.u32 %v1221, 16
        %v3379 = vrot.slane %v3377, 5
        %v3380 = vsel %vm1432, %v3375, %v3379
        %v3382 = vshrl.u32 %v1222, 16
        %v3384 = vrot.slane %v3382, 4
        %v3385 = vshll.u32 %v1222, 16
        %v3387 = vrot.slane %v3385, 5
        %v3388 = vor.u32 %v3384, %v3387
        %v3389 = vrot.slane %v3388, 4
        %v3391 = vshll.u32 %v1223, 16
        %v3393 = vrot.slane %v3391, 5
        %v3394 = vsel %vm1432, %v3389, %v3393
        %v3396 = vshrl.u32 %v1224, 16
        %v3398 = vrot.slane %v3396, 4
        %v3399 = vshll.u32 %v1224, 16
        %v3401 = vrot.slane %v3399, 5
        %v3402 = vor.u32 %v3398, %v3401
        %v3403 = vrot.slane %v3402, 4
        %v3405 = vshll.u32 %v1225, 16
        %v3407 = vrot.slane %v3405, 5
        %v3408 = vsel %vm1432, %v3403, %v3407
        %v3409 = vunpack.c.l.b16 %v3310
        %v3410 = vunpack.c.l.b16 %v3324
        %v3411 = vunpack.c.l.b16 %v3338
        %v3412 = vunpack.c.l.b16 %v3352
        %v3413 = vunpack.c.l.b16 %v3366
        %v3414 = vunpack.c.l.b16 %v3380
        %v3415 = vunpack.c.l.b16 %v3394
        %v3416 = vunpack.c.l.b16 %v3408
        %v3417 = vpack.c.b16 %v3410, %v3409
        %v3418 = vpack.c.b16 %v3412, %v3411
        %v3419 = vpack.c.b16 %v3414, %v3413
        %v3420 = vpack.c.b16 %v3416, %v3415
        %3425 = vmatpush.bf16.msra.mxu0 %v2031
        %3426 = vmatpush.bf16.msra.mxu0 %v2030
        %3427 = vmatpush.bf16.msra.mxu0 %v2029
        %3428 = vmatpush.bf16.msra.mxu0 %v2028
        %3429 = vmatpush.bf16.msra.mxu0 %v2027
        %3430 = vmatpush.bf16.msra.mxu0 %v2026
        %3431 = vmatpush.bf16.msra.mxu0 %v2025
        %3432 = vmatpush.bf16.msra.mxu0 %v2024
        %3433 = vmatmul.bf16.gmra.mxu0 %v3417
        %v3434 = vpop.f32.mrf.mxu0
        %v3435 = vadd.f32 0.0, %v3434
        %v3436 = vpop.f32.mrf.mxu0
        %v3437 = vadd.f32 0.0, %v3436
        %3438 = vmatmul.bf16.gmra.mxu0 %v3418
        %v3439 = vpop.f32.mrf.mxu0
        %v3440 = vadd.f32 0.0, %v3439
        %v3441 = vpop.f32.mrf.mxu0
        %v3442 = vadd.f32 0.0, %v3441
        %3443 = vmatmul.bf16.gmra.mxu0 %v3419
        %v3444 = vpop.f32.mrf.mxu0
        %v3445 = vadd.f32 0.0, %v3444
        %v3446 = vpop.f32.mrf.mxu0
        %v3447 = vadd.f32 0.0, %v3446
        %3448 = vmatmul.bf16.gmra.mxu0 %v3420
        %v3449 = vpop.f32.mrf.mxu0
        %v3450 = vadd.f32 0.0, %v3449
        %v3451 = vpop.f32.mrf.mxu0
        %v3452 = vadd.f32 0.0, %v3451
        %3453 = vdwg.mxu0
        %v3454 = vadd.f32 %v3289, %v3435
        %v3455 = vadd.f32 %v3290, %v3437
        %v3456 = vadd.f32 %v3291, %v3440
        %v3457 = vadd.f32 %v3292, %v3442
        %v3458 = vadd.f32 %v3293, %v3445
        %v3459 = vadd.f32 %v3294, %v3447
        %v3460 = vadd.f32 %v3295, %v3450
        %v3461 = vadd.f32 %v3296, %v3452
        %3462 = vmatpush.bf16.msra.mxu0 %v2126
        %3463 = vmatpush.bf16.msra.mxu0 %v2125
        %3464 = vmatpush.bf16.msra.mxu0 %v2124
        %3465 = vmatpush.bf16.msra.mxu0 %v2123
        %3466 = vmatpush.bf16.msra.mxu0 %v2122
        %3467 = vmatpush.bf16.msra.mxu0 %v2121
        %3468 = vmatpush.bf16.msra.mxu0 %v2120
        %3469 = vmatpush.bf16.msra.mxu0 %v2119
        %3470 = vmatmul.bf16.gmra.mxu0 %v2174
        %v3471 = vpop.f32.mrf.mxu0
        %v3472 = vadd.f32 0.0, %v3471
        %v3473 = vpop.f32.mrf.mxu0
        %v3474 = vadd.f32 0.0, %v3473
        %3475 = vmatmul.bf16.gmra.mxu0 %v2175
        %v3476 = vpop.f32.mrf.mxu0
        %v3477 = vadd.f32 0.0, %v3476
        %v3478 = vpop.f32.mrf.mxu0
        %v3479 = vadd.f32 0.0, %v3478
        %3480 = vmatmul.bf16.gmra.mxu0 %v2176
        %v3481 = vpop.f32.mrf.mxu0
        %v3482 = vadd.f32 0.0, %v3481
        %v3483 = vpop.f32.mrf.mxu0
        %v3484 = vadd.f32 0.0, %v3483
        %3485 = vmatmul.bf16.gmra.mxu0 %v2177
        %v3486 = vpop.f32.mrf.mxu0
        %v3487 = vadd.f32 0.0, %v3486
        %v3488 = vpop.f32.mrf.mxu0
        %v3489 = vadd.f32 0.0, %v3488
        %3490 = vdwg.mxu0
        %v3491 = vadd.f32 %v3454, %v3472
        %v3492 = vadd.f32 %v3455, %v3474
        %v3493 = vadd.f32 %v3456, %v3477
        %v3494 = vadd.f32 %v3457, %v3479
        %v3495 = vadd.f32 %v3458, %v3482
        %v3496 = vadd.f32 %v3459, %v3484
        %v3497 = vadd.f32 %v3460, %v3487
        %v3498 = vadd.f32 %v3461, %v3489
        %3499 = vmatpush.bf16.msra.mxu0 %v2221
        %3500 = vmatpush.bf16.msra.mxu0 %v2220
        %3501 = vmatpush.bf16.msra.mxu0 %v2219
        %3502 = vmatpush.bf16.msra.mxu0 %v2218
        %3503 = vmatpush.bf16.msra.mxu0 %v2217
        %3504 = vmatpush.bf16.msra.mxu0 %v2216
        %3505 = vmatpush.bf16.msra.mxu0 %v2215
        %3506 = vmatpush.bf16.msra.mxu0 %v2214
        %3507 = vmatmul.bf16.gmra.mxu0 %v2282
        %v3508 = vpop.f32.mrf.mxu0
        %v3509 = vadd.f32 0.0, %v3508
        %v3510 = vpop.f32.mrf.mxu0
        %v3511 = vadd.f32 0.0, %v3510
        %3512 = vmatmul.bf16.gmra.mxu0 %v2283
        %v3513 = vpop.f32.mrf.mxu0
        %v3514 = vadd.f32 0.0, %v3513
        %v3515 = vpop.f32.mrf.mxu0
        %v3516 = vadd.f32 0.0, %v3515
        %3517 = vmatmul.bf16.gmra.mxu0 %v2284
        %v3518 = vpop.f32.mrf.mxu0
        %v3519 = vadd.f32 0.0, %v3518
        %v3520 = vpop.f32.mrf.mxu0
        %v3521 = vadd.f32 0.0, %v3520
        %3522 = vmatmul.bf16.gmra.mxu0 %v2285
        %v3523 = vpop.f32.mrf.mxu0
        %v3524 = vadd.f32 0.0, %v3523
        %v3525 = vpop.f32.mrf.mxu0
        %v3526 = vadd.f32 0.0, %v3525
        %3527 = vdwg.mxu0
        %v3528 = vadd.f32 %v3491, %v3509
        %v3529 = vadd.f32 %v3492, %v3511
        %v3530 = vadd.f32 %v3493, %v3514
        %v3531 = vadd.f32 %v3494, %v3516
        %v3532 = vadd.f32 %v3495, %v3519
        %v3533 = vadd.f32 %v3496, %v3521
        %v3534 = vadd.f32 %v3497, %v3524
        %v3535 = vadd.f32 %v3498, %v3526
        %v3537 = vshrl.u32 %v1188, 16
        %v3539 = vrot.slane %v3537, 4
        %v3540 = vshll.u32 %v1188, 16
        %v3542 = vrot.slane %v3540, 5
        %v3543 = vor.u32 %v3539, %v3542
        %v3544 = vrot.slane %v3543, 4
        %v3546 = vshll.u32 %v1189, 16
        %v3548 = vrot.slane %v3546, 5
        %v3549 = vsel %vm1432, %v3544, %v3548
        %v3550 = vunpack.c.l.b16 %v3549
        %v3551 = vpack.c.b16 %v3172, %v3171
        %v3552 = vpack.c.b16 %v3174, %v3173
        %v3553 = vpack.c.b16 %v3176, %v3175
        %v3554 = vpack.c.b16 %v3550, %v3177
        %3559 = vmatpush.bf16.msra.mxu0 %v2329
        %3560 = vmatpush.bf16.msra.mxu0 %v2328
        %3561 = vmatpush.bf16.msra.mxu0 %v2327
        %3562 = vmatpush.bf16.msra.mxu0 %v2326
        %3563 = vmatpush.bf16.msra.mxu0 %v2325
        %3564 = vmatpush.bf16.msra.mxu0 %v2324
        %3565 = vmatpush.bf16.msra.mxu0 %v2323
        %3566 = vmatpush.bf16.msra.mxu0 %v2322
        %3567 = vmatmul.bf16.gmra.mxu0 %v3551
        %v3568 = vpop.f32.mrf.mxu0
        %v3569 = vadd.f32 0.0, %v3568
        %v3570 = vpop.f32.mrf.mxu0
        %v3571 = vadd.f32 0.0, %v3570
        %3572 = vmatmul.bf16.gmra.mxu0 %v3552
        %v3573 = vpop.f32.mrf.mxu0
        %v3574 = vadd.f32 0.0, %v3573
        %v3575 = vpop.f32.mrf.mxu0
        %v3576 = vadd.f32 0.0, %v3575
        %3577 = vmatmul.bf16.gmra.mxu0 %v3553
        %v3578 = vpop.f32.mrf.mxu0
        %v3579 = vadd.f32 0.0, %v3578
        %v3580 = vpop.f32.mrf.mxu0
        %v3581 = vadd.f32 0.0, %v3580
        %3582 = vmatmul.bf16.gmra.mxu0 %v3554
        %v3583 = vpop.f32.mrf.mxu0
        %v3584 = vadd.f32 0.0, %v3583
        %v3585 = vpop.f32.mrf.mxu0
        %v3586 = vadd.f32 0.0, %v3585
        %3587 = vdwg.mxu0
        %v3588 = vadd.f32 %v3528, %v3569
        %v3589 = vadd.f32 %v3529, %v3571
        %v3590 = vadd.f32 %v3530, %v3574
        %v3591 = vadd.f32 %v3531, %v3576
        %v3592 = vadd.f32 %v3532, %v3579
        %v3593 = vadd.f32 %v3533, %v3581
        %v3594 = vadd.f32 %v3534, %v3584
        %v3595 = vadd.f32 %v3535, %v3586
        %vm3604 = vcmask 1042432
        %vm3605 = vcmask 1046532
        %vm3606 = vmor %vm3604, %vm3605
        %v3607 = vrot.slane %v1135, 5
        %v3608 = vrot.slane %v3607, 4
        %v3609 = vrot.slane %v1136, 5
        %v3610 = vsel %vm3606, %v3608, %v3609
        %v3611 = vrot.slane %v1137, 5
        %v3612 = vrot.slane %v3611, 4
        %v3613 = vrot.slane %v1138, 5
        %v3614 = vsel %vm3606, %v3612, %v3613
        %v3615 = vrot.slane %v1139, 5
        %v3616 = vrot.slane %v3615, 4
        %v3617 = vrot.slane %v1140, 5
        %v3618 = vsel %vm3606, %v3616, %v3617
        %v3619 = vrot.slane %v1141, 5
        %v3620 = vrot.slane %v3619, 4
        %v3621 = vrot.slane %v1142, 5
        %v3622 = vsel %vm3606, %v3620, %v3621
        %v3623 = vrot.slane %v1143, 5
        %v3624 = vrot.slane %v3623, 4
        %v3625 = vrot.slane %v1144, 5
        %v3626 = vsel %vm3606, %v3624, %v3625
        %v3627 = vrot.slane %v1145, 5
        %v3628 = vrot.slane %v3627, 4
        %v3629 = vrot.slane %v1146, 5
        %v3630 = vsel %vm3606, %v3628, %v3629
        %v3631 = vrot.slane %v1147, 5
        %v3632 = vrot.slane %v3631, 4
        %v3633 = vrot.slane %v1148, 5
        %v3634 = vsel %vm3606, %v3632, %v3633
        %v3635 = vrot.slane %v1149, 5
        %v3636 = vrot.slane %v3635, 4
        %v3637 = vrot.slane %v1150, 5
        %v3638 = vsel %vm3606, %v3636, %v3637
        %s3639 = scalar_lea.vmem %s5, 256
        %v3640 = vld [vmem:[%s3639] sm:$0xf]
        %v3641 = vld [vmem:[%s3639 + $0x4] sm:$0xf]
        %v3642 = vld [vmem:[%s3639 + $0x8] sm:$0xf]
        %v3643 = vld [vmem:[%s3639 + $0xc] sm:$0xf]
        %v3644 = vld [vmem:[%s3639 + $0x10] sm:$0xf]
        %v3645 = vld [vmem:[%s3639 + $0x14] sm:$0xf]
        %v3646 = vld [vmem:[%s3639 + $0x18] sm:$0xf]
        %v3647 = vld [vmem:[%s3639 + $0x1c] sm:$0xf]
        %v3648 = vld [vmem:[%s3639 + $0x20] sm:$0xf]
        %v3649 = vld [vmem:[%s3639 + $0x24] sm:$0xf]
        %v3650 = vld [vmem:[%s3639 + $0x28] sm:$0xf]
        %v3651 = vld [vmem:[%s3639 + $0x2c] sm:$0xf]
        %v3652 = vld [vmem:[%s3639 + $0x30] sm:$0xf]
        %v3653 = vld [vmem:[%s3639 + $0x34] sm:$0xf]
        %v3654 = vld [vmem:[%s3639 + $0x38] sm:$0xf]
        %v3655 = vld [vmem:[%s3639 + $0x3c] sm:$0xf]
        %v3656 = vunpack.c.l.b16 %v3610
        %v3657 = vunpack.c.l.b16 %v3614
        %v3658 = vunpack.c.l.b16 %v3618
        %v3659 = vunpack.c.l.b16 %v3622
        %v3660 = vunpack.c.l.b16 %v3626
        %v3661 = vunpack.c.l.b16 %v3630
        %v3662 = vunpack.c.l.b16 %v3634
        %v3663 = vunpack.c.l.b16 %v3638
        %v3664 = vpack.c.b16 %v3657, %v3656
        %v3665 = vpack.c.b16 %v3659, %v3658
        %v3666 = vpack.c.b16 %v3661, %v3660
        %v3667 = vpack.c.b16 %v3663, %v3662
        %v3688 = vunpack.c.l.b16 %v3640
        %v3689 = vunpack.c.l.b16 %v3641
        %v3690 = vunpack.c.l.b16 %v3642
        %v3691 = vunpack.c.l.b16 %v3643
        %v3692 = vunpack.c.l.b16 %v3644
        %v3693 = vunpack.c.l.b16 %v3645
        %v3694 = vunpack.c.l.b16 %v3646
        %v3695 = vunpack.c.l.b16 %v3647
        %v3696 = vunpack.c.l.b16 %v3648
        %v3697 = vunpack.c.l.b16 %v3649
        %v3698 = vunpack.c.l.b16 %v3650
        %v3699 = vunpack.c.l.b16 %v3651
        %v3700 = vunpack.c.l.b16 %v3652
        %v3701 = vunpack.c.l.b16 %v3653
        %v3702 = vunpack.c.l.b16 %v3654
        %v3703 = vunpack.c.l.b16 %v3655
        %v3704 = vpack.c.b16 %v3689, %v3688
        %v3705 = vpack.c.b16 %v3691, %v3690
        %v3706 = vpack.c.b16 %v3693, %v3692
        %v3707 = vpack.c.b16 %v3695, %v3694
        %v3708 = vpack.c.b16 %v3697, %v3696
        %v3709 = vpack.c.b16 %v3699, %v3698
        %v3710 = vpack.c.b16 %v3701, %v3700
        %v3711 = vpack.c.b16 %v3703, %v3702
        %3720 = vmatpush.bf16.msra.mxu0 %v3711
        %3721 = vmatpush.bf16.msra.mxu0 %v3710
        %3722 = vmatpush.bf16.msra.mxu0 %v3709
        %3723 = vmatpush.bf16.msra.mxu0 %v3708
        %3724 = vmatpush.bf16.msra.mxu0 %v3707
        %3725 = vmatpush.bf16.msra.mxu0 %v3706
        %3726 = vmatpush.bf16.msra.mxu0 %v3705
        %3727 = vmatpush.bf16.msra.mxu0 %v3704
        %3728 = vmatmul.bf16.gmra.mxu0 %v3664
        %v3729 = vpop.f32.mrf.mxu0
        %v3730 = vadd.f32 0.0, %v3729
        %v3731 = vpop.f32.mrf.mxu0
        %v3732 = vadd.f32 0.0, %v3731
        %3733 = vmatmul.bf16.gmra.mxu0 %v3665
        %v3734 = vpop.f32.mrf.mxu0
        %v3735 = vadd.f32 0.0, %v3734
        %v3736 = vpop.f32.mrf.mxu0
        %v3737 = vadd.f32 0.0, %v3736
        %3738 = vmatmul.bf16.gmra.mxu0 %v3666
        %v3739 = vpop.f32.mrf.mxu0
        %v3740 = vadd.f32 0.0, %v3739
        %v3741 = vpop.f32.mrf.mxu0
        %v3742 = vadd.f32 0.0, %v3741
        %3743 = vmatmul.bf16.gmra.mxu0 %v3667
        %v3744 = vpop.f32.mrf.mxu0
        %v3745 = vadd.f32 0.0, %v3744
        %v3746 = vpop.f32.mrf.mxu0
        %v3747 = vadd.f32 0.0, %v3746
        %3748 = vdwg.mxu0
        %v3749 = vadd.f32 %v3588, %v3730
        %v3750 = vadd.f32 %v3589, %v3732
        %v3751 = vadd.f32 %v3590, %v3735
        %v3752 = vadd.f32 %v3591, %v3737
        %v3753 = vadd.f32 %v3592, %v3740
        %v3754 = vadd.f32 %v3593, %v3742
        %v3755 = vadd.f32 %v3594, %v3745
        %v3756 = vadd.f32 %v3595, %v3747
        %s3757 = scalar_lea.vmem %s5, 320
        %v3758 = vld [vmem:[%s3757] sm:$0xf]
        %v3759 = vld [vmem:[%s3757 + $0x4] sm:$0xf]
        %v3760 = vld [vmem:[%s3757 + $0x8] sm:$0xf]
        %v3761 = vld [vmem:[%s3757 + $0xc] sm:$0xf]
        %v3762 = vld [vmem:[%s3757 + $0x10] sm:$0xf]
        %v3763 = vld [vmem:[%s3757 + $0x14] sm:$0xf]
        %v3764 = vld [vmem:[%s3757 + $0x18] sm:$0xf]
        %v3765 = vld [vmem:[%s3757 + $0x1c] sm:$0xf]
        %v3766 = vld [vmem:[%s3757 + $0x20] sm:$0xf]
        %v3767 = vld [vmem:[%s3757 + $0x24] sm:$0xf]
        %v3768 = vld [vmem:[%s3757 + $0x28] sm:$0xf]
        %v3769 = vld [vmem:[%s3757 + $0x2c] sm:$0xf]
        %v3770 = vld [vmem:[%s3757 + $0x30] sm:$0xf]
        %v3771 = vld [vmem:[%s3757 + $0x34] sm:$0xf]
        %v3772 = vld [vmem:[%s3757 + $0x38] sm:$0xf]
        %v3773 = vld [vmem:[%s3757 + $0x3c] sm:$0xf]
        %v3790 = vunpack.c.l.b16 %v3758
        %v3791 = vunpack.c.l.b16 %v3759
        %v3792 = vunpack.c.l.b16 %v3760
        %v3793 = vunpack.c.l.b16 %v3761
        %v3794 = vunpack.c.l.b16 %v3762
        %v3795 = vunpack.c.l.b16 %v3763
        %v3796 = vunpack.c.l.b16 %v3764
        %v3797 = vunpack.c.l.b16 %v3765
        %v3798 = vunpack.c.l.b16 %v3766
        %v3799 = vunpack.c.l.b16 %v3767
        %v3800 = vunpack.c.l.b16 %v3768
        %v3801 = vunpack.c.l.b16 %v3769
        %v3802 = vunpack.c.l.b16 %v3770
        %v3803 = vunpack.c.l.b16 %v3771
        %v3804 = vunpack.c.l.b16 %v3772
        %v3805 = vunpack.c.l.b16 %v3773
        %v3806 = vpack.c.b16 %v3791, %v3790
        %v3807 = vpack.c.b16 %v3793, %v3792
        %v3808 = vpack.c.b16 %v3795, %v3794
        %v3809 = vpack.c.b16 %v3797, %v3796
        %v3810 = vpack.c.b16 %v3799, %v3798
        %v3811 = vpack.c.b16 %v3801, %v3800
        %v3812 = vpack.c.b16 %v3803, %v3802
        %v3813 = vpack.c.b16 %v3805, %v3804
        %3822 = vmatpush.bf16.msra.mxu0 %v3813
        %3823 = vmatpush.bf16.msra.mxu0 %v3812
        %3824 = vmatpush.bf16.msra.mxu0 %v3811
        %3825 = vmatpush.bf16.msra.mxu0 %v3810
        %3826 = vmatpush.bf16.msra.mxu0 %v3809
        %3827 = vmatpush.bf16.msra.mxu0 %v3808
        %3828 = vmatpush.bf16.msra.mxu0 %v3807
        %3829 = vmatpush.bf16.msra.mxu0 %v3806
        %3830 = vmatmul.bf16.gmra.mxu0 %v2511
        %v3831 = vpop.f32.mrf.mxu0
        %v3832 = vadd.f32 0.0, %v3831
        %v3833 = vpop.f32.mrf.mxu0
        %v3834 = vadd.f32 0.0, %v3833
        %3835 = vmatmul.bf16.gmra.mxu0 %v2512
        %v3836 = vpop.f32.mrf.mxu0
        %v3837 = vadd.f32 0.0, %v3836
        %v3838 = vpop.f32.mrf.mxu0
        %v3839 = vadd.f32 0.0, %v3838
        %3840 = vmatmul.bf16.gmra.mxu0 %v2513
        %v3841 = vpop.f32.mrf.mxu0
        %v3842 = vadd.f32 0.0, %v3841
        %v3843 = vpop.f32.mrf.mxu0
        %v3844 = vadd.f32 0.0, %v3843
        %3845 = vmatmul.bf16.gmra.mxu0 %v2514
        %v3846 = vpop.f32.mrf.mxu0
        %v3847 = vadd.f32 0.0, %v3846
        %v3848 = vpop.f32.mrf.mxu0
        %v3849 = vadd.f32 0.0, %v3848
        %3850 = vdwg.mxu0
        %v3851 = vadd.f32 %v3749, %v3832
        %v3852 = vadd.f32 %v3750, %v3834
        %v3853 = vadd.f32 %v3751, %v3837
        %v3854 = vadd.f32 %v3752, %v3839
        %v3855 = vadd.f32 %v3753, %v3842
        %v3856 = vadd.f32 %v3754, %v3844
        %v3857 = vadd.f32 %v3755, %v3847
        %v3858 = vadd.f32 %v3756, %v3849
        %v3860 = vrot.slane %v1133, 5
        %v3861 = vrot.slane %v3860, 4
        %v3862 = vrot.slane %v1134, 5
        %v3863 = vsel %vm3606, %v3861, %v3862
        %s3864 = scalar_lea.vmem %s5, 384
        %v3865 = vld [vmem:[%s3864] sm:$0xf]
        %v3866 = vld [vmem:[%s3864 + $0x4] sm:$0xf]
        %v3867 = vld [vmem:[%s3864 + $0x8] sm:$0xf]
        %v3868 = vld [vmem:[%s3864 + $0xc] sm:$0xf]
        %v3869 = vld [vmem:[%s3864 + $0x10] sm:$0xf]
        %v3870 = vld [vmem:[%s3864 + $0x14] sm:$0xf]
        %v3871 = vld [vmem:[%s3864 + $0x18] sm:$0xf]
        %v3872 = vld [vmem:[%s3864 + $0x1c] sm:$0xf]
        %v3873 = vld [vmem:[%s3864 + $0x20] sm:$0xf]
        %v3874 = vld [vmem:[%s3864 + $0x24] sm:$0xf]
        %v3875 = vld [vmem:[%s3864 + $0x28] sm:$0xf]
        %v3876 = vld [vmem:[%s3864 + $0x2c] sm:$0xf]
        %v3877 = vld [vmem:[%s3864 + $0x30] sm:$0xf]
        %v3878 = vld [vmem:[%s3864 + $0x34] sm:$0xf]
        %v3879 = vld [vmem:[%s3864 + $0x38] sm:$0xf]
        %v3880 = vld [vmem:[%s3864 + $0x3c] sm:$0xf]
        %v3881 = vunpack.c.l.b16 %v3863
        %v3882 = vpack.c.b16 %v3656, %v3881
        %v3883 = vpack.c.b16 %v3658, %v3657
        %v3884 = vpack.c.b16 %v3660, %v3659
        %v3885 = vpack.c.b16 %v3662, %v3661
        %v3906 = vunpack.c.l.b16 %v3865
        %v3907 = vunpack.c.l.b16 %v3866
        %v3908 = vunpack.c.l.b16 %v3867
        %v3909 = vunpack.c.l.b16 %v3868
        %v3910 = vunpack.c.l.b16 %v3869
        %v3911 = vunpack.c.l.b16 %v3870
        %v3912 = vunpack.c.l.b16 %v3871
        %v3913 = vunpack.c.l.b16 %v3872
        %v3914 = vunpack.c.l.b16 %v3873
        %v3915 = vunpack.c.l.b16 %v3874
        %v3916 = vunpack.c.l.b16 %v3875
        %v3917 = vunpack.c.l.b16 %v3876
        %v3918 = vunpack.c.l.b16 %v3877
        %v3919 = vunpack.c.l.b16 %v3878
        %v3920 = vunpack.c.l.b16 %v3879
        %v3921 = vunpack.c.l.b16 %v3880
        %v3922 = vpack.c.b16 %v3907, %v3906
        %v3923 = vpack.c.b16 %v3909, %v3908
        %v3924 = vpack.c.b16 %v3911, %v3910
        %v3925 = vpack.c.b16 %v3913, %v3912
        %v3926 = vpack.c.b16 %v3915, %v3914
        %v3927 = vpack.c.b16 %v3917, %v3916
        %v3928 = vpack.c.b16 %v3919, %v3918
        %v3929 = vpack.c.b16 %v3921, %v3920
        %3938 = vmatpush.bf16.msra.mxu0 %v3929
        %3939 = vmatpush.bf16.msra.mxu0 %v3928
        %3940 = vmatpush.bf16.msra.mxu0 %v3927
        %3941 = vmatpush.bf16.msra.mxu0 %v3926
        %3942 = vmatpush.bf16.msra.mxu0 %v3925
        %3943 = vmatpush.bf16.msra.mxu0 %v3924
        %3944 = vmatpush.bf16.msra.mxu0 %v3923
        %3945 = vmatpush.bf16.msra.mxu0 %v3922
        %3946 = vmatmul.bf16.gmra.mxu0 %v3882
        %v3947 = vpop.f32.mrf.mxu0
        %v3948 = vadd.f32 0.0, %v3947
        %v3949 = vpop.f32.mrf.mxu0
        %v3950 = vadd.f32 0.0, %v3949
        %3951 = vmatmul.bf16.gmra.mxu0 %v3883
        %v3952 = vpop.f32.mrf.mxu0
        %v3953 = vadd.f32 0.0, %v3952
        %v3954 = vpop.f32.mrf.mxu0
        %v3955 = vadd.f32 0.0, %v3954
        %3956 = vmatmul.bf16.gmra.mxu0 %v3884
        %v3957 = vpop.f32.mrf.mxu0
        %v3958 = vadd.f32 0.0, %v3957
        %v3959 = vpop.f32.mrf.mxu0
        %v3960 = vadd.f32 0.0, %v3959
        %3961 = vmatmul.bf16.gmra.mxu0 %v3885
        %v3962 = vpop.f32.mrf.mxu0
        %v3963 = vadd.f32 0.0, %v3962
        %v3964 = vpop.f32.mrf.mxu0
        %v3965 = vadd.f32 0.0, %v3964
        %3966 = vdwg.mxu0
        %v3967 = vadd.f32 %v3851, %v3948
        %v3968 = vadd.f32 %v3852, %v3950
        %v3969 = vadd.f32 %v3853, %v3953
        %v3970 = vadd.f32 %v3854, %v3955
        %v3971 = vadd.f32 %v3855, %v3958
        %v3972 = vadd.f32 %v3856, %v3960
        %v3973 = vadd.f32 %v3857, %v3963
        %v3974 = vadd.f32 %v3858, %v3965
        %s3975 = scalar_lea.vmem %s5, 448
        %v3976 = vld [vmem:[%s3975] sm:$0xf]
        %v3977 = vld [vmem:[%s3975 + $0x4] sm:$0xf]
        %v3978 = vld [vmem:[%s3975 + $0x8] sm:$0xf]
        %v3979 = vld [vmem:[%s3975 + $0xc] sm:$0xf]
        %v3980 = vld [vmem:[%s3975 + $0x10] sm:$0xf]
        %v3981 = vld [vmem:[%s3975 + $0x14] sm:$0xf]
        %v3982 = vld [vmem:[%s3975 + $0x18] sm:$0xf]
        %v3983 = vld [vmem:[%s3975 + $0x1c] sm:$0xf]
        %v3984 = vld [vmem:[%s3975 + $0x20] sm:$0xf]
        %v3985 = vld [vmem:[%s3975 + $0x24] sm:$0xf]
        %v3986 = vld [vmem:[%s3975 + $0x28] sm:$0xf]
        %v3987 = vld [vmem:[%s3975 + $0x2c] sm:$0xf]
        %v3988 = vld [vmem:[%s3975 + $0x30] sm:$0xf]
        %v3989 = vld [vmem:[%s3975 + $0x34] sm:$0xf]
        %v3990 = vld [vmem:[%s3975 + $0x38] sm:$0xf]
        %v3991 = vld [vmem:[%s3975 + $0x3c] sm:$0xf]
        %v4008 = vunpack.c.l.b16 %v3976
        %v4009 = vunpack.c.l.b16 %v3977
        %v4010 = vunpack.c.l.b16 %v3978
        %v4011 = vunpack.c.l.b16 %v3979
        %v4012 = vunpack.c.l.b16 %v3980
        %v4013 = vunpack.c.l.b16 %v3981
        %v4014 = vunpack.c.l.b16 %v3982
        %v4015 = vunpack.c.l.b16 %v3983
        %v4016 = vunpack.c.l.b16 %v3984
        %v4017 = vunpack.c.l.b16 %v3985
        %v4018 = vunpack.c.l.b16 %v3986
        %v4019 = vunpack.c.l.b16 %v3987
        %v4020 = vunpack.c.l.b16 %v3988
        %v4021 = vunpack.c.l.b16 %v3989
        %v4022 = vunpack.c.l.b16 %v3990
        %v4023 = vunpack.c.l.b16 %v3991
        %v4024 = vpack.c.b16 %v4009, %v4008
        %v4025 = vpack.c.b16 %v4011, %v4010
        %v4026 = vpack.c.b16 %v4013, %v4012
        %v4027 = vpack.c.b16 %v4015, %v4014
        %v4028 = vpack.c.b16 %v4017, %v4016
        %v4029 = vpack.c.b16 %v4019, %v4018
        %v4030 = vpack.c.b16 %v4021, %v4020
        %v4031 = vpack.c.b16 %v4023, %v4022
        %4040 = vmatpush.bf16.msra.mxu0 %v4031
        %4041 = vmatpush.bf16.msra.mxu0 %v4030
        %4042 = vmatpush.bf16.msra.mxu0 %v4029
        %4043 = vmatpush.bf16.msra.mxu0 %v4028
        %4044 = vmatpush.bf16.msra.mxu0 %v4027
        %4045 = vmatpush.bf16.msra.mxu0 %v4026
        %4046 = vmatpush.bf16.msra.mxu0 %v4025
        %4047 = vmatpush.bf16.msra.mxu0 %v4024
        %4048 = vmatmul.bf16.gmra.mxu0 %v2762
        %v4049 = vpop.f32.mrf.mxu0
        %v4050 = vadd.f32 0.0, %v4049
        %v4051 = vpop.f32.mrf.mxu0
        %v4052 = vadd.f32 0.0, %v4051
        %4053 = vmatmul.bf16.gmra.mxu0 %v2763
        %v4054 = vpop.f32.mrf.mxu0
        %v4055 = vadd.f32 0.0, %v4054
        %v4056 = vpop.f32.mrf.mxu0
        %v4057 = vadd.f32 0.0, %v4056
        %4058 = vmatmul.bf16.gmra.mxu0 %v2764
        %v4059 = vpop.f32.mrf.mxu0
        %v4060 = vadd.f32 0.0, %v4059
        %v4061 = vpop.f32.mrf.mxu0
        %v4062 = vadd.f32 0.0, %v4061
        %4063 = vmatmul.bf16.gmra.mxu0 %v2765
        %v4064 = vpop.f32.mrf.mxu0
        %v4065 = vadd.f32 0.0, %v4064
        %v4066 = vpop.f32.mrf.mxu0
        %v4067 = vadd.f32 0.0, %v4066
        %4068 = vdwg.mxu0
        %v4069 = vadd.f32 %v3967, %v4050
        %v4070 = vadd.f32 %v3968, %v4052
        %v4071 = vadd.f32 %v3969, %v4055
        %v4072 = vadd.f32 %v3970, %v4057
        %v4073 = vadd.f32 %v3971, %v4060
        %v4074 = vadd.f32 %v3972, %v4062
        %v4075 = vadd.f32 %v3973, %v4065
        %v4076 = vadd.f32 %v3974, %v4067
        %v4077 = vadd.f32 %v4069, %v2967
        %v4078 = vadd.f32 %v4070, %v2967
        %v4079 = vadd.f32 %v4071, %v2967
        %v4080 = vadd.f32 %v4072, %v2967
        %v4081 = vadd.f32 %v4073, %v2967
        %v4082 = vadd.f32 %v4074, %v2967
        %v4083 = vadd.f32 %v4075, %v2967
        %v4084 = vadd.f32 %v4076, %v2967
        %v4085 = vmax.f32 %v4077, 0.0
        %v4086 = vmax.f32 %v4078, 0.0
        %v4087 = vmax.f32 %v4079, 0.0
        %v4088 = vmax.f32 %v4080, 0.0
        %v4089 = vmax.f32 %v4081, 0.0
        %v4090 = vmax.f32 %v4082, 0.0
        %v4091 = vmax.f32 %v4083, 0.0
        %v4092 = vmax.f32 %v4084, 0.0
        %v4093 = vpack.c.bf16 %v4085, %v4085
        %v4094 = vpack.c.bf16 %v4086, %v4086
        %v4095 = vpack.c.bf16 %v4087, %v4087
        %v4096 = vpack.c.bf16 %v4088, %v4088
        %v4097 = vpack.c.bf16 %v4089, %v4089
        %v4098 = vpack.c.bf16 %v4090, %v4090
        %v4099 = vpack.c.bf16 %v4091, %v4091
        %v4100 = vpack.c.bf16 %v4092, %v4092
        %s4101 = scalar_lea.vmem %s352, 32 [#allocation5]
        %4102 = vst [vmem:[%s4101] sm:$0xf] %v4093
        %4103 = vst [vmem:[%s4101 + $0x4] sm:$0xf] %v4094
        %4104 = vst [vmem:[%s4101 + $0x8] sm:$0xf] %v4095
        %4105 = vst [vmem:[%s4101 + $0xc] sm:$0xf] %v4096
        %4106 = vst [vmem:[%s4101 + $0x10] sm:$0xf] %v4097
        %4107 = vst [vmem:[%s4101 + $0x14] sm:$0xf] %v4098
        %4108 = vst [vmem:[%s4101 + $0x18] sm:$0xf] %v4099
        %4109 = vst [vmem:[%s4101 + $0x1c] sm:$0xf] %v4100
        %4110 = vmatpush.bf16.msra.mxu0 %v1291
        %4111 = vmatpush.bf16.msra.mxu0 %v1290
        %4112 = vmatpush.bf16.msra.mxu0 %v1289
        %4113 = vmatpush.bf16.msra.mxu0 %v1288
        %4114 = vmatpush.bf16.msra.mxu0 %v1287
        %4115 = vmatpush.bf16.msra.mxu0 %v1286
        %4116 = vmatpush.bf16.msra.mxu0 %v1285
        %4117 = vmatpush.bf16.msra.mxu0 %v1284
        %4118 = vmatmul.bf16.gmra.mxu0 %v1771
        %v4119 = vpop.f32.mrf.mxu0
        %v4120 = vadd.f32 0.0, %v4119
        %v4121 = vpop.f32.mrf.mxu0
        %v4122 = vadd.f32 0.0, %v4121
        %4123 = vmatmul.bf16.gmra.mxu0 %v1772
        %v4124 = vpop.f32.mrf.mxu0
        %v4125 = vadd.f32 0.0, %v4124
        %v4126 = vpop.f32.mrf.mxu0
        %v4127 = vadd.f32 0.0, %v4126
        %4128 = vmatmul.bf16.gmra.mxu0 %v1773
        %v4129 = vpop.f32.mrf.mxu0
        %v4130 = vadd.f32 0.0, %v4129
        %v4131 = vpop.f32.mrf.mxu0
        %v4132 = vadd.f32 0.0, %v4131
        %4133 = vmatmul.bf16.gmra.mxu0 %v1774
        %v4134 = vpop.f32.mrf.mxu0
        %v4135 = vadd.f32 0.0, %v4134
        %v4136 = vpop.f32.mrf.mxu0
        %v4137 = vadd.f32 0.0, %v4136
        %4138 = vdwg.mxu0
        %4139 = vmatpush.bf16.msra.mxu0 %v1392
        %4140 = vmatpush.bf16.msra.mxu0 %v1391
        %4141 = vmatpush.bf16.msra.mxu0 %v1390
        %4142 = vmatpush.bf16.msra.mxu0 %v1389
        %4143 = vmatpush.bf16.msra.mxu0 %v1388
        %4144 = vmatpush.bf16.msra.mxu0 %v1387
        %4145 = vmatpush.bf16.msra.mxu0 %v1386
        %4146 = vmatpush.bf16.msra.mxu0 %v1385
        %4147 = vmatmul.bf16.gmra.mxu0 %v1662
        %v4148 = vpop.f32.mrf.mxu0
        %v4149 = vadd.f32 %v4120, %v4148
        %v4150 = vpop.f32.mrf.mxu0
        %v4151 = vadd.f32 %v4122, %v4150
        %4152 = vmatmul.bf16.gmra.mxu0 %v1663
        %v4153 = vpop.f32.mrf.mxu0
        %v4154 = vadd.f32 %v4125, %v4153
        %v4155 = vpop.f32.mrf.mxu0
        %v4156 = vadd.f32 %v4127, %v4155
        %4157 = vmatmul.bf16.gmra.mxu0 %v1664
        %v4158 = vpop.f32.mrf.mxu0
        %v4159 = vadd.f32 %v4130, %v4158
        %v4160 = vpop.f32.mrf.mxu0
        %v4161 = vadd.f32 %v4132, %v4160
        %4162 = vmatmul.bf16.gmra.mxu0 %v1665
        %v4163 = vpop.f32.mrf.mxu0
        %v4164 = vadd.f32 %v4135, %v4163
        %v4165 = vpop.f32.mrf.mxu0
        %v4166 = vadd.f32 %v4137, %v4165
        %4167 = vdwg.mxu0
        %4168 = vmatpush.bf16.msra.mxu0 %v1600
        %4169 = vmatpush.bf16.msra.mxu0 %v1599
        %4170 = vmatpush.bf16.msra.mxu0 %v1598
        %4171 = vmatpush.bf16.msra.mxu0 %v1597
        %4172 = vmatpush.bf16.msra.mxu0 %v1596
        %4173 = vmatpush.bf16.msra.mxu0 %v1595
        %4174 = vmatpush.bf16.msra.mxu0 %v1594
        %4175 = vmatpush.bf16.msra.mxu0 %v1593
        %4176 = vmatmul.bf16.gmra.mxu0 %v1984
        %v4177 = vpop.f32.mrf.mxu0
        %v4178 = vadd.f32 0.0, %v4177
        %v4179 = vpop.f32.mrf.mxu0
        %v4180 = vadd.f32 0.0, %v4179
        %4181 = vmatmul.bf16.gmra.mxu0 %v1985
        %v4182 = vpop.f32.mrf.mxu0
        %v4183 = vadd.f32 0.0, %v4182
        %v4184 = vpop.f32.mrf.mxu0
        %v4185 = vadd.f32 0.0, %v4184
        %4186 = vmatmul.bf16.gmra.mxu0 %v1986
        %v4187 = vpop.f32.mrf.mxu0
        %v4188 = vadd.f32 0.0, %v4187
        %v4189 = vpop.f32.mrf.mxu0
        %v4190 = vadd.f32 0.0, %v4189
        %4191 = vmatmul.bf16.gmra.mxu0 %v1987
        %v4192 = vpop.f32.mrf.mxu0
        %v4193 = vadd.f32 0.0, %v4192
        %v4194 = vpop.f32.mrf.mxu0
        %v4195 = vadd.f32 0.0, %v4194
        %4196 = vdwg.mxu0
        %v4197 = vadd.f32 %v4149, %v4178
        %v4198 = vadd.f32 %v4151, %v4180
        %v4199 = vadd.f32 %v4154, %v4183
        %v4200 = vadd.f32 %v4156, %v4185
        %v4201 = vadd.f32 %v4159, %v4188
        %v4202 = vadd.f32 %v4161, %v4190
        %v4203 = vadd.f32 %v4164, %v4193
        %v4204 = vadd.f32 %v4166, %v4195
        %4205 = vmatpush.bf16.msra.mxu0 %v1709
        %4206 = vmatpush.bf16.msra.mxu0 %v1708
        %4207 = vmatpush.bf16.msra.mxu0 %v1707
        %4208 = vmatpush.bf16.msra.mxu0 %v1706
        %4209 = vmatpush.bf16.msra.mxu0 %v1705
        %4210 = vmatpush.bf16.msra.mxu0 %v1704
        %4211 = vmatpush.bf16.msra.mxu0 %v1703
        %4212 = vmatpush.bf16.msra.mxu0 %v1702
        %4213 = vmatmul.bf16.gmra.mxu0 %v2079
        %v4214 = vpop.f32.mrf.mxu0
        %v4215 = vadd.f32 0.0, %v4214
        %v4216 = vpop.f32.mrf.mxu0
        %v4217 = vadd.f32 0.0, %v4216
        %4218 = vmatmul.bf16.gmra.mxu0 %v2080
        %v4219 = vpop.f32.mrf.mxu0
        %v4220 = vadd.f32 0.0, %v4219
        %v4221 = vpop.f32.mrf.mxu0
        %v4222 = vadd.f32 0.0, %v4221
        %4223 = vmatmul.bf16.gmra.mxu0 %v2081
        %v4224 = vpop.f32.mrf.mxu0
        %v4225 = vadd.f32 0.0, %v4224
        %v4226 = vpop.f32.mrf.mxu0
        %v4227 = vadd.f32 0.0, %v4226
        %4228 = vmatmul.bf16.gmra.mxu0 %v2082
        %v4229 = vpop.f32.mrf.mxu0
        %v4230 = vadd.f32 0.0, %v4229
        %v4231 = vpop.f32.mrf.mxu0
        %v4232 = vadd.f32 0.0, %v4231
        %4233 = vdwg.mxu0
        %v4234 = vadd.f32 %v4197, %v4215
        %v4235 = vadd.f32 %v4198, %v4217
        %v4236 = vadd.f32 %v4199, %v4220
        %v4237 = vadd.f32 %v4200, %v4222
        %v4238 = vadd.f32 %v4201, %v4225
        %v4239 = vadd.f32 %v4202, %v4227
        %v4240 = vadd.f32 %v4203, %v4230
        %v4241 = vadd.f32 %v4204, %v4232
        %4242 = vmatpush.bf16.msra.mxu0 %v1818
        %4243 = vmatpush.bf16.msra.mxu0 %v1817
        %4244 = vmatpush.bf16.msra.mxu0 %v1816
        %4245 = vmatpush.bf16.msra.mxu0 %v1815
        %4246 = vmatpush.bf16.msra.mxu0 %v1814
        %4247 = vmatpush.bf16.msra.mxu0 %v1813
        %4248 = vmatpush.bf16.msra.mxu0 %v1812
        %4249 = vmatpush.bf16.msra.mxu0 %v1811
        %4250 = vmatmul.bf16.gmra.mxu0 %v2174
        %v4251 = vpop.f32.mrf.mxu0
        %v4252 = vadd.f32 0.0, %v4251
        %v4253 = vpop.f32.mrf.mxu0
        %v4254 = vadd.f32 0.0, %v4253
        %4255 = vmatmul.bf16.gmra.mxu0 %v2175
        %v4256 = vpop.f32.mrf.mxu0
        %v4257 = vadd.f32 0.0, %v4256
        %v4258 = vpop.f32.mrf.mxu0
        %v4259 = vadd.f32 0.0, %v4258
        %4260 = vmatmul.bf16.gmra.mxu0 %v2176
        %v4261 = vpop.f32.mrf.mxu0
        %v4262 = vadd.f32 0.0, %v4261
        %v4263 = vpop.f32.mrf.mxu0
        %v4264 = vadd.f32 0.0, %v4263
        %4265 = vmatmul.bf16.gmra.mxu0 %v2177
        %v4266 = vpop.f32.mrf.mxu0
        %v4267 = vadd.f32 0.0, %v4266
        %v4268 = vpop.f32.mrf.mxu0
        %v4269 = vadd.f32 0.0, %v4268
        %4270 = vdwg.mxu0
        %v4271 = vadd.f32 %v4234, %v4252
        %v4272 = vadd.f32 %v4235, %v4254
        %v4273 = vadd.f32 %v4236, %v4257
        %v4274 = vadd.f32 %v4237, %v4259
        %v4275 = vadd.f32 %v4238, %v4262
        %v4276 = vadd.f32 %v4239, %v4264
        %v4277 = vadd.f32 %v4240, %v4267
        %v4278 = vadd.f32 %v4241, %v4269
        %4279 = vmatpush.bf16.msra.mxu0 %v2031
        %4280 = vmatpush.bf16.msra.mxu0 %v2030
        %4281 = vmatpush.bf16.msra.mxu0 %v2029
        %4282 = vmatpush.bf16.msra.mxu0 %v2028
        %4283 = vmatpush.bf16.msra.mxu0 %v2027
        %4284 = vmatpush.bf16.msra.mxu0 %v2026
        %4285 = vmatpush.bf16.msra.mxu0 %v2025
        %4286 = vmatpush.bf16.msra.mxu0 %v2024
        %4287 = vmatmul.bf16.gmra.mxu0 %v2282
        %v4288 = vpop.f32.mrf.mxu0
        %v4289 = vadd.f32 0.0, %v4288
        %v4290 = vpop.f32.mrf.mxu0
        %v4291 = vadd.f32 0.0, %v4290
        %4292 = vmatmul.bf16.gmra.mxu0 %v2283
        %v4293 = vpop.f32.mrf.mxu0
        %v4294 = vadd.f32 0.0, %v4293
        %v4295 = vpop.f32.mrf.mxu0
        %v4296 = vadd.f32 0.0, %v4295
        %4297 = vmatmul.bf16.gmra.mxu0 %v2284
        %v4298 = vpop.f32.mrf.mxu0
        %v4299 = vadd.f32 0.0, %v4298
        %v4300 = vpop.f32.mrf.mxu0
        %v4301 = vadd.f32 0.0, %v4300
        %4302 = vmatmul.bf16.gmra.mxu0 %v2285
        %v4303 = vpop.f32.mrf.mxu0
        %v4304 = vadd.f32 0.0, %v4303
        %v4305 = vpop.f32.mrf.mxu0
        %v4306 = vadd.f32 0.0, %v4305
        %4307 = vdwg.mxu0
        %v4308 = vadd.f32 %v4271, %v4289
        %v4309 = vadd.f32 %v4272, %v4291
        %v4310 = vadd.f32 %v4273, %v4294
        %v4311 = vadd.f32 %v4274, %v4296
        %v4312 = vadd.f32 %v4275, %v4299
        %v4313 = vadd.f32 %v4276, %v4301
        %v4314 = vadd.f32 %v4277, %v4304
        %v4315 = vadd.f32 %v4278, %v4306
        %v4317 = vunpack.c.l.b16 %v1207
        %v4318 = vpack.c.b16 %v1656, %v1655
        %v4319 = vpack.c.b16 %v1658, %v1657
        %v4320 = vpack.c.b16 %v1660, %v1659
        %v4321 = vpack.c.b16 %v4317, %v1661
        %4326 = vmatpush.bf16.msra.mxu0 %v2126
        %4327 = vmatpush.bf16.msra.mxu0 %v2125
        %4328 = vmatpush.bf16.msra.mxu0 %v2124
        %4329 = vmatpush.bf16.msra.mxu0 %v2123
        %4330 = vmatpush.bf16.msra.mxu0 %v2122
        %4331 = vmatpush.bf16.msra.mxu0 %v2121
        %4332 = vmatpush.bf16.msra.mxu0 %v2120
        %4333 = vmatpush.bf16.msra.mxu0 %v2119
        %4334 = vmatmul.bf16.gmra.mxu0 %v4318
        %v4335 = vpop.f32.mrf.mxu0
        %v4336 = vadd.f32 0.0, %v4335
        %v4337 = vpop.f32.mrf.mxu0
        %v4338 = vadd.f32 0.0, %v4337
        %4339 = vmatmul.bf16.gmra.mxu0 %v4319
        %v4340 = vpop.f32.mrf.mxu0
        %v4341 = vadd.f32 0.0, %v4340
        %v4342 = vpop.f32.mrf.mxu0
        %v4343 = vadd.f32 0.0, %v4342
        %4344 = vmatmul.bf16.gmra.mxu0 %v4320
        %v4345 = vpop.f32.mrf.mxu0
        %v4346 = vadd.f32 0.0, %v4345
        %v4347 = vpop.f32.mrf.mxu0
        %v4348 = vadd.f32 0.0, %v4347
        %4349 = vmatmul.bf16.gmra.mxu0 %v4321
        %v4350 = vpop.f32.mrf.mxu0
        %v4351 = vadd.f32 0.0, %v4350
        %v4352 = vpop.f32.mrf.mxu0
        %v4353 = vadd.f32 0.0, %v4352
        %4354 = vdwg.mxu0
        %v4355 = vadd.f32 %v4308, %v4336
        %v4356 = vadd.f32 %v4309, %v4338
        %v4357 = vadd.f32 %v4310, %v4341
        %v4358 = vadd.f32 %v4311, %v4343
        %v4359 = vadd.f32 %v4312, %v4346
        %v4360 = vadd.f32 %v4313, %v4348
        %v4361 = vadd.f32 %v4314, %v4351
        %v4362 = vadd.f32 %v4315, %v4353
        %v4364 = vunpack.c.l.b16 %v1226
        %v4365 = vpack.c.b16 %v1765, %v1764
        %v4366 = vpack.c.b16 %v1767, %v1766
        %v4367 = vpack.c.b16 %v1769, %v1768
        %v4368 = vpack.c.b16 %v4364, %v1770
        %4373 = vmatpush.bf16.msra.mxu0 %v2221
        %4374 = vmatpush.bf16.msra.mxu0 %v2220
        %4375 = vmatpush.bf16.msra.mxu0 %v2219
        %4376 = vmatpush.bf16.msra.mxu0 %v2218
        %4377 = vmatpush.bf16.msra.mxu0 %v2217
        %4378 = vmatpush.bf16.msra.mxu0 %v2216
        %4379 = vmatpush.bf16.msra.mxu0 %v2215
        %4380 = vmatpush.bf16.msra.mxu0 %v2214
        %4381 = vmatmul.bf16.gmra.mxu0 %v4365
        %v4382 = vpop.f32.mrf.mxu0
        %v4383 = vadd.f32 0.0, %v4382
        %v4384 = vpop.f32.mrf.mxu0
        %v4385 = vadd.f32 0.0, %v4384
        %4386 = vmatmul.bf16.gmra.mxu0 %v4366
        %v4387 = vpop.f32.mrf.mxu0
        %v4388 = vadd.f32 0.0, %v4387
        %v4389 = vpop.f32.mrf.mxu0
        %v4390 = vadd.f32 0.0, %v4389
        %4391 = vmatmul.bf16.gmra.mxu0 %v4367
        %v4392 = vpop.f32.mrf.mxu0
        %v4393 = vadd.f32 0.0, %v4392
        %v4394 = vpop.f32.mrf.mxu0
        %v4395 = vadd.f32 0.0, %v4394
        %4396 = vmatmul.bf16.gmra.mxu0 %v4368
        %v4397 = vpop.f32.mrf.mxu0
        %v4398 = vadd.f32 0.0, %v4397
        %v4399 = vpop.f32.mrf.mxu0
        %v4400 = vadd.f32 0.0, %v4399
        %4401 = vdwg.mxu0
        %v4402 = vadd.f32 %v4355, %v4383
        %v4403 = vadd.f32 %v4356, %v4385
        %v4404 = vadd.f32 %v4357, %v4388
        %v4405 = vadd.f32 %v4358, %v4390
        %v4406 = vadd.f32 %v4359, %v4393
        %v4407 = vadd.f32 %v4360, %v4395
        %v4408 = vadd.f32 %v4361, %v4398
        %v4409 = vadd.f32 %v4362, %v4400
        %v4411 = vshrl.u32 %v1207, 16
        %v4413 = vrot.slane %v4411, 4
        %v4414 = vshll.u32 %v1207, 16
        %v4416 = vrot.slane %v4414, 5
        %v4417 = vor.u32 %v4413, %v4416
        %v4418 = vrot.slane %v4417, 4
        %v4420 = vshll.u32 %v1208, 16
        %v4422 = vrot.slane %v4420, 5
        %v4423 = vsel %vm1432, %v4418, %v4422
        %v4424 = vunpack.c.l.b16 %v4423
        %v4425 = vpack.c.b16 %v1978, %v1977
        %v4426 = vpack.c.b16 %v1980, %v1979
        %v4427 = vpack.c.b16 %v1982, %v1981
        %v4428 = vpack.c.b16 %v4424, %v1983
        %4433 = vmatpush.bf16.msra.mxu0 %v2329
        %4434 = vmatpush.bf16.msra.mxu0 %v2328
        %4435 = vmatpush.bf16.msra.mxu0 %v2327
        %4436 = vmatpush.bf16.msra.mxu0 %v2326
        %4437 = vmatpush.bf16.msra.mxu0 %v2325
        %4438 = vmatpush.bf16.msra.mxu0 %v2324
        %4439 = vmatpush.bf16.msra.mxu0 %v2323
        %4440 = vmatpush.bf16.msra.mxu0 %v2322
        %4441 = vmatmul.bf16.gmra.mxu0 %v4425
        %v4442 = vpop.f32.mrf.mxu0
        %v4443 = vadd.f32 0.0, %v4442
        %v4444 = vpop.f32.mrf.mxu0
        %v4445 = vadd.f32 0.0, %v4444
        %4446 = vmatmul.bf16.gmra.mxu0 %v4426
        %v4447 = vpop.f32.mrf.mxu0
        %v4448 = vadd.f32 0.0, %v4447
        %v4449 = vpop.f32.mrf.mxu0
        %v4450 = vadd.f32 0.0, %v4449
        %4451 = vmatmul.bf16.gmra.mxu0 %v4427
        %v4452 = vpop.f32.mrf.mxu0
        %v4453 = vadd.f32 0.0, %v4452
        %v4454 = vpop.f32.mrf.mxu0
        %v4455 = vadd.f32 0.0, %v4454
        %4456 = vmatmul.bf16.gmra.mxu0 %v4428
        %v4457 = vpop.f32.mrf.mxu0
        %v4458 = vadd.f32 0.0, %v4457
        %v4459 = vpop.f32.mrf.mxu0
        %v4460 = vadd.f32 0.0, %v4459
        %4461 = vdwg.mxu0
        %v4462 = vadd.f32 %v4402, %v4443
        %v4463 = vadd.f32 %v4403, %v4445
        %v4464 = vadd.f32 %v4404, %v4448
        %v4465 = vadd.f32 %v4405, %v4450
        %v4466 = vadd.f32 %v4406, %v4453
        %v4467 = vadd.f32 %v4407, %v4455
        %v4468 = vadd.f32 %v4408, %v4458
        %v4469 = vadd.f32 %v4409, %v4460
        %v4471 = vshrl.u32 %v1151, 16
        %v4473 = vrot.slane %v4471, 4
        %v4474 = vshll.u32 %v1151, 16
        %v4476 = vrot.slane %v4474, 5
        %v4477 = vor.u32 %v4473, %v4476
        %v4478 = vrot.slane %v4477, 4
        %v4480 = vshll.u32 %v1152, 16
        %v4482 = vrot.slane %v4480, 5
        %v4483 = vsel %vm1432, %v4478, %v4482
        %s4484 = scalar_lea.vmem %s5, 512
        %v4485 = vld [vmem:[%s4484] sm:$0xf]
        %v4486 = vld [vmem:[%s4484 + $0x4] sm:$0xf]
        %v4487 = vld [vmem:[%s4484 + $0x8] sm:$0xf]
        %v4488 = vld [vmem:[%s4484 + $0xc] sm:$0xf]
        %v4489 = vld [vmem:[%s4484 + $0x10] sm:$0xf]
        %v4490 = vld [vmem:[%s4484 + $0x14] sm:$0xf]
        %v4491 = vld [vmem:[%s4484 + $0x18] sm:$0xf]
        %v4492 = vld [vmem:[%s4484 + $0x1c] sm:$0xf]
        %v4493 = vld [vmem:[%s4484 + $0x20] sm:$0xf]
        %v4494 = vld [vmem:[%s4484 + $0x24] sm:$0xf]
        %v4495 = vld [vmem:[%s4484 + $0x28] sm:$0xf]
        %v4496 = vld [vmem:[%s4484 + $0x2c] sm:$0xf]
        %v4497 = vld [vmem:[%s4484 + $0x30] sm:$0xf]
        %v4498 = vld [vmem:[%s4484 + $0x34] sm:$0xf]
        %v4499 = vld [vmem:[%s4484 + $0x38] sm:$0xf]
        %v4500 = vld [vmem:[%s4484 + $0x3c] sm:$0xf]
        %v4501 = vunpack.c.l.b16 %v4483
        %v4502 = vpack.c.b16 %v4501, %v2510
        %v4520 = vunpack.c.l.b16 %v4485
        %v4521 = vunpack.c.l.b16 %v4486
        %v4522 = vunpack.c.l.b16 %v4487
        %v4523 = vunpack.c.l.b16 %v4488
        %v4524 = vunpack.c.l.b16 %v4489
        %v4525 = vunpack.c.l.b16 %v4490
        %v4526 = vunpack.c.l.b16 %v4491
        %v4527 = vunpack.c.l.b16 %v4492
        %v4528 = vunpack.c.l.b16 %v4493
        %v4529 = vunpack.c.l.b16 %v4494
        %v4530 = vunpack.c.l.b16 %v4495
        %v4531 = vunpack.c.l.b16 %v4496
        %v4532 = vunpack.c.l.b16 %v4497
        %v4533 = vunpack.c.l.b16 %v4498
        %v4534 = vunpack.c.l.b16 %v4499
        %v4535 = vunpack.c.l.b16 %v4500
        %v4536 = vpack.c.b16 %v4521, %v4520
        %v4537 = vpack.c.b16 %v4523, %v4522
        %v4538 = vpack.c.b16 %v4525, %v4524
        %v4539 = vpack.c.b16 %v4527, %v4526
        %v4540 = vpack.c.b16 %v4529, %v4528
        %v4541 = vpack.c.b16 %v4531, %v4530
        %v4542 = vpack.c.b16 %v4533, %v4532
        %v4543 = vpack.c.b16 %v4535, %v4534
        %4552 = vmatpush.bf16.msra.mxu0 %v4543
        %4553 = vmatpush.bf16.msra.mxu0 %v4542
        %4554 = vmatpush.bf16.msra.mxu0 %v4541
        %4555 = vmatpush.bf16.msra.mxu0 %v4540
        %4556 = vmatpush.bf16.msra.mxu0 %v4539
        %4557 = vmatpush.bf16.msra.mxu0 %v4538
        %4558 = vmatpush.bf16.msra.mxu0 %v4537
        %4559 = vmatpush.bf16.msra.mxu0 %v4536
        %4560 = vmatmul.bf16.gmra.mxu0 %v2763
        %v4561 = vpop.f32.mrf.mxu0
        %v4562 = vadd.f32 0.0, %v4561
        %v4563 = vpop.f32.mrf.mxu0
        %v4564 = vadd.f32 0.0, %v4563
        %4565 = vmatmul.bf16.gmra.mxu0 %v2764
        %v4566 = vpop.f32.mrf.mxu0
        %v4567 = vadd.f32 0.0, %v4566
        %v4568 = vpop.f32.mrf.mxu0
        %v4569 = vadd.f32 0.0, %v4568
        %4570 = vmatmul.bf16.gmra.mxu0 %v2765
        %v4571 = vpop.f32.mrf.mxu0
        %v4572 = vadd.f32 0.0, %v4571
        %v4573 = vpop.f32.mrf.mxu0
        %v4574 = vadd.f32 0.0, %v4573
        %4575 = vmatmul.bf16.gmra.mxu0 %v4502
        %v4576 = vpop.f32.mrf.mxu0
        %v4577 = vadd.f32 0.0, %v4576
        %v4578 = vpop.f32.mrf.mxu0
        %v4579 = vadd.f32 0.0, %v4578
        %4580 = vdwg.mxu0
        %v4581 = vadd.f32 %v4462, %v4562
        %v4582 = vadd.f32 %v4463, %v4564
        %v4583 = vadd.f32 %v4464, %v4567
        %v4584 = vadd.f32 %v4465, %v4569
        %v4585 = vadd.f32 %v4466, %v4572
        %v4586 = vadd.f32 %v4467, %v4574
        %v4587 = vadd.f32 %v4468, %v4577
        %v4588 = vadd.f32 %v4469, %v4579
        %s4589 = scalar_lea.vmem %s5, 576
        %v4590 = vld [vmem:[%s4589] sm:$0xf]
        %v4591 = vld [vmem:[%s4589 + $0x4] sm:$0xf]
        %v4592 = vld [vmem:[%s4589 + $0x8] sm:$0xf]
        %v4593 = vld [vmem:[%s4589 + $0xc] sm:$0xf]
        %v4594 = vld [vmem:[%s4589 + $0x10] sm:$0xf]
        %v4595 = vld [vmem:[%s4589 + $0x14] sm:$0xf]
        %v4596 = vld [vmem:[%s4589 + $0x18] sm:$0xf]
        %v4597 = vld [vmem:[%s4589 + $0x1c] sm:$0xf]
        %v4598 = vld [vmem:[%s4589 + $0x20] sm:$0xf]
        %v4599 = vld [vmem:[%s4589 + $0x24] sm:$0xf]
        %v4600 = vld [vmem:[%s4589 + $0x28] sm:$0xf]
        %v4601 = vld [vmem:[%s4589 + $0x2c] sm:$0xf]
        %v4602 = vld [vmem:[%s4589 + $0x30] sm:$0xf]
        %v4603 = vld [vmem:[%s4589 + $0x34] sm:$0xf]
        %v4604 = vld [vmem:[%s4589 + $0x38] sm:$0xf]
        %v4605 = vld [vmem:[%s4589 + $0x3c] sm:$0xf]
        %v4607 = vunpack.c.l.b16 %v1151
        %v4608 = vpack.c.b16 %v4607, %v2636
        %v4626 = vunpack.c.l.b16 %v4590
        %v4627 = vunpack.c.l.b16 %v4591
        %v4628 = vunpack.c.l.b16 %v4592
        %v4629 = vunpack.c.l.b16 %v4593
        %v4630 = vunpack.c.l.b16 %v4594
        %v4631 = vunpack.c.l.b16 %v4595
        %v4632 = vunpack.c.l.b16 %v4596
        %v4633 = vunpack.c.l.b16 %v4597
        %v4634 = vunpack.c.l.b16 %v4598
        %v4635 = vunpack.c.l.b16 %v4599
        %v4636 = vunpack.c.l.b16 %v4600
        %v4637 = vunpack.c.l.b16 %v4601
        %v4638 = vunpack.c.l.b16 %v4602
        %v4639 = vunpack.c.l.b16 %v4603
        %v4640 = vunpack.c.l.b16 %v4604
        %v4641 = vunpack.c.l.b16 %v4605
        %v4642 = vpack.c.b16 %v4627, %v4626
        %v4643 = vpack.c.b16 %v4629, %v4628
        %v4644 = vpack.c.b16 %v4631, %v4630
        %v4645 = vpack.c.b16 %v4633, %v4632
        %v4646 = vpack.c.b16 %v4635, %v4634
        %v4647 = vpack.c.b16 %v4637, %v4636
        %v4648 = vpack.c.b16 %v4639, %v4638
        %v4649 = vpack.c.b16 %v4641, %v4640
        %4658 = vmatpush.bf16.msra.mxu0 %v4649
        %4659 = vmatpush.bf16.msra.mxu0 %v4648
        %4660 = vmatpush.bf16.msra.mxu0 %v4647
        %4661 = vmatpush.bf16.msra.mxu0 %v4646
        %4662 = vmatpush.bf16.msra.mxu0 %v4645
        %4663 = vmatpush.bf16.msra.mxu0 %v4644
        %4664 = vmatpush.bf16.msra.mxu0 %v4643
        %4665 = vmatpush.bf16.msra.mxu0 %v4642
        %4666 = vmatmul.bf16.gmra.mxu0 %v2875
        %v4667 = vpop.f32.mrf.mxu0
        %v4668 = vadd.f32 0.0, %v4667
        %v4669 = vpop.f32.mrf.mxu0
        %v4670 = vadd.f32 0.0, %v4669
        %4671 = vmatmul.bf16.gmra.mxu0 %v2876
        %v4672 = vpop.f32.mrf.mxu0
        %v4673 = vadd.f32 0.0, %v4672
        %v4674 = vpop.f32.mrf.mxu0
        %v4675 = vadd.f32 0.0, %v4674
        %4676 = vmatmul.bf16.gmra.mxu0 %v2877
        %v4677 = vpop.f32.mrf.mxu0
        %v4678 = vadd.f32 0.0, %v4677
        %v4679 = vpop.f32.mrf.mxu0
        %v4680 = vadd.f32 0.0, %v4679
        %4681 = vmatmul.bf16.gmra.mxu0 %v4608
        %v4682 = vpop.f32.mrf.mxu0
        %v4683 = vadd.f32 0.0, %v4682
        %v4684 = vpop.f32.mrf.mxu0
        %v4685 = vadd.f32 0.0, %v4684
        %4686 = vdwg.mxu0
        %v4687 = vadd.f32 %v4581, %v4668
        %v4688 = vadd.f32 %v4582, %v4670
        %v4689 = vadd.f32 %v4583, %v4673
        %v4690 = vadd.f32 %v4584, %v4675
        %v4691 = vadd.f32 %v4585, %v4678
        %v4692 = vadd.f32 %v4586, %v4680
        %v4693 = vadd.f32 %v4587, %v4683
        %v4694 = vadd.f32 %v4588, %v4685
        %s4695 = scalar_lea.vmem %s5, 640
        %v4696 = vld [vmem:[%s4695] sm:$0xf]
        %v4697 = vld [vmem:[%s4695 + $0x4] sm:$0xf]
        %v4698 = vld [vmem:[%s4695 + $0x8] sm:$0xf]
        %v4699 = vld [vmem:[%s4695 + $0xc] sm:$0xf]
        %v4700 = vld [vmem:[%s4695 + $0x10] sm:$0xf]
        %v4701 = vld [vmem:[%s4695 + $0x14] sm:$0xf]
        %v4702 = vld [vmem:[%s4695 + $0x18] sm:$0xf]
        %v4703 = vld [vmem:[%s4695 + $0x1c] sm:$0xf]
        %v4704 = vld [vmem:[%s4695 + $0x20] sm:$0xf]
        %v4705 = vld [vmem:[%s4695 + $0x24] sm:$0xf]
        %v4706 = vld [vmem:[%s4695 + $0x28] sm:$0xf]
        %v4707 = vld [vmem:[%s4695 + $0x2c] sm:$0xf]
        %v4708 = vld [vmem:[%s4695 + $0x30] sm:$0xf]
        %v4709 = vld [vmem:[%s4695 + $0x34] sm:$0xf]
        %v4710 = vld [vmem:[%s4695 + $0x38] sm:$0xf]
        %v4711 = vld [vmem:[%s4695 + $0x3c] sm:$0xf]
        %v4728 = vunpack.c.l.b16 %v4696
        %v4729 = vunpack.c.l.b16 %v4697
        %v4730 = vunpack.c.l.b16 %v4698
        %v4731 = vunpack.c.l.b16 %v4699
        %v4732 = vunpack.c.l.b16 %v4700
        %v4733 = vunpack.c.l.b16 %v4701
        %v4734 = vunpack.c.l.b16 %v4702
        %v4735 = vunpack.c.l.b16 %v4703
        %v4736 = vunpack.c.l.b16 %v4704
        %v4737 = vunpack.c.l.b16 %v4705
        %v4738 = vunpack.c.l.b16 %v4706
        %v4739 = vunpack.c.l.b16 %v4707
        %v4740 = vunpack.c.l.b16 %v4708
        %v4741 = vunpack.c.l.b16 %v4709
        %v4742 = vunpack.c.l.b16 %v4710
        %v4743 = vunpack.c.l.b16 %v4711
        %v4744 = vpack.c.b16 %v4729, %v4728
        %v4745 = vpack.c.b16 %v4731, %v4730
        %v4746 = vpack.c.b16 %v4733, %v4732
        %v4747 = vpack.c.b16 %v4735, %v4734
        %v4748 = vpack.c.b16 %v4737, %v4736
        %v4749 = vpack.c.b16 %v4739, %v4738
        %v4750 = vpack.c.b16 %v4741, %v4740
        %v4751 = vpack.c.b16 %v4743, %v4742
        %4760 = vmatpush.bf16.msra.mxu0 %v4751
        %4761 = vmatpush.bf16.msra.mxu0 %v4750
        %4762 = vmatpush.bf16.msra.mxu0 %v4749
        %4763 = vmatpush.bf16.msra.mxu0 %v4748
        %4764 = vmatpush.bf16.msra.mxu0 %v4747
        %4765 = vmatpush.bf16.msra.mxu0 %v4746
        %4766 = vmatpush.bf16.msra.mxu0 %v4745
        %4767 = vmatpush.bf16.msra.mxu0 %v4744
        %4768 = vmatmul.bf16.gmra.mxu0 %v2511
        %v4769 = vpop.f32.mrf.mxu0
        %v4770 = vadd.f32 0.0, %v4769
        %v4771 = vpop.f32.mrf.mxu0
        %v4772 = vadd.f32 0.0, %v4771
        %4773 = vmatmul.bf16.gmra.mxu0 %v2512
        %v4774 = vpop.f32.mrf.mxu0
        %v4775 = vadd.f32 0.0, %v4774
        %v4776 = vpop.f32.mrf.mxu0
        %v4777 = vadd.f32 0.0, %v4776
        %4778 = vmatmul.bf16.gmra.mxu0 %v2513
        %v4779 = vpop.f32.mrf.mxu0
        %v4780 = vadd.f32 0.0, %v4779
        %v4781 = vpop.f32.mrf.mxu0
        %v4782 = vadd.f32 0.0, %v4781
        %4783 = vmatmul.bf16.gmra.mxu0 %v2514
        %v4784 = vpop.f32.mrf.mxu0
        %v4785 = vadd.f32 0.0, %v4784
        %v4786 = vpop.f32.mrf.mxu0
        %v4787 = vadd.f32 0.0, %v4786
        %4788 = vdwg.mxu0
        %v4789 = vadd.f32 %v4687, %v4770
        %v4790 = vadd.f32 %v4688, %v4772
        %v4791 = vadd.f32 %v4689, %v4775
        %v4792 = vadd.f32 %v4690, %v4777
        %v4793 = vadd.f32 %v4691, %v4780
        %v4794 = vadd.f32 %v4692, %v4782
        %v4795 = vadd.f32 %v4693, %v4785
        %v4796 = vadd.f32 %v4694, %v4787
        %s4797 = scalar_lea.vmem %s5, 704
        %v4798 = vld [vmem:[%s4797] sm:$0xf]
        %v4799 = vld [vmem:[%s4797 + $0x4] sm:$0xf]
        %v4800 = vld [vmem:[%s4797 + $0x8] sm:$0xf]
        %v4801 = vld [vmem:[%s4797 + $0xc] sm:$0xf]
        %v4802 = vld [vmem:[%s4797 + $0x10] sm:$0xf]
        %v4803 = vld [vmem:[%s4797 + $0x14] sm:$0xf]
        %v4804 = vld [vmem:[%s4797 + $0x18] sm:$0xf]
        %v4805 = vld [vmem:[%s4797 + $0x1c] sm:$0xf]
        %v4806 = vld [vmem:[%s4797 + $0x20] sm:$0xf]
        %v4807 = vld [vmem:[%s4797 + $0x24] sm:$0xf]
        %v4808 = vld [vmem:[%s4797 + $0x28] sm:$0xf]
        %v4809 = vld [vmem:[%s4797 + $0x2c] sm:$0xf]
        %v4810 = vld [vmem:[%s4797 + $0x30] sm:$0xf]
        %v4811 = vld [vmem:[%s4797 + $0x34] sm:$0xf]
        %v4812 = vld [vmem:[%s4797 + $0x38] sm:$0xf]
        %v4813 = vld [vmem:[%s4797 + $0x3c] sm:$0xf]
        %v4830 = vunpack.c.l.b16 %v4798
        %v4831 = vunpack.c.l.b16 %v4799
        %v4832 = vunpack.c.l.b16 %v4800
        %v4833 = vunpack.c.l.b16 %v4801
        %v4834 = vunpack.c.l.b16 %v4802
        %v4835 = vunpack.c.l.b16 %v4803
        %v4836 = vunpack.c.l.b16 %v4804
        %v4837 = vunpack.c.l.b16 %v4805
        %v4838 = vunpack.c.l.b16 %v4806
        %v4839 = vunpack.c.l.b16 %v4807
        %v4840 = vunpack.c.l.b16 %v4808
        %v4841 = vunpack.c.l.b16 %v4809
        %v4842 = vunpack.c.l.b16 %v4810
        %v4843 = vunpack.c.l.b16 %v4811
        %v4844 = vunpack.c.l.b16 %v4812
        %v4845 = vunpack.c.l.b16 %v4813
        %v4846 = vpack.c.b16 %v4831, %v4830
        %v4847 = vpack.c.b16 %v4833, %v4832
        %v4848 = vpack.c.b16 %v4835, %v4834
        %v4849 = vpack.c.b16 %v4837, %v4836
        %v4850 = vpack.c.b16 %v4839, %v4838
        %v4851 = vpack.c.b16 %v4841, %v4840
        %v4852 = vpack.c.b16 %v4843, %v4842
        %v4853 = vpack.c.b16 %v4845, %v4844
        %4862 = vmatpush.bf16.msra.mxu0 %v4853
        %4863 = vmatpush.bf16.msra.mxu0 %v4852
        %4864 = vmatpush.bf16.msra.mxu0 %v4851
        %4865 = vmatpush.bf16.msra.mxu0 %v4850
        %4866 = vmatpush.bf16.msra.mxu0 %v4849
        %4867 = vmatpush.bf16.msra.mxu0 %v4848
        %4868 = vmatpush.bf16.msra.mxu0 %v4847
        %4869 = vmatpush.bf16.msra.mxu0 %v4846
        %4870 = vmatmul.bf16.gmra.mxu0 %v2637
        %v4871 = vpop.f32.mrf.mxu0
        %v4872 = vadd.f32 0.0, %v4871
        %v4873 = vpop.f32.mrf.mxu0
        %v4874 = vadd.f32 0.0, %v4873
        %4875 = vmatmul.bf16.gmra.mxu0 %v2638
        %v4876 = vpop.f32.mrf.mxu0
        %v4877 = vadd.f32 0.0, %v4876
        %v4878 = vpop.f32.mrf.mxu0
        %v4879 = vadd.f32 0.0, %v4878
        %4880 = vmatmul.bf16.gmra.mxu0 %v2639
        %v4881 = vpop.f32.mrf.mxu0
        %v4882 = vadd.f32 0.0, %v4881
        %v4883 = vpop.f32.mrf.mxu0
        %v4884 = vadd.f32 0.0, %v4883
        %4885 = vmatmul.bf16.gmra.mxu0 %v2640
        %v4886 = vpop.f32.mrf.mxu0
        %v4887 = vadd.f32 0.0, %v4886
        %v4888 = vpop.f32.mrf.mxu0
        %v4889 = vadd.f32 0.0, %v4888
        %4890 = vdwg.mxu0
        %v4891 = vadd.f32 %v4789, %v4872
        %v4892 = vadd.f32 %v4790, %v4874
        %v4893 = vadd.f32 %v4791, %v4877
        %v4894 = vadd.f32 %v4792, %v4879
        %v4895 = vadd.f32 %v4793, %v4882
        %v4896 = vadd.f32 %v4794, %v4884
        %v4897 = vadd.f32 %v4795, %v4887
        %v4898 = vadd.f32 %v4796, %v4889
        %v4899 = vadd.f32 %v4891, %v2967
        %v4900 = vadd.f32 %v4892, %v2967
        %v4901 = vadd.f32 %v4893, %v2967
        %v4902 = vadd.f32 %v4894, %v2967
        %v4903 = vadd.f32 %v4895, %v2967
        %v4904 = vadd.f32 %v4896, %v2967
        %v4905 = vadd.f32 %v4897, %v2967
        %v4906 = vadd.f32 %v4898, %v2967
        %v4907 = vmax.f32 %v4899, 0.0
        %v4908 = vmax.f32 %v4900, 0.0
        %v4909 = vmax.f32 %v4901, 0.0
        %v4910 = vmax.f32 %v4902, 0.0
        %v4911 = vmax.f32 %v4903, 0.0
        %v4912 = vmax.f32 %v4904, 0.0
        %v4913 = vmax.f32 %v4905, 0.0
        %v4914 = vmax.f32 %v4906, 0.0
        %v4915 = vpack.c.bf16 %v4907, %v4907
        %v4916 = vpack.c.bf16 %v4908, %v4908
        %v4917 = vpack.c.bf16 %v4909, %v4909
        %v4918 = vpack.c.bf16 %v4910, %v4910
        %v4919 = vpack.c.bf16 %v4911, %v4911
        %v4920 = vpack.c.bf16 %v4912, %v4912
        %v4921 = vpack.c.bf16 %v4913, %v4913
        %v4922 = vpack.c.bf16 %v4914, %v4914
        %s4923 = scalar_lea.vmem %s352, 64 [#allocation5]
        %4924 = vst [vmem:[%s4923] sm:$0xf] %v4915
        %4925 = vst [vmem:[%s4923 + $0x4] sm:$0xf] %v4916
        %4926 = vst [vmem:[%s4923 + $0x8] sm:$0xf] %v4917
        %4927 = vst [vmem:[%s4923 + $0xc] sm:$0xf] %v4918
        %4928 = vst [vmem:[%s4923 + $0x10] sm:$0xf] %v4919
        %4929 = vst [vmem:[%s4923 + $0x14] sm:$0xf] %v4920
        %4930 = vst [vmem:[%s4923 + $0x18] sm:$0xf] %v4921
        %4931 = vst [vmem:[%s4923 + $0x1c] sm:$0xf] %v4922
        %4932 = vmatpush.bf16.msra.mxu0 %v1291
        %4933 = vmatpush.bf16.msra.mxu0 %v1290
        %4934 = vmatpush.bf16.msra.mxu0 %v1289
        %4935 = vmatpush.bf16.msra.mxu0 %v1288
        %4936 = vmatpush.bf16.msra.mxu0 %v1287
        %4937 = vmatpush.bf16.msra.mxu0 %v1286
        %4938 = vmatpush.bf16.msra.mxu0 %v1285
        %4939 = vmatpush.bf16.msra.mxu0 %v1284
        %4940 = vmatmul.bf16.gmra.mxu0 %v1984
        %v4941 = vpop.f32.mrf.mxu0
        %v4942 = vadd.f32 0.0, %v4941
        %v4943 = vpop.f32.mrf.mxu0
        %v4944 = vadd.f32 0.0, %v4943
        %4945 = vmatmul.bf16.gmra.mxu0 %v1985
        %v4946 = vpop.f32.mrf.mxu0
        %v4947 = vadd.f32 0.0, %v4946
        %v4948 = vpop.f32.mrf.mxu0
        %v4949 = vadd.f32 0.0, %v4948
        %4950 = vmatmul.bf16.gmra.mxu0 %v1986
        %v4951 = vpop.f32.mrf.mxu0
        %v4952 = vadd.f32 0.0, %v4951
        %v4953 = vpop.f32.mrf.mxu0
        %v4954 = vadd.f32 0.0, %v4953
        %4955 = vmatmul.bf16.gmra.mxu0 %v1987
        %v4956 = vpop.f32.mrf.mxu0
        %v4957 = vadd.f32 0.0, %v4956
        %v4958 = vpop.f32.mrf.mxu0
        %v4959 = vadd.f32 0.0, %v4958
        %4960 = vdwg.mxu0
        %4961 = vmatpush.bf16.msra.mxu0 %v1392
        %4962 = vmatpush.bf16.msra.mxu0 %v1391
        %4963 = vmatpush.bf16.msra.mxu0 %v1390
        %4964 = vmatpush.bf16.msra.mxu0 %v1389
        %4965 = vmatpush.bf16.msra.mxu0 %v1388
        %4966 = vmatpush.bf16.msra.mxu0 %v1387
        %4967 = vmatpush.bf16.msra.mxu0 %v1386
        %4968 = vmatpush.bf16.msra.mxu0 %v1385
        %4969 = vmatmul.bf16.gmra.mxu0 %v1771
        %v4970 = vpop.f32.mrf.mxu0
        %v4971 = vadd.f32 %v4942, %v4970
        %v4972 = vpop.f32.mrf.mxu0
        %v4973 = vadd.f32 %v4944, %v4972
        %4974 = vmatmul.bf16.gmra.mxu0 %v1772
        %v4975 = vpop.f32.mrf.mxu0
        %v4976 = vadd.f32 %v4947, %v4975
        %v4977 = vpop.f32.mrf.mxu0
        %v4978 = vadd.f32 %v4949, %v4977
        %4979 = vmatmul.bf16.gmra.mxu0 %v1773
        %v4980 = vpop.f32.mrf.mxu0
        %v4981 = vadd.f32 %v4952, %v4980
        %v4982 = vpop.f32.mrf.mxu0
        %v4983 = vadd.f32 %v4954, %v4982
        %4984 = vmatmul.bf16.gmra.mxu0 %v1774
        %v4985 = vpop.f32.mrf.mxu0
        %v4986 = vadd.f32 %v4957, %v4985
        %v4987 = vpop.f32.mrf.mxu0
        %v4988 = vadd.f32 %v4959, %v4987
        %4989 = vdwg.mxu0
        %4990 = vmatpush.bf16.msra.mxu0 %v1600
        %4991 = vmatpush.bf16.msra.mxu0 %v1599
        %4992 = vmatpush.bf16.msra.mxu0 %v1598
        %4993 = vmatpush.bf16.msra.mxu0 %v1597
        %4994 = vmatpush.bf16.msra.mxu0 %v1596
        %4995 = vmatpush.bf16.msra.mxu0 %v1595
        %4996 = vmatpush.bf16.msra.mxu0 %v1594
        %4997 = vmatpush.bf16.msra.mxu0 %v1593
        %4998 = vmatmul.bf16.gmra.mxu0 %v3417
        %v4999 = vpop.f32.mrf.mxu0
        %v5000 = vadd.f32 0.0, %v4999
        %v5001 = vpop.f32.mrf.mxu0
        %v5002 = vadd.f32 0.0, %v5001
        %5003 = vmatmul.bf16.gmra.mxu0 %v3418
        %v5004 = vpop.f32.mrf.mxu0
        %v5005 = vadd.f32 0.0, %v5004
        %v5006 = vpop.f32.mrf.mxu0
        %v5007 = vadd.f32 0.0, %v5006
        %5008 = vmatmul.bf16.gmra.mxu0 %v3419
        %v5009 = vpop.f32.mrf.mxu0
        %v5010 = vadd.f32 0.0, %v5009
        %v5011 = vpop.f32.mrf.mxu0
        %v5012 = vadd.f32 0.0, %v5011
        %5013 = vmatmul.bf16.gmra.mxu0 %v3420
        %v5014 = vpop.f32.mrf.mxu0
        %v5015 = vadd.f32 0.0, %v5014
        %v5016 = vpop.f32.mrf.mxu0
        %v5017 = vadd.f32 0.0, %v5016
        %5018 = vdwg.mxu0
        %v5019 = vadd.f32 %v4971, %v5000
        %v5020 = vadd.f32 %v4973, %v5002
        %v5021 = vadd.f32 %v4976, %v5005
        %v5022 = vadd.f32 %v4978, %v5007
        %v5023 = vadd.f32 %v4981, %v5010
        %v5024 = vadd.f32 %v4983, %v5012
        %v5025 = vadd.f32 %v4986, %v5015
        %v5026 = vadd.f32 %v4988, %v5017
        %5027 = vmatpush.bf16.msra.mxu0 %v1709
        %5028 = vmatpush.bf16.msra.mxu0 %v1708
        %5029 = vmatpush.bf16.msra.mxu0 %v1707
        %5030 = vmatpush.bf16.msra.mxu0 %v1706
        %5031 = vmatpush.bf16.msra.mxu0 %v1705
        %5032 = vmatpush.bf16.msra.mxu0 %v1704
        %5033 = vmatpush.bf16.msra.mxu0 %v1703
        %5034 = vmatpush.bf16.msra.mxu0 %v1702
        %5035 = vmatmul.bf16.gmra.mxu0 %v2174
        %v5036 = vpop.f32.mrf.mxu0
        %v5037 = vadd.f32 0.0, %v5036
        %v5038 = vpop.f32.mrf.mxu0
        %v5039 = vadd.f32 0.0, %v5038
        %5040 = vmatmul.bf16.gmra.mxu0 %v2175
        %v5041 = vpop.f32.mrf.mxu0
        %v5042 = vadd.f32 0.0, %v5041
        %v5043 = vpop.f32.mrf.mxu0
        %v5044 = vadd.f32 0.0, %v5043
        %5045 = vmatmul.bf16.gmra.mxu0 %v2176
        %v5046 = vpop.f32.mrf.mxu0
        %v5047 = vadd.f32 0.0, %v5046
        %v5048 = vpop.f32.mrf.mxu0
        %v5049 = vadd.f32 0.0, %v5048
        %5050 = vmatmul.bf16.gmra.mxu0 %v2177
        %v5051 = vpop.f32.mrf.mxu0
        %v5052 = vadd.f32 0.0, %v5051
        %v5053 = vpop.f32.mrf.mxu0
        %v5054 = vadd.f32 0.0, %v5053
        %5055 = vdwg.mxu0
        %v5056 = vadd.f32 %v5019, %v5037
        %v5057 = vadd.f32 %v5020, %v5039
        %v5058 = vadd.f32 %v5021, %v5042
        %v5059 = vadd.f32 %v5022, %v5044
        %v5060 = vadd.f32 %v5023, %v5047
        %v5061 = vadd.f32 %v5024, %v5049
        %v5062 = vadd.f32 %v5025, %v5052
        %v5063 = vadd.f32 %v5026, %v5054
        %5064 = vmatpush.bf16.msra.mxu0 %v1818
        %5065 = vmatpush.bf16.msra.mxu0 %v1817
        %5066 = vmatpush.bf16.msra.mxu0 %v1816
        %5067 = vmatpush.bf16.msra.mxu0 %v1815
        %5068 = vmatpush.bf16.msra.mxu0 %v1814
        %5069 = vmatpush.bf16.msra.mxu0 %v1813
        %5070 = vmatpush.bf16.msra.mxu0 %v1812
        %5071 = vmatpush.bf16.msra.mxu0 %v1811
        %5072 = vmatmul.bf16.gmra.mxu0 %v2282
        %v5073 = vpop.f32.mrf.mxu0
        %v5074 = vadd.f32 0.0, %v5073
        %v5075 = vpop.f32.mrf.mxu0
        %v5076 = vadd.f32 0.0, %v5075
        %5077 = vmatmul.bf16.gmra.mxu0 %v2283
        %v5078 = vpop.f32.mrf.mxu0
        %v5079 = vadd.f32 0.0, %v5078
        %v5080 = vpop.f32.mrf.mxu0
        %v5081 = vadd.f32 0.0, %v5080
        %5082 = vmatmul.bf16.gmra.mxu0 %v2284
        %v5083 = vpop.f32.mrf.mxu0
        %v5084 = vadd.f32 0.0, %v5083
        %v5085 = vpop.f32.mrf.mxu0
        %v5086 = vadd.f32 0.0, %v5085
        %5087 = vmatmul.bf16.gmra.mxu0 %v2285
        %v5088 = vpop.f32.mrf.mxu0
        %v5089 = vadd.f32 0.0, %v5088
        %v5090 = vpop.f32.mrf.mxu0
        %v5091 = vadd.f32 0.0, %v5090
        %5092 = vdwg.mxu0
        %v5093 = vadd.f32 %v5056, %v5074
        %v5094 = vadd.f32 %v5057, %v5076
        %v5095 = vadd.f32 %v5058, %v5079
        %v5096 = vadd.f32 %v5059, %v5081
        %v5097 = vadd.f32 %v5060, %v5084
        %v5098 = vadd.f32 %v5061, %v5086
        %v5099 = vadd.f32 %v5062, %v5089
        %v5100 = vadd.f32 %v5063, %v5091
        %5101 = vmatpush.bf16.msra.mxu0 %v2031
        %5102 = vmatpush.bf16.msra.mxu0 %v2030
        %5103 = vmatpush.bf16.msra.mxu0 %v2029
        %5104 = vmatpush.bf16.msra.mxu0 %v2028
        %5105 = vmatpush.bf16.msra.mxu0 %v2027
        %5106 = vmatpush.bf16.msra.mxu0 %v2026
        %5107 = vmatpush.bf16.msra.mxu0 %v2025
        %5108 = vmatpush.bf16.msra.mxu0 %v2024
        %5109 = vmatmul.bf16.gmra.mxu0 %v3551
        %v5110 = vpop.f32.mrf.mxu0
        %v5111 = vadd.f32 0.0, %v5110
        %v5112 = vpop.f32.mrf.mxu0
        %v5113 = vadd.f32 0.0, %v5112
        %5114 = vmatmul.bf16.gmra.mxu0 %v3552
        %v5115 = vpop.f32.mrf.mxu0
        %v5116 = vadd.f32 0.0, %v5115
        %v5117 = vpop.f32.mrf.mxu0
        %v5118 = vadd.f32 0.0, %v5117
        %5119 = vmatmul.bf16.gmra.mxu0 %v3553
        %v5120 = vpop.f32.mrf.mxu0
        %v5121 = vadd.f32 0.0, %v5120
        %v5122 = vpop.f32.mrf.mxu0
        %v5123 = vadd.f32 0.0, %v5122
        %5124 = vmatmul.bf16.gmra.mxu0 %v3554
        %v5125 = vpop.f32.mrf.mxu0
        %v5126 = vadd.f32 0.0, %v5125
        %v5127 = vpop.f32.mrf.mxu0
        %v5128 = vadd.f32 0.0, %v5127
        %5129 = vdwg.mxu0
        %v5130 = vadd.f32 %v5093, %v5111
        %v5131 = vadd.f32 %v5094, %v5113
        %v5132 = vadd.f32 %v5095, %v5116
        %v5133 = vadd.f32 %v5096, %v5118
        %v5134 = vadd.f32 %v5097, %v5121
        %v5135 = vadd.f32 %v5098, %v5123
        %v5136 = vadd.f32 %v5099, %v5126
        %v5137 = vadd.f32 %v5100, %v5128
        %5138 = vmatpush.bf16.msra.mxu0 %v2126
        %5139 = vmatpush.bf16.msra.mxu0 %v2125
        %5140 = vmatpush.bf16.msra.mxu0 %v2124
        %5141 = vmatpush.bf16.msra.mxu0 %v2123
        %5142 = vmatpush.bf16.msra.mxu0 %v2122
        %5143 = vmatpush.bf16.msra.mxu0 %v2121
        %5144 = vmatpush.bf16.msra.mxu0 %v2120
        %5145 = vmatpush.bf16.msra.mxu0 %v2119
        %5146 = vmatmul.bf16.gmra.mxu0 %v4365
        %v5147 = vpop.f32.mrf.mxu0
        %v5148 = vadd.f32 0.0, %v5147
        %v5149 = vpop.f32.mrf.mxu0
        %v5150 = vadd.f32 0.0, %v5149
        %5151 = vmatmul.bf16.gmra.mxu0 %v4366
        %v5152 = vpop.f32.mrf.mxu0
        %v5153 = vadd.f32 0.0, %v5152
        %v5154 = vpop.f32.mrf.mxu0
        %v5155 = vadd.f32 0.0, %v5154
        %5156 = vmatmul.bf16.gmra.mxu0 %v4367
        %v5157 = vpop.f32.mrf.mxu0
        %v5158 = vadd.f32 0.0, %v5157
        %v5159 = vpop.f32.mrf.mxu0
        %v5160 = vadd.f32 0.0, %v5159
        %5161 = vmatmul.bf16.gmra.mxu0 %v4368
        %v5162 = vpop.f32.mrf.mxu0
        %v5163 = vadd.f32 0.0, %v5162
        %v5164 = vpop.f32.mrf.mxu0
        %v5165 = vadd.f32 0.0, %v5164
        %5166 = vdwg.mxu0
        %v5167 = vadd.f32 %v5130, %v5148
        %v5168 = vadd.f32 %v5131, %v5150
        %v5169 = vadd.f32 %v5132, %v5153
        %v5170 = vadd.f32 %v5133, %v5155
        %v5171 = vadd.f32 %v5134, %v5158
        %v5172 = vadd.f32 %v5135, %v5160
        %v5173 = vadd.f32 %v5136, %v5163
        %v5174 = vadd.f32 %v5137, %v5165
        %5175 = vmatpush.bf16.msra.mxu0 %v2221
        %5176 = vmatpush.bf16.msra.mxu0 %v2220
        %5177 = vmatpush.bf16.msra.mxu0 %v2219
        %5178 = vmatpush.bf16.msra.mxu0 %v2218
        %5179 = vmatpush.bf16.msra.mxu0 %v2217
        %5180 = vmatpush.bf16.msra.mxu0 %v2216
        %5181 = vmatpush.bf16.msra.mxu0 %v2215
        %5182 = vmatpush.bf16.msra.mxu0 %v2214
        %5183 = vmatmul.bf16.gmra.mxu0 %v4425
        %v5184 = vpop.f32.mrf.mxu0
        %v5185 = vadd.f32 0.0, %v5184
        %v5186 = vpop.f32.mrf.mxu0
        %v5187 = vadd.f32 0.0, %v5186
        %5188 = vmatmul.bf16.gmra.mxu0 %v4426
        %v5189 = vpop.f32.mrf.mxu0
        %v5190 = vadd.f32 0.0, %v5189
        %v5191 = vpop.f32.mrf.mxu0
        %v5192 = vadd.f32 0.0, %v5191
        %5193 = vmatmul.bf16.gmra.mxu0 %v4427
        %v5194 = vpop.f32.mrf.mxu0
        %v5195 = vadd.f32 0.0, %v5194
        %v5196 = vpop.f32.mrf.mxu0
        %v5197 = vadd.f32 0.0, %v5196
        %5198 = vmatmul.bf16.gmra.mxu0 %v4428
        %v5199 = vpop.f32.mrf.mxu0
        %v5200 = vadd.f32 0.0, %v5199
        %v5201 = vpop.f32.mrf.mxu0
        %v5202 = vadd.f32 0.0, %v5201
        %5203 = vdwg.mxu0
        %v5204 = vadd.f32 %v5167, %v5185
        %v5205 = vadd.f32 %v5168, %v5187
        %v5206 = vadd.f32 %v5169, %v5190
        %v5207 = vadd.f32 %v5170, %v5192
        %v5208 = vadd.f32 %v5171, %v5195
        %v5209 = vadd.f32 %v5172, %v5197
        %v5210 = vadd.f32 %v5173, %v5200
        %v5211 = vadd.f32 %v5174, %v5202
        %v5213 = vshrl.u32 %v1226, 16
        %v5215 = vrot.slane %v5213, 4
        %v5216 = vshll.u32 %v1226, 16
        %v5218 = vrot.slane %v5216, 5
        %v5219 = vor.u32 %v5215, %v5218
        %v5220 = vrot.slane %v5219, 4
        %v5222 = vshll.u32 %v1227, 16
        %v5224 = vrot.slane %v5222, 5
        %v5225 = vsel %vm1432, %v5220, %v5224
        %v5226 = vunpack.c.l.b16 %v5225
        %v5227 = vpack.c.b16 %v3411, %v3410
        %v5228 = vpack.c.b16 %v3413, %v3412
        %v5229 = vpack.c.b16 %v3415, %v3414
        %v5230 = vpack.c.b16 %v5226, %v3416
        %5235 = vmatpush.bf16.msra.mxu0 %v2329
        %5236 = vmatpush.bf16.msra.mxu0 %v2328
        %5237 = vmatpush.bf16.msra.mxu0 %v2327
        %5238 = vmatpush.bf16.msra.mxu0 %v2326
        %5239 = vmatpush.bf16.msra.mxu0 %v2325
        %5240 = vmatpush.bf16.msra.mxu0 %v2324
        %5241 = vmatpush.bf16.msra.mxu0 %v2323
        %5242 = vmatpush.bf16.msra.mxu0 %v2322
        %5243 = vmatmul.bf16.gmra.mxu0 %v5227
        %v5244 = vpop.f32.mrf.mxu0
        %v5245 = vadd.f32 0.0, %v5244
        %v5246 = vpop.f32.mrf.mxu0
        %v5247 = vadd.f32 0.0, %v5246
        %5248 = vmatmul.bf16.gmra.mxu0 %v5228
        %v5249 = vpop.f32.mrf.mxu0
        %v5250 = vadd.f32 0.0, %v5249
        %v5251 = vpop.f32.mrf.mxu0
        %v5252 = vadd.f32 0.0, %v5251
        %5253 = vmatmul.bf16.gmra.mxu0 %v5229
        %v5254 = vpop.f32.mrf.mxu0
        %v5255 = vadd.f32 0.0, %v5254
        %v5256 = vpop.f32.mrf.mxu0
        %v5257 = vadd.f32 0.0, %v5256
        %5258 = vmatmul.bf16.gmra.mxu0 %v5230
        %v5259 = vpop.f32.mrf.mxu0
        %v5260 = vadd.f32 0.0, %v5259
        %v5261 = vpop.f32.mrf.mxu0
        %v5262 = vadd.f32 0.0, %v5261
        %5263 = vdwg.mxu0
        %v5264 = vadd.f32 %v5204, %v5245
        %v5265 = vadd.f32 %v5205, %v5247
        %v5266 = vadd.f32 %v5206, %v5250
        %v5267 = vadd.f32 %v5207, %v5252
        %v5268 = vadd.f32 %v5208, %v5255
        %v5269 = vadd.f32 %v5209, %v5257
        %v5270 = vadd.f32 %v5210, %v5260
        %v5271 = vadd.f32 %v5211, %v5262
        %v5273 = vrot.slane %v1151, 5
        %v5274 = vrot.slane %v5273, 4
        %v5275 = vrot.slane %v1152, 5
        %v5276 = vsel %vm3606, %v5274, %v5275
        %s5277 = scalar_lea.vmem %s5, 768
        %v5278 = vld [vmem:[%s5277] sm:$0xf]
        %v5279 = vld [vmem:[%s5277 + $0x4] sm:$0xf]
        %v5280 = vld [vmem:[%s5277 + $0x8] sm:$0xf]
        %v5281 = vld [vmem:[%s5277 + $0xc] sm:$0xf]
        %v5282 = vld [vmem:[%s5277 + $0x10] sm:$0xf]
        %v5283 = vld [vmem:[%s5277 + $0x14] sm:$0xf]
        %v5284 = vld [vmem:[%s5277 + $0x18] sm:$0xf]
        %v5285 = vld [vmem:[%s5277 + $0x1c] sm:$0xf]
        %v5286 = vld [vmem:[%s5277 + $0x20] sm:$0xf]
        %v5287 = vld [vmem:[%s5277 + $0x24] sm:$0xf]
        %v5288 = vld [vmem:[%s5277 + $0x28] sm:$0xf]
        %v5289 = vld [vmem:[%s5277 + $0x2c] sm:$0xf]
        %v5290 = vld [vmem:[%s5277 + $0x30] sm:$0xf]
        %v5291 = vld [vmem:[%s5277 + $0x34] sm:$0xf]
        %v5292 = vld [vmem:[%s5277 + $0x38] sm:$0xf]
        %v5293 = vld [vmem:[%s5277 + $0x3c] sm:$0xf]
        %v5294 = vunpack.c.l.b16 %v5276
        %v5295 = vpack.c.b16 %v5294, %v3663
        %v5313 = vunpack.c.l.b16 %v5278
        %v5314 = vunpack.c.l.b16 %v5279
        %v5315 = vunpack.c.l.b16 %v5280
        %v5316 = vunpack.c.l.b16 %v5281
        %v5317 = vunpack.c.l.b16 %v5282
        %v5318 = vunpack.c.l.b16 %v5283
        %v5319 = vunpack.c.l.b16 %v5284
        %v5320 = vunpack.c.l.b16 %v5285
        %v5321 = vunpack.c.l.b16 %v5286
        %v5322 = vunpack.c.l.b16 %v5287
        %v5323 = vunpack.c.l.b16 %v5288
        %v5324 = vunpack.c.l.b16 %v5289
        %v5325 = vunpack.c.l.b16 %v5290
        %v5326 = vunpack.c.l.b16 %v5291
        %v5327 = vunpack.c.l.b16 %v5292
        %v5328 = vunpack.c.l.b16 %v5293
        %v5329 = vpack.c.b16 %v5314, %v5313
        %v5330 = vpack.c.b16 %v5316, %v5315
        %v5331 = vpack.c.b16 %v5318, %v5317
        %v5332 = vpack.c.b16 %v5320, %v5319
        %v5333 = vpack.c.b16 %v5322, %v5321
        %v5334 = vpack.c.b16 %v5324, %v5323
        %v5335 = vpack.c.b16 %v5326, %v5325
        %v5336 = vpack.c.b16 %v5328, %v5327
        %5345 = vmatpush.bf16.msra.mxu0 %v5336
        %5346 = vmatpush.bf16.msra.mxu0 %v5335
        %5347 = vmatpush.bf16.msra.mxu0 %v5334
        %5348 = vmatpush.bf16.msra.mxu0 %v5333
        %5349 = vmatpush.bf16.msra.mxu0 %v5332
        %5350 = vmatpush.bf16.msra.mxu0 %v5331
        %5351 = vmatpush.bf16.msra.mxu0 %v5330
        %5352 = vmatpush.bf16.msra.mxu0 %v5329
        %5353 = vmatmul.bf16.gmra.mxu0 %v3883
        %v5354 = vpop.f32.mrf.mxu0
        %v5355 = vadd.f32 0.0, %v5354
        %v5356 = vpop.f32.mrf.mxu0
        %v5357 = vadd.f32 0.0, %v5356
        %5358 = vmatmul.bf16.gmra.mxu0 %v3884
        %v5359 = vpop.f32.mrf.mxu0
        %v5360 = vadd.f32 0.0, %v5359
        %v5361 = vpop.f32.mrf.mxu0
        %v5362 = vadd.f32 0.0, %v5361
        %5363 = vmatmul.bf16.gmra.mxu0 %v3885
        %v5364 = vpop.f32.mrf.mxu0
        %v5365 = vadd.f32 0.0, %v5364
        %v5366 = vpop.f32.mrf.mxu0
        %v5367 = vadd.f32 0.0, %v5366
        %5368 = vmatmul.bf16.gmra.mxu0 %v5295
        %v5369 = vpop.f32.mrf.mxu0
        %v5370 = vadd.f32 0.0, %v5369
        %v5371 = vpop.f32.mrf.mxu0
        %v5372 = vadd.f32 0.0, %v5371
        %5373 = vdwg.mxu0
        %v5374 = vadd.f32 %v5264, %v5355
        %v5375 = vadd.f32 %v5265, %v5357
        %v5376 = vadd.f32 %v5266, %v5360
        %v5377 = vadd.f32 %v5267, %v5362
        %v5378 = vadd.f32 %v5268, %v5365
        %v5379 = vadd.f32 %v5269, %v5367
        %v5380 = vadd.f32 %v5270, %v5370
        %v5381 = vadd.f32 %v5271, %v5372
        %s5382 = scalar_lea.vmem %s5, 832
        %v5383 = vld [vmem:[%s5382] sm:$0xf]
        %v5384 = vld [vmem:[%s5382 + $0x4] sm:$0xf]
        %v5385 = vld [vmem:[%s5382 + $0x8] sm:$0xf]
        %v5386 = vld [vmem:[%s5382 + $0xc] sm:$0xf]
        %v5387 = vld [vmem:[%s5382 + $0x10] sm:$0xf]
        %v5388 = vld [vmem:[%s5382 + $0x14] sm:$0xf]
        %v5389 = vld [vmem:[%s5382 + $0x18] sm:$0xf]
        %v5390 = vld [vmem:[%s5382 + $0x1c] sm:$0xf]
        %v5391 = vld [vmem:[%s5382 + $0x20] sm:$0xf]
        %v5392 = vld [vmem:[%s5382 + $0x24] sm:$0xf]
        %v5393 = vld [vmem:[%s5382 + $0x28] sm:$0xf]
        %v5394 = vld [vmem:[%s5382 + $0x2c] sm:$0xf]
        %v5395 = vld [vmem:[%s5382 + $0x30] sm:$0xf]
        %v5396 = vld [vmem:[%s5382 + $0x34] sm:$0xf]
        %v5397 = vld [vmem:[%s5382 + $0x38] sm:$0xf]
        %v5398 = vld [vmem:[%s5382 + $0x3c] sm:$0xf]
        %v5415 = vunpack.c.l.b16 %v5383
        %v5416 = vunpack.c.l.b16 %v5384
        %v5417 = vunpack.c.l.b16 %v5385
        %v5418 = vunpack.c.l.b16 %v5386
        %v5419 = vunpack.c.l.b16 %v5387
        %v5420 = vunpack.c.l.b16 %v5388
        %v5421 = vunpack.c.l.b16 %v5389
        %v5422 = vunpack.c.l.b16 %v5390
        %v5423 = vunpack.c.l.b16 %v5391
        %v5424 = vunpack.c.l.b16 %v5392
        %v5425 = vunpack.c.l.b16 %v5393
        %v5426 = vunpack.c.l.b16 %v5394
        %v5427 = vunpack.c.l.b16 %v5395
        %v5428 = vunpack.c.l.b16 %v5396
        %v5429 = vunpack.c.l.b16 %v5397
        %v5430 = vunpack.c.l.b16 %v5398
        %v5431 = vpack.c.b16 %v5416, %v5415
        %v5432 = vpack.c.b16 %v5418, %v5417
        %v5433 = vpack.c.b16 %v5420, %v5419
        %v5434 = vpack.c.b16 %v5422, %v5421
        %v5435 = vpack.c.b16 %v5424, %v5423
        %v5436 = vpack.c.b16 %v5426, %v5425
        %v5437 = vpack.c.b16 %v5428, %v5427
        %v5438 = vpack.c.b16 %v5430, %v5429
        %5447 = vmatpush.bf16.msra.mxu0 %v5438
        %5448 = vmatpush.bf16.msra.mxu0 %v5437
        %5449 = vmatpush.bf16.msra.mxu0 %v5436
        %5450 = vmatpush.bf16.msra.mxu0 %v5435
        %5451 = vmatpush.bf16.msra.mxu0 %v5434
        %5452 = vmatpush.bf16.msra.mxu0 %v5433
        %5453 = vmatpush.bf16.msra.mxu0 %v5432
        %5454 = vmatpush.bf16.msra.mxu0 %v5431
        %5455 = vmatmul.bf16.gmra.mxu0 %v2763
        %v5456 = vpop.f32.mrf.mxu0
        %v5457 = vadd.f32 0.0, %v5456
        %v5458 = vpop.f32.mrf.mxu0
        %v5459 = vadd.f32 0.0, %v5458
        %5460 = vmatmul.bf16.gmra.mxu0 %v2764
        %v5461 = vpop.f32.mrf.mxu0
        %v5462 = vadd.f32 0.0, %v5461
        %v5463 = vpop.f32.mrf.mxu0
        %v5464 = vadd.f32 0.0, %v5463
        %5465 = vmatmul.bf16.gmra.mxu0 %v2765
        %v5466 = vpop.f32.mrf.mxu0
        %v5467 = vadd.f32 0.0, %v5466
        %v5468 = vpop.f32.mrf.mxu0
        %v5469 = vadd.f32 0.0, %v5468
        %5470 = vmatmul.bf16.gmra.mxu0 %v4502
        %v5471 = vpop.f32.mrf.mxu0
        %v5472 = vadd.f32 0.0, %v5471
        %v5473 = vpop.f32.mrf.mxu0
        %v5474 = vadd.f32 0.0, %v5473
        %5475 = vdwg.mxu0
        %v5476 = vadd.f32 %v5374, %v5457
        %v5477 = vadd.f32 %v5375, %v5459
        %v5478 = vadd.f32 %v5376, %v5462
        %v5479 = vadd.f32 %v5377, %v5464
        %v5480 = vadd.f32 %v5378, %v5467
        %v5481 = vadd.f32 %v5379, %v5469
        %v5482 = vadd.f32 %v5380, %v5472
        %v5483 = vadd.f32 %v5381, %v5474
        %s5484 = scalar_lea.vmem %s5, 896
        %v5485 = vld [vmem:[%s5484] sm:$0xf]
        %v5486 = vld [vmem:[%s5484 + $0x4] sm:$0xf]
        %v5487 = vld [vmem:[%s5484 + $0x8] sm:$0xf]
        %v5488 = vld [vmem:[%s5484 + $0xc] sm:$0xf]
        %v5489 = vld [vmem:[%s5484 + $0x10] sm:$0xf]
        %v5490 = vld [vmem:[%s5484 + $0x14] sm:$0xf]
        %v5491 = vld [vmem:[%s5484 + $0x18] sm:$0xf]
        %v5492 = vld [vmem:[%s5484 + $0x1c] sm:$0xf]
        %v5493 = vld [vmem:[%s5484 + $0x20] sm:$0xf]
        %v5494 = vld [vmem:[%s5484 + $0x24] sm:$0xf]
        %v5495 = vld [vmem:[%s5484 + $0x28] sm:$0xf]
        %v5496 = vld [vmem:[%s5484 + $0x2c] sm:$0xf]
        %v5497 = vld [vmem:[%s5484 + $0x30] sm:$0xf]
        %v5498 = vld [vmem:[%s5484 + $0x34] sm:$0xf]
        %v5499 = vld [vmem:[%s5484 + $0x38] sm:$0xf]
        %v5500 = vld [vmem:[%s5484 + $0x3c] sm:$0xf]
        %v5517 = vunpack.c.l.b16 %v5485
        %v5518 = vunpack.c.l.b16 %v5486
        %v5519 = vunpack.c.l.b16 %v5487
        %v5520 = vunpack.c.l.b16 %v5488
        %v5521 = vunpack.c.l.b16 %v5489
        %v5522 = vunpack.c.l.b16 %v5490
        %v5523 = vunpack.c.l.b16 %v5491
        %v5524 = vunpack.c.l.b16 %v5492
        %v5525 = vunpack.c.l.b16 %v5493
        %v5526 = vunpack.c.l.b16 %v5494
        %v5527 = vunpack.c.l.b16 %v5495
        %v5528 = vunpack.c.l.b16 %v5496
        %v5529 = vunpack.c.l.b16 %v5497
        %v5530 = vunpack.c.l.b16 %v5498
        %v5531 = vunpack.c.l.b16 %v5499
        %v5532 = vunpack.c.l.b16 %v5500
        %v5533 = vpack.c.b16 %v5518, %v5517
        %v5534 = vpack.c.b16 %v5520, %v5519
        %v5535 = vpack.c.b16 %v5522, %v5521
        %v5536 = vpack.c.b16 %v5524, %v5523
        %v5537 = vpack.c.b16 %v5526, %v5525
        %v5538 = vpack.c.b16 %v5528, %v5527
        %v5539 = vpack.c.b16 %v5530, %v5529
        %v5540 = vpack.c.b16 %v5532, %v5531
        %5549 = vmatpush.bf16.msra.mxu0 %v5540
        %5550 = vmatpush.bf16.msra.mxu0 %v5539
        %5551 = vmatpush.bf16.msra.mxu0 %v5538
        %5552 = vmatpush.bf16.msra.mxu0 %v5537
        %5553 = vmatpush.bf16.msra.mxu0 %v5536
        %5554 = vmatpush.bf16.msra.mxu0 %v5535
        %5555 = vmatpush.bf16.msra.mxu0 %v5534
        %5556 = vmatpush.bf16.msra.mxu0 %v5533
        %5557 = vmatmul.bf16.gmra.mxu0 %v3664
        %v5558 = vpop.f32.mrf.mxu0
        %v5559 = vadd.f32 0.0, %v5558
        %v5560 = vpop.f32.mrf.mxu0
        %v5561 = vadd.f32 0.0, %v5560
        %5562 = vmatmul.bf16.gmra.mxu0 %v3665
        %v5563 = vpop.f32.mrf.mxu0
        %v5564 = vadd.f32 0.0, %v5563
        %v5565 = vpop.f32.mrf.mxu0
        %v5566 = vadd.f32 0.0, %v5565
        %5567 = vmatmul.bf16.gmra.mxu0 %v3666
        %v5568 = vpop.f32.mrf.mxu0
        %v5569 = vadd.f32 0.0, %v5568
        %v5570 = vpop.f32.mrf.mxu0
        %v5571 = vadd.f32 0.0, %v5570
        %5572 = vmatmul.bf16.gmra.mxu0 %v3667
        %v5573 = vpop.f32.mrf.mxu0
        %v5574 = vadd.f32 0.0, %v5573
        %v5575 = vpop.f32.mrf.mxu0
        %v5576 = vadd.f32 0.0, %v5575
        %5577 = vdwg.mxu0
        %v5578 = vadd.f32 %v5476, %v5559
        %v5579 = vadd.f32 %v5477, %v5561
        %v5580 = vadd.f32 %v5478, %v5564
        %v5581 = vadd.f32 %v5479, %v5566
        %v5582 = vadd.f32 %v5480, %v5569
        %v5583 = vadd.f32 %v5481, %v5571
        %v5584 = vadd.f32 %v5482, %v5574
        %v5585 = vadd.f32 %v5483, %v5576
        %s5586 = scalar_lea.vmem %s5, 960
        %v5587 = vld [vmem:[%s5586] sm:$0xf]
        %v5588 = vld [vmem:[%s5586 + $0x4] sm:$0xf]
        %v5589 = vld [vmem:[%s5586 + $0x8] sm:$0xf]
        %v5590 = vld [vmem:[%s5586 + $0xc] sm:$0xf]
        %v5591 = vld [vmem:[%s5586 + $0x10] sm:$0xf]
        %v5592 = vld [vmem:[%s5586 + $0x14] sm:$0xf]
        %v5593 = vld [vmem:[%s5586 + $0x18] sm:$0xf]
        %v5594 = vld [vmem:[%s5586 + $0x1c] sm:$0xf]
        %v5595 = vld [vmem:[%s5586 + $0x20] sm:$0xf]
        %v5596 = vld [vmem:[%s5586 + $0x24] sm:$0xf]
        %v5597 = vld [vmem:[%s5586 + $0x28] sm:$0xf]
        %v5598 = vld [vmem:[%s5586 + $0x2c] sm:$0xf]
        %v5599 = vld [vmem:[%s5586 + $0x30] sm:$0xf]
        %v5600 = vld [vmem:[%s5586 + $0x34] sm:$0xf]
        %v5601 = vld [vmem:[%s5586 + $0x38] sm:$0xf]
        %v5602 = vld [vmem:[%s5586 + $0x3c] sm:$0xf]
        %v5619 = vunpack.c.l.b16 %v5587
        %v5620 = vunpack.c.l.b16 %v5588
        %v5621 = vunpack.c.l.b16 %v5589
        %v5622 = vunpack.c.l.b16 %v5590
        %v5623 = vunpack.c.l.b16 %v5591
        %v5624 = vunpack.c.l.b16 %v5592
        %v5625 = vunpack.c.l.b16 %v5593
        %v5626 = vunpack.c.l.b16 %v5594
        %v5627 = vunpack.c.l.b16 %v5595
        %v5628 = vunpack.c.l.b16 %v5596
        %v5629 = vunpack.c.l.b16 %v5597
        %v5630 = vunpack.c.l.b16 %v5598
        %v5631 = vunpack.c.l.b16 %v5599
        %v5632 = vunpack.c.l.b16 %v5600
        %v5633 = vunpack.c.l.b16 %v5601
        %v5634 = vunpack.c.l.b16 %v5602
        %v5635 = vpack.c.b16 %v5620, %v5619
        %v5636 = vpack.c.b16 %v5622, %v5621
        %v5637 = vpack.c.b16 %v5624, %v5623
        %v5638 = vpack.c.b16 %v5626, %v5625
        %v5639 = vpack.c.b16 %v5628, %v5627
        %v5640 = vpack.c.b16 %v5630, %v5629
        %v5641 = vpack.c.b16 %v5632, %v5631
        %v5642 = vpack.c.b16 %v5634, %v5633
        %5651 = vmatpush.bf16.msra.mxu0 %v5642
        %5652 = vmatpush.bf16.msra.mxu0 %v5641
        %5653 = vmatpush.bf16.msra.mxu0 %v5640
        %5654 = vmatpush.bf16.msra.mxu0 %v5639
        %5655 = vmatpush.bf16.msra.mxu0 %v5638
        %5656 = vmatpush.bf16.msra.mxu0 %v5637
        %5657 = vmatpush.bf16.msra.mxu0 %v5636
        %5658 = vmatpush.bf16.msra.mxu0 %v5635
        %5659 = vmatmul.bf16.gmra.mxu0 %v2511
        %v5660 = vpop.f32.mrf.mxu0
        %v5661 = vadd.f32 0.0, %v5660
        %v5662 = vpop.f32.mrf.mxu0
        %v5663 = vadd.f32 0.0, %v5662
        %5664 = vmatmul.bf16.gmra.mxu0 %v2512
        %v5665 = vpop.f32.mrf.mxu0
        %v5666 = vadd.f32 0.0, %v5665
        %v5667 = vpop.f32.mrf.mxu0
        %v5668 = vadd.f32 0.0, %v5667
        %5669 = vmatmul.bf16.gmra.mxu0 %v2513
        %v5670 = vpop.f32.mrf.mxu0
        %v5671 = vadd.f32 0.0, %v5670
        %v5672 = vpop.f32.mrf.mxu0
        %v5673 = vadd.f32 0.0, %v5672
        %5674 = vmatmul.bf16.gmra.mxu0 %v2514
        %v5675 = vpop.f32.mrf.mxu0
        %v5676 = vadd.f32 0.0, %v5675
        %v5677 = vpop.f32.mrf.mxu0
        %v5678 = vadd.f32 0.0, %v5677
        %5679 = vdwg.mxu0
        %v5680 = vadd.f32 %v5578, %v5661
        %v5681 = vadd.f32 %v5579, %v5663
        %v5682 = vadd.f32 %v5580, %v5666
        %v5683 = vadd.f32 %v5581, %v5668
        %v5684 = vadd.f32 %v5582, %v5671
        %v5685 = vadd.f32 %v5583, %v5673
        %v5686 = vadd.f32 %v5584, %v5676
        %v5687 = vadd.f32 %v5585, %v5678
        %v5688 = vadd.f32 %v5680, %v2967
        %v5689 = vadd.f32 %v5681, %v2967
        %v5690 = vadd.f32 %v5682, %v2967
        %v5691 = vadd.f32 %v5683, %v2967
        %v5692 = vadd.f32 %v5684, %v2967
        %v5693 = vadd.f32 %v5685, %v2967
        %v5694 = vadd.f32 %v5686, %v2967
        %v5695 = vadd.f32 %v5687, %v2967
        %v5696 = vmax.f32 %v5688, 0.0
        %v5697 = vmax.f32 %v5689, 0.0
        %v5698 = vmax.f32 %v5690, 0.0
        %v5699 = vmax.f32 %v5691, 0.0
        %v5700 = vmax.f32 %v5692, 0.0
        %v5701 = vmax.f32 %v5693, 0.0
        %v5702 = vmax.f32 %v5694, 0.0
        %v5703 = vmax.f32 %v5695, 0.0
        %v5704 = vpack.c.bf16 %v5696, %v5696
        %v5705 = vpack.c.bf16 %v5697, %v5697
        %v5706 = vpack.c.bf16 %v5698, %v5698
        %v5707 = vpack.c.bf16 %v5699, %v5699
        %v5708 = vpack.c.bf16 %v5700, %v5700
        %v5709 = vpack.c.bf16 %v5701, %v5701
        %v5710 = vpack.c.bf16 %v5702, %v5702
        %v5711 = vpack.c.bf16 %v5703, %v5703
        %s5712 = scalar_lea.vmem %s352, 96 [#allocation5]
        %5713 = vst [vmem:[%s5712] sm:$0xf] %v5704
        %5714 = vst [vmem:[%s5712 + $0x4] sm:$0xf] %v5705
        %5715 = vst [vmem:[%s5712 + $0x8] sm:$0xf] %v5706
        %5716 = vst [vmem:[%s5712 + $0xc] sm:$0xf] %v5707
        %5717 = vst [vmem:[%s5712 + $0x10] sm:$0xf] %v5708
        %5718 = vst [vmem:[%s5712 + $0x14] sm:$0xf] %v5709
        %5719 = vst [vmem:[%s5712 + $0x18] sm:$0xf] %v5710
        %5720 = vst [vmem:[%s5712 + $0x1c] sm:$0xf] %v5711
        %s5721 = sand.u32 %s210, 1
        %s5722 = scalar_lea.sflag [#allocation4], %s5721
        %s5723 = sand.u32 %s210, 1
        %s5724 = smul.addr %s5723, 128
        %s5725 = scalar_lea.vmem [#allocation5], %s5724
        // Predicated region
        $region53: #{tpu_custom_call.1} parent=47 // pred_check
          %p5726 = pneg %p220
        $region54: #{tpu_custom_call.1} parent=47 // pred_check_branch
          %5728 = sbr.rel (%p5726) target = $region56
        $region55: #{tpu_custom_call.1} parent=47 // pred_region
          %5730 = vsyncadd %s5722, 0
          %s5731 = smul.addr %s27, 32
          %s5732 = smul.addr %s26, 32
          %s5733 = sadd.s32 %s5731, %s5732
          %s5734 = smul.addr %s5733, 4
          %s5735 = scalar_lea.hbm %s7, %s5734
          %s5736 = sshll.u32 %s5725, 4
          %s5737 = int_to_ptr.vmem [resolvable:$true] %s5736
          %s5738 = sshll.u32 %s5735, 4
          %s5739 = int_to_ptr.hbm [resolvable:$true] %s5738
          %5744 = dma.vmem_to_hbm [thread:$0]  %s5737, 2048, %s5739, %s5722, 64, 64, 4
        $region56: #{tpu_custom_call.1} parent=47 // pred_fallthru
          _
      $region48: #{tpu_custom_call.1} parent=5 // pred_fallthru
        _
      %p5745 = scmp.le.s32.totalorder 2, %s17
      // Predicated region
      $region57: #{tpu_custom_call.1} parent=5 // pred_check
        %p5746 = pneg %p5745
      $region58: #{tpu_custom_call.1} parent=5 // pred_check_branch
        %5748 = sbr.rel (%p5746) target = $region60
      $region59: #{tpu_custom_call.1} parent=5 // pred_region
        %s5749 = ssub.s32 %s17, 2
        // Predicated region
        $region61: #{tpu_custom_call.1} parent=59 // pred_check
          %p5750 = pneg %p226
        $region62: #{tpu_custom_call.1} parent=59 // pred_check_branch
          %5752 = sbr.rel (%p5750) target = $region64
        $region63: #{tpu_custom_call.1} parent=59 // pred_region
          %s5753 = sand.u32 %s211, 1
          %s5754 = scalar_lea.sflag [#allocation4], %s5753
          %s5755 = sand.u32 %s211, 1
          %s5756 = smul.addr %s5755, 128
          %s5757 = scalar_lea.vmem [#allocation5], %s5756
          %5759 = dma.done %s5754, 2048
        $region64: #{tpu_custom_call.1} parent=59 // pred_fallthru
          _
      $region60: #{tpu_custom_call.1} parent=5 // pred_fallthru
        _
    $region6: #{tpu_custom_call.1} parent=1 // loop_footer
      %s21 = sadd.s32 1, %s17
    $region7: #{tpu_custom_call.1} parent=1 // loop_footer_branch
      %16 = sbr.rel target = $region3
    $region8: #{tpu_custom_call.1} parent=1 // loop_exit
      _
    %5760 = vsyncpa [#allocation3], 1
    %s5761 = scalar_lea.sflag [#allocation3], 1
    %5762 = vsyncpa %s5761, 1
    %5763 = vsyncpa [#allocation4], 1
    %s5764 = scalar_lea.sflag [#allocation4], 1
    %5765 = vsyncpa %s5764, 1

</llo_original>
